<compile_context>
chip_gen: v5e
topology: v5e:2x2
jax: 0.10.0
libtpu: 0.0.40
codegen_flags: <defaults>
</compile_context>

<pallas_src>
import functools

import jax
import jax.numpy as jnp
from jax.experimental import pallas as pl
from jax.experimental.pallas import tpu as pltpu  # noqa: F401  (kept for parity)


NEG_INF = -1e20


def _round_up(v, m):
    return ((v + m - 1) // m) * m


# ----------------------------- fused decoder kernel -----------------------------

def _decoder_kernel(
    x_ref, enc_ref, smask_ref, cmask_ref,
    wqkv_s_ref, bo_s_ref, g_s_ref, be_s_ref,
    wq_c_ref, wkvo_c_ref, bo_c_ref,
    g1_ref, b1_ref, w1_ref, bf1_ref, w2_ref, bf2_ref, g2_ref, b2_ref,
    wout_ref, bout_ref,
    o_ref,
    *, heads, num_layers, embed):
    E = embed
    D = E // heads

    x = x_ref[...]           # (Mq, E)  batch-stacked target activations
    enc = enc_ref[...]       # (Mk, E)  batch-stacked encoder output
    smask = smask_ref[...]   # (Mq, Mq) additive mask: block-diag causal (0 / -1e20)
    cmask = cmask_ref[...]   # (Mq, Mk) additive mask: block-diag src padding

    def layer_norm(v, g, b):
        mu = jnp.mean(v, axis=-1, keepdims=True)
        var = jnp.mean((v - mu) ** 2, axis=-1, keepdims=True)
        return (v - mu) * jax.lax.rsqrt(var + 1e-5) * g + b

    def dot_nt(a, b):  # a:(M,D), b:(N,D) -> (M,N) == A @ B^T
        return jax.lax.dot_general(
            a, b, (((1,), (1,)), ((), ())), preferred_element_type=jnp.float32)

    def mha(q_all, k_all, vo_all, mask_add, bo):
        # q_all:(Mq,E), k_all:(Mk,E), vo_all:(Mk,H*E) with the output projection
        # Wo already folded into each head's V block at init: each head is just
        # scores -> softmax -> one (Mq,Mk)@(Mk,E) accumulate.  1/sqrt(E) is
        # folded into the Q weights; masks are additive (no compare+select).
        acc = None
        for h in range(heads):
            sl = slice(h * D, (h + 1) * D)
            e = dot_nt(q_all[:, sl], k_all[:, sl]) + mask_add
            e = e - jnp.max(e, axis=-1, keepdims=True)
            p = jnp.exp(e)
            p = p * pl.reciprocal(jnp.sum(p, axis=-1, keepdims=True), approx=True)
            term = jnp.dot(p, vo_all[:, h * E:(h + 1) * E],
                           preferred_element_type=jnp.float32)
            acc = term if acc is None else acc + term
        return acc + bo

    # num_layers == 2: static unroll keeps LLO visibility with no spill risk.
    # TODO(synk): switch to lax.fori_loop with dynamic ref[l] if layers > ~4.
    for l in range(num_layers):
        # --- masked self-attention (single fused QK + folded V*Wo projection) ---
        qkv = jnp.dot(x, wqkv_s_ref[l], preferred_element_type=jnp.float32)
        attn = mha(qkv[:, :E], qkv[:, E:2 * E], qkv[:, 2 * E:], smask, bo_s_ref[l])
        query = layer_norm(attn + x, g_s_ref[l], be_s_ref[l])

        # --- cross attention over encoder output ---
        qc = jnp.dot(query, wq_c_ref[l], preferred_element_type=jnp.float32)
        kvo = jnp.dot(enc, wkvo_c_ref[l], preferred_element_type=jnp.float32)
        attn2 = mha(qc, kvo[:, :E], kvo[:, E:], cmask, bo_c_ref[l])
        xb = layer_norm(attn2 + query, g1_ref[l], b1_ref[l])

        # --- position-wise feed-forward ---
        h1 = jnp.maximum(
            jnp.dot(xb, w1_ref[l], preferred_element_type=jnp.float32) + bf1_ref[l],
            0.0)
        h2 = jnp.dot(h1, w2_ref[l], preferred_element_type=jnp.float32) + bf2_ref[l]
        x = layer_norm(h2 + xb, g2_ref[l], b2_ref[l])

    # final vocab projection (padded to 128 lanes -> unmasked stores)
    o_ref[...] = (jnp.dot(x, wout_ref[...], preferred_element_type=jnp.float32)
                  + bout_ref[...])


# ----------------------------- wrapper -----------------------------

_WEIGHT_ORDER = ["wqkv_s", "bo_s", "g_s", "be_s",
                 "wq_c", "wkvo_c", "bo_c",
                 "g1", "b1", "w1", "bf1", "w2", "bf2", "g2", "b2"]


def decoder_forward(tokens, enc_out, src_mask, target_mask, params,
                    *, embed_size, heads, vocab):
    n, lq = tokens.shape
    lk = enc_out.shape[1]
    e = embed_size
    lq_pad = _round_up(lq, 8)
    lk_pad = _round_up(lk, 8)

    # embeddings (tiny XLA gather) + positions; Dropout(p=0) is the identity.
    x = params["word_emb"][tokens] + params["pos_emb"][:lq][None, :, :]       # (N,Lq,E)
    x = jnp.pad(x, ((0, 0), (0, lq_pad - lq), (0, 0)))
    x_flat = x.reshape(n * lq_pad, e)                                          # (N*Lqp,E)
    enc_flat = jnp.pad(enc_out, ((0, 0), (0, lk_pad - lk), (0, 0))
                       ).reshape(n * lk_pad, e)                                # (N*Lkp,E)

    # --- additive masks (0 keep / -1e20 drop), block-diagonal over the batch ---
    # self-attention: causal target mask; padded query rows attend to all real
    # keys of their own batch block (kept finite, then sliced off afterwards);
    # padded key columns are always masked.
    tgt = target_mask[:, 0].astype(jnp.float32)                                # (N,Lq,Lq)
    tgt_pad = jnp.ones((n, lq_pad, lq_pad), jnp.float32)
    tgt_pad = tgt_pad.at[:, :lq, :lq].set(tgt)
    tgt_pad = tgt_pad * (jnp.arange(lq_pad) < lq)[None, None, :]
    tgt_add = jnp.where(tgt_pad != 0, 0.0, NEG_INF).astype(jnp.float32)

    smask = jnp.full((n * lq_pad, n * lq_pad), NEG_INF, jnp.float32)
    for b in range(n):
        smask = smask.at[b * lq_pad:(b + 1) * lq_pad,
                         b * lq_pad:(b + 1) * lq_pad].set(tgt_add[b])

    # cross attention: source padding mask; padded key columns masked.
    src = src_mask.reshape(n, lk).astype(jnp.float32)
    src_pad = jnp.zeros((n, lk_pad), jnp.float32).at[:, :lk].set(src)
    src_add = jnp.where(src_pad != 0, 0.0, NEG_INF).astype(jnp.float32)

    cmask = jnp.full((n * lq_pad, n * lk_pad), NEG_INF, jnp.float32)
    for b in range(n):
        cmask = cmask.at[b * lq_pad:(b + 1) * lq_pad,
                         b * lk_pad:(b + 1) * lk_pad].set(
            jnp.broadcast_to(src_add[b][None, :], (lq_pad, lk_pad)))

    st = params["stacked"]
    weights = [st[k] for k in _WEIGHT_ORDER] + [params["Wout"], params["bout"]]
    num_layers = st["wqkv_s"].shape[0]
    vpad = params["Wout"].shape[1]

    kernel = functools.partial(
        _decoder_kernel, heads=heads, num_layers=num_layers, embed=e)

    # Single fused invocation: no grid, every operand is a whole-array VMEM
    # block (stacked weights total ~200 KB f32 -> far under any VMEM limit, no
    # pipelining / double-buffering needed).
    out_padded = pl.pallas_call(
        kernel,
        out_shape=jax.ShapeDtypeStruct((n * lq_pad, vpad), jnp.float32),
    )(x_flat, enc_flat, smask, cmask, *weights)

    return out_padded.reshape(n, lq_pad, vpad)[:, :lq, :vocab]


# ----------------------------- parameter init -----------------------------

def init_params(key, vocab, embed_size, heads, num_layers, forward_expansion,
                max_length):
    keys = iter(jax.random.split(key, 256))

    def nrm(shape, s=0.1):
        return jax.random.normal(next(keys), shape, jnp.float32) * s

    E = embed_size
    d = E // heads
    F = forward_expansion * E
    inv_scale = 1.0 / float(E) ** 0.5
    eye_h = jnp.eye(heads, dtype=jnp.float32)

    def block_diag(w_head):
        # shared per-head nn.Linear(head_dim, head_dim, bias=False) applied to
        # all heads at once: kron(I_heads, W) -> one (E,E) matmul.
        return jnp.kron(eye_h, w_head)

    def fold_vo(wv_head, wo_full):
        # (P @ V_h) @ Wo_h == P @ (V_h @ Wo_h): bake the output projection into
        # the per-head V block.  Column block h maps raw activations straight
        # to that head's already-projected (E-wide) contribution.
        cols = []
        for h in range(heads):
            m = jnp.zeros((E, E), jnp.float32)
            m = m.at[h * d:(h + 1) * d, :].set(
                wv_head @ wo_full[h * d:(h + 1) * d, :])
            cols.append(m)
        return jnp.concatenate(cols, axis=1)                      # (E, H*E)

    stacked = {k: [] for k in _WEIGHT_ORDER}
    ones = jnp.ones((1, E), jnp.float32)
    zeros = jnp.zeros((1, E), jnp.float32)

    for _ in range(num_layers):
        # masked self-attention: fused [Q*inv_scale | K | V@Wo] projection
        wq, wk, wv = nrm((d, d)), nrm((d, d)), nrm((d, d))
        wo = nrm((E, E))
        stacked["wqkv_s"].append(jnp.concatenate(
            [block_diag(wq) * inv_scale, block_diag(wk), fold_vo(wv, wo)], axis=1))
        stacked["bo_s"].append(nrm((1, E), 0.01))
        stacked["g_s"].append(ones)
        stacked["be_s"].append(zeros)

        # cross attention: Q from decoder, fused [K | V@Wo] from encoder output
        wq2, wk2, wv2 = nrm((d, d)), nrm((d, d)), nrm((d, d))
        wo2 = nrm((E, E))
        stacked["wq_c"].append(block_diag(wq2) * inv_scale)
        stacked["wkvo_c"].append(jnp.concatenate(
            [block_diag(wk2), fold_vo(wv2, wo2)], axis=1))
        stacked["bo_c"].append(nrm((1, E), 0.01))
        stacked["g1"].append(ones)
        stacked["b1"].append(zeros)

        # feed-forward
        stacked["w1"].append(nrm((E, F)))
        stacked["bf1"].append(nrm((1, F), 0.01))
        stacked["w2"].append(nrm((F, E)))
        stacked["bf2"].append(nrm((1, E), 0.01))
        stacked["g2"].append(ones)
        stacked["b2"].append(zeros)

    stacked = {k: jnp.stack(v, axis=0) for k, v in stacked.items()}

    # vocab projection padded to a 128-lane output for unmasked stores
    vpad = max(128, _round_up(vocab, 128))
    w_out = jnp.zeros((E, vpad), jnp.float32).at[:, :vocab].set(nrm((E, vocab)))
    b_out = jnp.zeros((1, vpad), jnp.float32)

    return {
        "word_emb": nrm((vocab, E), 0.5),
        "pos_emb": nrm((max_length, E), 0.5),
        "stacked": stacked,
        "Wout": w_out,
        "bout": b_out,
    }


# ----------------------------- main -----------------------------

if __name__ == "__main__":
    EMBED = 32
    HEADS = 4
    LAYERS = 2
    FWD_EXP = 4
    VOCAB = 10
    MAX_LEN = 100
    PAD = 0

    key = jax.random.PRNGKey(0)
    k_par, k_enc = jax.random.split(key)

    # target tokens (trg[:, :-1] in the reference script): (2, 7)
    trg_tokens = jnp.array(
        [[1, 7, 4, 3, 5, 9, 2], [1, 5, 6, 2, 4, 7, 6]], dtype=jnp.int32)
    # source tokens used only to build src_mask: (2, 9)
    src_tokens = jnp.array(
        [[1, 5, 6, 4, 3, 9, 5, 2, 0], [1, 8, 7, 3, 4, 5, 6, 7, 2]], dtype=jnp.int32)

    N, TRG_LEN = trg_tokens.shape
    SRC_LEN = src_tokens.shape[1]

    # stand-in for the encoder output fed to the Decoder
    enc_out = jax.random.normal(k_enc, (N, SRC_LEN, EMBED), jnp.float32)

    # masks exactly as Transformer.make_src_mask / make_target_mask build them
    src_mask = (src_tokens != PAD).astype(jnp.float32)[:, None, None, :]     # (N,1,1,Lk)
    target_mask = jnp.broadcast_to(
        jnp.tril(jnp.ones((TRG_LEN, TRG_LEN), jnp.float32)),
        (N, 1, TRG_LEN, TRG_LEN))

    params = init_params(k_par, VOCAB, EMBED, HEADS, LAYERS, FWD_EXP, MAX_LEN)

    fwd = jax.jit(functools.partial(
        decoder_forward, embed_size=EMBED, heads=HEADS, vocab=VOCAB))
    out = fwd(trg_tokens, enc_out, src_mask, target_mask, params)
    out = jax.block_until_ready(out)

    assert out.shape == (N, TRG_LEN, VOCAB), out.shape
    assert bool(jnp.all(jnp.isfinite(out)))
    print("KERNEL_OK")
</pallas_src>

<mosaic_0001>
module attributes {stable_mosaic.version = 11 : i64} {
  func.func @_decoder_kernel(%arg0: memref<16x32xf32, #tpu.memory_space<vmem>>, %arg1: memref<32x32xf32, #tpu.memory_space<vmem>>, %arg2: memref<16x16xf32, #tpu.memory_space<vmem>>, %arg3: memref<16x32xf32, #tpu.memory_space<vmem>>, %arg4: memref<2x32x192xf32, #tpu.memory_space<vmem>>, %arg5: memref<2x1x32xf32, #tpu.memory_space<vmem>>, %arg6: memref<2x1x32xf32, #tpu.memory_space<vmem>>, %arg7: memref<2x1x32xf32, #tpu.memory_space<vmem>>, %arg8: memref<2x32x32xf32, #tpu.memory_space<vmem>>, %arg9: memref<2x32x160xf32, #tpu.memory_space<vmem>>, %arg10: memref<2x1x32xf32, #tpu.memory_space<vmem>>, %arg11: memref<2x1x32xf32, #tpu.memory_space<vmem>>, %arg12: memref<2x1x32xf32, #tpu.memory_space<vmem>>, %arg13: memref<2x32x128xf32, #tpu.memory_space<vmem>>, %arg14: memref<2x1x128xf32, #tpu.memory_space<vmem>>, %arg15: memref<2x128x32xf32, #tpu.memory_space<vmem>>, %arg16: memref<2x1x32xf32, #tpu.memory_space<vmem>>, %arg17: memref<2x1x32xf32, #tpu.memory_space<vmem>>, %arg18: memref<2x1x32xf32, #tpu.memory_space<vmem>>, %arg19: memref<32x128xf32, #tpu.memory_space<vmem>>, %arg20: memref<1x128xf32, #tpu.memory_space<vmem>>, %arg21: memref<16x128xf32, #tpu.memory_space<vmem>>) attributes {dimension_semantics = [], scalar_prefetch = 0 : i64, scratch_operands = 0 : i64, tpu.core_type = #tpu.core_type<tc>} {
    %c0 = arith.constant 0 : index
    %c0_0 = arith.constant 0 : index
    %0 = vector.load %arg0[%c0, %c0_0] : memref<16x32xf32, #tpu.memory_space<vmem>>, vector<16x32xf32>
    %c0_1 = arith.constant 0 : index
    %c0_2 = arith.constant 0 : index
    %1 = vector.load %arg1[%c0_1, %c0_2] : memref<32x32xf32, #tpu.memory_space<vmem>>, vector<32x32xf32>
    %c0_3 = arith.constant 0 : index
    %c0_4 = arith.constant 0 : index
    %2 = vector.load %arg2[%c0_3, %c0_4] : memref<16x16xf32, #tpu.memory_space<vmem>>, vector<16x16xf32>
    %c0_5 = arith.constant 0 : index
    %c0_6 = arith.constant 0 : index
    %3 = vector.load %arg3[%c0_5, %c0_6] : memref<16x32xf32, #tpu.memory_space<vmem>>, vector<16x32xf32>
    %c0_7 = arith.constant 0 : index
    %c0_8 = arith.constant 0 : index
    %c0_9 = arith.constant 0 : index
    %4 = vector.load %arg4[%c0_7, %c0_8, %c0_9] : memref<2x32x192xf32, #tpu.memory_space<vmem>>, vector<1x32x192xf32>
    %5 = vector.shape_cast %4 : vector<1x32x192xf32> to vector<32x192xf32>
    %cst = arith.constant dense<0.000000e+00> : vector<16x192xf32>
    %6 = tpu.matmul %0, %5, %cst {dimension_numbers = #tpu.dot_dimension_numbers<[1], [0], [0], [1], [0, 0, 1, 1], [], []>} : vector<16x32xf32>, vector<32x192xf32>, vector<16x192xf32> -> vector<16x192xf32>
    %7 = vector.extract_strided_slice %6 {offsets = [0, 0], sizes = [16, 32], strides = [1, 1]} : vector<16x192xf32> to vector<16x32xf32>
    %8 = vector.extract_strided_slice %6 {offsets = [0, 32], sizes = [16, 32], strides = [1, 1]} : vector<16x192xf32> to vector<16x32xf32>
    %9 = vector.extract_strided_slice %6 {offsets = [0, 64], sizes = [16, 128], strides = [1, 1]} : vector<16x192xf32> to vector<16x128xf32>
    %c0_10 = arith.constant 0 : index
    %c0_11 = arith.constant 0 : index
    %c0_12 = arith.constant 0 : index
    %10 = vector.load %arg5[%c0_10, %c0_11, %c0_12] : memref<2x1x32xf32, #tpu.memory_space<vmem>>, vector<1x1x32xf32>
    %11 = vector.shape_cast %10 : vector<1x1x32xf32> to vector<1x32xf32>
    %12 = vector.extract_strided_slice %7 {offsets = [0, 0], sizes = [16, 8], strides = [1, 1]} : vector<16x32xf32> to vector<16x8xf32>
    %13 = vector.extract_strided_slice %8 {offsets = [0, 0], sizes = [16, 8], strides = [1, 1]} : vector<16x32xf32> to vector<16x8xf32>
    %cst_13 = arith.constant dense<0.000000e+00> : vector<16x16xf32>
    %14 = tpu.matmul %12, %13, %cst_13 {dimension_numbers = #tpu.dot_dimension_numbers<[1], [1], [0], [0], [0, 0, 1, 0], [], []>} : vector<16x8xf32>, vector<16x8xf32>, vector<16x16xf32> -> vector<16x16xf32>
    %15 = arith.addf %14, %2 : vector<16x16xf32>
    %cst_14 = arith.constant dense<0xFF800000> : vector<16xf32>
    %16 = vector.multi_reduction <maximumf>, %15, %cst_14 [1] : vector<16x16xf32> to vector<16xf32>
    %17 = vector.shape_cast %16 : vector<16xf32> to vector<16x1xf32>
    %18 = vector.broadcast %17 : vector<16x1xf32> to vector<16x16xf32>
    %19 = arith.subf %15, %18 : vector<16x16xf32>
    %20 = math.exp %19 : vector<16x16xf32>
    %cst_15 = arith.constant dense<0.000000e+00> : vector<16xf32>
    %21 = vector.multi_reduction <add>, %20, %cst_15 [1] : vector<16x16xf32> to vector<16xf32>
    %22 = vector.shape_cast %21 : vector<16xf32> to vector<16x1xf32>
    %23 = tpu.reciprocal %22 {approx = true} : vector<16x1xf32> -> vector<16x1xf32>
    %24 = vector.broadcast %23 : vector<16x1xf32> to vector<16x16xf32>
    %25 = arith.mulf %20, %24 : vector<16x16xf32>
    %26 = vector.extract_strided_slice %9 {offsets = [0, 0], sizes = [16, 32], strides = [1, 1]} : vector<16x128xf32> to vector<16x32xf32>
    %cst_16 = arith.constant dense<0.000000e+00> : vector<16x32xf32>
    %27 = tpu.matmul %25, %26, %cst_16 {dimension_numbers = #tpu.dot_dimension_numbers<[1], [0], [0], [1], [0, 0, 1, 1], [], []>} : vector<16x16xf32>, vector<16x32xf32>, vector<16x32xf32> -> vector<16x32xf32>
    %28 = vector.extract_strided_slice %7 {offsets = [0, 8], sizes = [16, 8], strides = [1, 1]} : vector<16x32xf32> to vector<16x8xf32>
    %29 = vector.extract_strided_slice %8 {offsets = [0, 8], sizes = [16, 8], strides = [1, 1]} : vector<16x32xf32> to vector<16x8xf32>
    %cst_17 = arith.constant dense<0.000000e+00> : vector<16x16xf32>
    %30 = tpu.matmul %28, %29, %cst_17 {dimension_numbers = #tpu.dot_dimension_numbers<[1], [1], [0], [0], [0, 0, 1, 0], [], []>} : vector<16x8xf32>, vector<16x8xf32>, vector<16x16xf32> -> vector<16x16xf32>
    %31 = arith.addf %30, %2 : vector<16x16xf32>
    %cst_18 = arith.constant dense<0xFF800000> : vector<16xf32>
    %32 = vector.multi_reduction <maximumf>, %31, %cst_18 [1] : vector<16x16xf32> to vector<16xf32>
    %33 = vector.shape_cast %32 : vector<16xf32> to vector<16x1xf32>
    %34 = vector.broadcast %33 : vector<16x1xf32> to vector<16x16xf32>
    %35 = arith.subf %31, %34 : vector<16x16xf32>
    %36 = math.exp %35 : vector<16x16xf32>
    %cst_19 = arith.constant dense<0.000000e+00> : vector<16xf32>
    %37 = vector.multi_reduction <add>, %36, %cst_19 [1] : vector<16x16xf32> to vector<16xf32>
    %38 = vector.shape_cast %37 : vector<16xf32> to vector<16x1xf32>
    %39 = tpu.reciprocal %38 {approx = true} : vector<16x1xf32> -> vector<16x1xf32>
    %40 = vector.broadcast %39 : vector<16x1xf32> to vector<16x16xf32>
    %41 = arith.mulf %36, %40 : vector<16x16xf32>
    %42 = vector.extract_strided_slice %9 {offsets = [0, 32], sizes = [16, 32], strides = [1, 1]} : vector<16x128xf32> to vector<16x32xf32>
    %cst_20 = arith.constant dense<0.000000e+00> : vector<16x32xf32>
    %43 = tpu.matmul %41, %42, %cst_20 {dimension_numbers = #tpu.dot_dimension_numbers<[1], [0], [0], [1], [0, 0, 1, 1], [], []>} : vector<16x16xf32>, vector<16x32xf32>, vector<16x32xf32> -> vector<16x32xf32>
    %44 = arith.addf %27, %43 : vector<16x32xf32>
    %45 = vector.extract_strided_slice %7 {offsets = [0, 16], sizes = [16, 8], strides = [1, 1]} : vector<16x32xf32> to vector<16x8xf32>
    %46 = vector.extract_strided_slice %8 {offsets = [0, 16], sizes = [16, 8], strides = [1, 1]} : vector<16x32xf32> to vector<16x8xf32>
    %cst_21 = arith.constant dense<0.000000e+00> : vector<16x16xf32>
    %47 = tpu.matmul %45, %46, %cst_21 {dimension_numbers = #tpu.dot_dimension_numbers<[1], [1], [0], [0], [0, 0, 1, 0], [], []>} : vector<16x8xf32>, vector<16x8xf32>, vector<16x16xf32> -> vector<16x16xf32>
    %48 = arith.addf %47, %2 : vector<16x16xf32>
    %cst_22 = arith.constant dense<0xFF800000> : vector<16xf32>
    %49 = vector.multi_reduction <maximumf>, %48, %cst_22 [1] : vector<16x16xf32> to vector<16xf32>
    %50 = vector.shape_cast %49 : vector<16xf32> to vector<16x1xf32>
    %51 = vector.broadcast %50 : vector<16x1xf32> to vector<16x16xf32>
    %52 = arith.subf %48, %51 : vector<16x16xf32>
    %53 = math.exp %52 : vector<16x16xf32>
    %cst_23 = arith.constant dense<0.000000e+00> : vector<16xf32>
    %54 = vector.multi_reduction <add>, %53, %cst_23 [1] : vector<16x16xf32> to vector<16xf32>
    %55 = vector.shape_cast %54 : vector<16xf32> to vector<16x1xf32>
    %56 = tpu.reciprocal %55 {approx = true} : vector<16x1xf32> -> vector<16x1xf32>
    %57 = vector.broadcast %56 : vector<16x1xf32> to vector<16x16xf32>
    %58 = arith.mulf %53, %57 : vector<16x16xf32>
    %59 = vector.extract_strided_slice %9 {offsets = [0, 64], sizes = [16, 32], strides = [1, 1]} : vector<16x128xf32> to vector<16x32xf32>
    %cst_24 = arith.constant dense<0.000000e+00> : vector<16x32xf32>
    %60 = tpu.matmul %58, %59, %cst_24 {dimension_numbers = #tpu.dot_dimension_numbers<[1], [0], [0], [1], [0, 0, 1, 1], [], []>} : vector<16x16xf32>, vector<16x32xf32>, vector<16x32xf32> -> vector<16x32xf32>
    %61 = arith.addf %44, %60 : vector<16x32xf32>
    %62 = vector.extract_strided_slice %7 {offsets = [0, 24], sizes = [16, 8], strides = [1, 1]} : vector<16x32xf32> to vector<16x8xf32>
    %63 = vector.extract_strided_slice %8 {offsets = [0, 24], sizes = [16, 8], strides = [1, 1]} : vector<16x32xf32> to vector<16x8xf32>
    %cst_25 = arith.constant dense<0.000000e+00> : vector<16x16xf32>
    %64 = tpu.matmul %62, %63, %cst_25 {dimension_numbers = #tpu.dot_dimension_numbers<[1], [1], [0], [0], [0, 0, 1, 0], [], []>} : vector<16x8xf32>, vector<16x8xf32>, vector<16x16xf32> -> vector<16x16xf32>
    %65 = arith.addf %64, %2 : vector<16x16xf32>
    %cst_26 = arith.constant dense<0xFF800000> : vector<16xf32>
    %66 = vector.multi_reduction <maximumf>, %65, %cst_26 [1] : vector<16x16xf32> to vector<16xf32>
    %67 = vector.shape_cast %66 : vector<16xf32> to vector<16x1xf32>
    %68 = vector.broadcast %67 : vector<16x1xf32> to vector<16x16xf32>
    %69 = arith.subf %65, %68 : vector<16x16xf32>
    %70 = math.exp %69 : vector<16x16xf32>
    %cst_27 = arith.constant dense<0.000000e+00> : vector<16xf32>
    %71 = vector.multi_reduction <add>, %70, %cst_27 [1] : vector<16x16xf32> to vector<16xf32>
    %72 = vector.shape_cast %71 : vector<16xf32> to vector<16x1xf32>
    %73 = tpu.reciprocal %72 {approx = true} : vector<16x1xf32> -> vector<16x1xf32>
    %74 = vector.broadcast %73 : vector<16x1xf32> to vector<16x16xf32>
    %75 = arith.mulf %70, %74 : vector<16x16xf32>
    %76 = vector.extract_strided_slice %9 {offsets = [0, 96], sizes = [16, 32], strides = [1, 1]} : vector<16x128xf32> to vector<16x32xf32>
    %cst_28 = arith.constant dense<0.000000e+00> : vector<16x32xf32>
    %77 = tpu.matmul %75, %76, %cst_28 {dimension_numbers = #tpu.dot_dimension_numbers<[1], [0], [0], [1], [0, 0, 1, 1], [], []>} : vector<16x16xf32>, vector<16x32xf32>, vector<16x32xf32> -> vector<16x32xf32>
    %78 = arith.addf %61, %77 : vector<16x32xf32>
    %79 = vector.broadcast %11 : vector<1x32xf32> to vector<16x32xf32>
    %80 = arith.addf %78, %79 : vector<16x32xf32>
    %81 = arith.addf %80, %0 : vector<16x32xf32>
    %c0_29 = arith.constant 0 : index
    %c0_30 = arith.constant 0 : index
    %c0_31 = arith.constant 0 : index
    %82 = vector.load %arg6[%c0_29, %c0_30, %c0_31] : memref<2x1x32xf32, #tpu.memory_space<vmem>>, vector<1x1x32xf32>
    %83 = vector.shape_cast %82 : vector<1x1x32xf32> to vector<1x32xf32>
    %c0_32 = arith.constant 0 : index
    %c0_33 = arith.constant 0 : index
    %c0_34 = arith.constant 0 : index
    %84 = vector.load %arg7[%c0_32, %c0_33, %c0_34] : memref<2x1x32xf32, #tpu.memory_space<vmem>>, vector<1x1x32xf32>
    %85 = vector.shape_cast %84 : vector<1x1x32xf32> to vector<1x32xf32>
    %cst_35 = arith.constant dense<0.000000e+00> : vector<16xf32>
    %86 = vector.multi_reduction <add>, %81, %cst_35 [1] : vector<16x32xf32> to vector<16xf32>
    %87 = vector.shape_cast %86 : vector<16xf32> to vector<16x1xf32>
    %cst_36 = arith.constant 3.200000e+01 : f32
    %88 = vector.broadcast %cst_36 : f32 to vector<16x1xf32>
    %89 = arith.divf %87, %88 : vector<16x1xf32>
    %90 = vector.broadcast %89 : vector<16x1xf32> to vector<16x32xf32>
    %91 = arith.subf %81, %90 : vector<16x32xf32>
    %92 = arith.mulf %91, %91 : vector<16x32xf32>
    %cst_37 = arith.constant dense<0.000000e+00> : vector<16xf32>
    %93 = vector.multi_reduction <add>, %92, %cst_37 [1] : vector<16x32xf32> to vector<16xf32>
    %94 = vector.shape_cast %93 : vector<16xf32> to vector<16x1xf32>
    %cst_38 = arith.constant 3.200000e+01 : f32
    %95 = vector.broadcast %cst_38 : f32 to vector<16x1xf32>
    %96 = arith.divf %94, %95 : vector<16x1xf32>
    %97 = vector.broadcast %89 : vector<16x1xf32> to vector<16x32xf32>
    %98 = arith.subf %81, %97 : vector<16x32xf32>
    %cst_39 = arith.constant 9.99999974E-6 : f32
    %99 = vector.broadcast %cst_39 : f32 to vector<16x1xf32>
    %100 = arith.addf %96, %99 : vector<16x1xf32>
    %101 = math.rsqrt %100 : vector<16x1xf32>
    %102 = vector.broadcast %101 : vector<16x1xf32> to vector<16x32xf32>
    %103 = arith.mulf %98, %102 : vector<16x32xf32>
    %104 = vector.broadcast %83 : vector<1x32xf32> to vector<16x32xf32>
    %105 = arith.mulf %103, %104 : vector<16x32xf32>
    %106 = vector.broadcast %85 : vector<1x32xf32> to vector<16x32xf32>
    %107 = arith.addf %105, %106 : vector<16x32xf32>
    %c0_40 = arith.constant 0 : index
    %c0_41 = arith.constant 0 : index
    %c0_42 = arith.constant 0 : index
    %108 = vector.load %arg8[%c0_40, %c0_41, %c0_42] : memref<2x32x32xf32, #tpu.memory_space<vmem>>, vector<1x32x32xf32>
    %109 = vector.shape_cast %108 : vector<1x32x32xf32> to vector<32x32xf32>
    %cst_43 = arith.constant dense<0.000000e+00> : vector<16x32xf32>
    %110 = tpu.matmul %107, %109, %cst_43 {dimension_numbers = #tpu.dot_dimension_numbers<[1], [0], [0], [1], [0, 0, 1, 1], [], []>} : vector<16x32xf32>, vector<32x32xf32>, vector<16x32xf32> -> vector<16x32xf32>
    %c0_44 = arith.constant 0 : index
    %c0_45 = arith.constant 0 : index
    %c0_46 = arith.constant 0 : index
    %111 = vector.load %arg9[%c0_44, %c0_45, %c0_46] : memref<2x32x160xf32, #tpu.memory_space<vmem>>, vector<1x32x160xf32>
    %112 = vector.shape_cast %111 : vector<1x32x160xf32> to vector<32x160xf32>
    %cst_47 = arith.constant dense<0.000000e+00> : vector<32x160xf32>
    %113 = tpu.matmul %1, %112, %cst_47 {dimension_numbers = #tpu.dot_dimension_numbers<[1], [0], [0], [1], [0, 0, 1, 1], [], []>} : vector<32x32xf32>, vector<32x160xf32>, vector<32x160xf32> -> vector<32x160xf32>
    %114 = vector.extract_strided_slice %113 {offsets = [0, 0], sizes = [32, 32], strides = [1, 1]} : vector<32x160xf32> to vector<32x32xf32>
    %115 = vector.extract_strided_slice %113 {offsets = [0, 32], sizes = [32, 128], strides = [1, 1]} : vector<32x160xf32> to vector<32x128xf32>
    %c0_48 = arith.constant 0 : index
    %c0_49 = arith.constant 0 : index
    %c0_50 = arith.constant 0 : index
    %116 = vector.load %arg10[%c0_48, %c0_49, %c0_50] : memref<2x1x32xf32, #tpu.memory_space<vmem>>, vector<1x1x32xf32>
    %117 = vector.shape_cast %116 : vector<1x1x32xf32> to vector<1x32xf32>
    %118 = vector.extract_strided_slice %110 {offsets = [0, 0], sizes = [16, 8], strides = [1, 1]} : vector<16x32xf32> to vector<16x8xf32>
    %119 = vector.extract_strided_slice %114 {offsets = [0, 0], sizes = [32, 8], strides = [1, 1]} : vector<32x32xf32> to vector<32x8xf32>
    %cst_51 = arith.constant dense<0.000000e+00> : vector<16x32xf32>
    %120 = tpu.matmul %118, %119, %cst_51 {dimension_numbers = #tpu.dot_dimension_numbers<[1], [1], [0], [0], [0, 0, 1, 0], [], []>} : vector<16x8xf32>, vector<32x8xf32>, vector<16x32xf32> -> vector<16x32xf32>
    %121 = arith.addf %120, %3 : vector<16x32xf32>
    %cst_52 = arith.constant dense<0xFF800000> : vector<16xf32>
    %122 = vector.multi_reduction <maximumf>, %121, %cst_52 [1] : vector<16x32xf32> to vector<16xf32>
    %123 = vector.shape_cast %122 : vector<16xf32> to vector<16x1xf32>
    %124 = vector.broadcast %123 : vector<16x1xf32> to vector<16x32xf32>
    %125 = arith.subf %121, %124 : vector<16x32xf32>
    %126 = math.exp %125 : vector<16x32xf32>
    %cst_53 = arith.constant dense<0.000000e+00> : vector<16xf32>
    %127 = vector.multi_reduction <add>, %126, %cst_53 [1] : vector<16x32xf32> to vector<16xf32>
    %128 = vector.shape_cast %127 : vector<16xf32> to vector<16x1xf32>
    %129 = tpu.reciprocal %128 {approx = true} : vector<16x1xf32> -> vector<16x1xf32>
    %130 = vector.broadcast %129 : vector<16x1xf32> to vector<16x32xf32>
    %131 = arith.mulf %126, %130 : vector<16x32xf32>
    %132 = vector.extract_strided_slice %115 {offsets = [0, 0], sizes = [32, 32], strides = [1, 1]} : vector<32x128xf32> to vector<32x32xf32>
    %cst_54 = arith.constant dense<0.000000e+00> : vector<16x32xf32>
    %133 = tpu.matmul %131, %132, %cst_54 {dimension_numbers = #tpu.dot_dimension_numbers<[1], [0], [0], [1], [0, 0, 1, 1], [], []>} : vector<16x32xf32>, vector<32x32xf32>, vector<16x32xf32> -> vector<16x32xf32>
    %134 = vector.extract_strided_slice %110 {offsets = [0, 8], sizes = [16, 8], strides = [1, 1]} : vector<16x32xf32> to vector<16x8xf32>
    %135 = vector.extract_strided_slice %114 {offsets = [0, 8], sizes = [32, 8], strides = [1, 1]} : vector<32x32xf32> to vector<32x8xf32>
    %cst_55 = arith.constant dense<0.000000e+00> : vector<16x32xf32>
    %136 = tpu.matmul %134, %135, %cst_55 {dimension_numbers = #tpu.dot_dimension_numbers<[1], [1], [0], [0], [0, 0, 1, 0], [], []>} : vector<16x8xf32>, vector<32x8xf32>, vector<16x32xf32> -> vector<16x32xf32>
    %137 = arith.addf %136, %3 : vector<16x32xf32>
    %cst_56 = arith.constant dense<0xFF800000> : vector<16xf32>
    %138 = vector.multi_reduction <maximumf>, %137, %cst_56 [1] : vector<16x32xf32> to vector<16xf32>
    %139 = vector.shape_cast %138 : vector<16xf32> to vector<16x1xf32>
    %140 = vector.broadcast %139 : vector<16x1xf32> to vector<16x32xf32>
    %141 = arith.subf %137, %140 : vector<16x32xf32>
    %142 = math.exp %141 : vector<16x32xf32>
    %cst_57 = arith.constant dense<0.000000e+00> : vector<16xf32>
    %143 = vector.multi_reduction <add>, %142, %cst_57 [1] : vector<16x32xf32> to vector<16xf32>
    %144 = vector.shape_cast %143 : vector<16xf32> to vector<16x1xf32>
    %145 = tpu.reciprocal %144 {approx = true} : vector<16x1xf32> -> vector<16x1xf32>
    %146 = vector.broadcast %145 : vector<16x1xf32> to vector<16x32xf32>
    %147 = arith.mulf %142, %146 : vector<16x32xf32>
    %148 = vector.extract_strided_slice %115 {offsets = [0, 32], sizes = [32, 32], strides = [1, 1]} : vector<32x128xf32> to vector<32x32xf32>
    %cst_58 = arith.constant dense<0.000000e+00> : vector<16x32xf32>
    %149 = tpu.matmul %147, %148, %cst_58 {dimension_numbers = #tpu.dot_dimension_numbers<[1], [0], [0], [1], [0, 0, 1, 1], [], []>} : vector<16x32xf32>, vector<32x32xf32>, vector<16x32xf32> -> vector<16x32xf32>
    %150 = arith.addf %133, %149 : vector<16x32xf32>
    %151 = vector.extract_strided_slice %110 {offsets = [0, 16], sizes = [16, 8], strides = [1, 1]} : vector<16x32xf32> to vector<16x8xf32>
    %152 = vector.extract_strided_slice %114 {offsets = [0, 16], sizes = [32, 8], strides = [1, 1]} : vector<32x32xf32> to vector<32x8xf32>
    %cst_59 = arith.constant dense<0.000000e+00> : vector<16x32xf32>
    %153 = tpu.matmul %151, %152, %cst_59 {dimension_numbers = #tpu.dot_dimension_numbers<[1], [1], [0], [0], [0, 0, 1, 0], [], []>} : vector<16x8xf32>, vector<32x8xf32>, vector<16x32xf32> -> vector<16x32xf32>
    %154 = arith.addf %153, %3 : vector<16x32xf32>
    %cst_60 = arith.constant dense<0xFF800000> : vector<16xf32>
    %155 = vector.multi_reduction <maximumf>, %154, %cst_60 [1] : vector<16x32xf32> to vector<16xf32>
    %156 = vector.shape_cast %155 : vector<16xf32> to vector<16x1xf32>
    %157 = vector.broadcast %156 : vector<16x1xf32> to vector<16x32xf32>
    %158 = arith.subf %154, %157 : vector<16x32xf32>
    %159 = math.exp %158 : vector<16x32xf32>
    %cst_61 = arith.constant dense<0.000000e+00> : vector<16xf32>
    %160 = vector.multi_reduction <add>, %159, %cst_61 [1] : vector<16x32xf32> to vector<16xf32>
    %161 = vector.shape_cast %160 : vector<16xf32> to vector<16x1xf32>
    %162 = tpu.reciprocal %161 {approx = true} : vector<16x1xf32> -> vector<16x1xf32>
    %163 = vector.broadcast %162 : vector<16x1xf32> to vector<16x32xf32>
    %164 = arith.mulf %159, %163 : vector<16x32xf32>
    %165 = vector.extract_strided_slice %115 {offsets = [0, 64], sizes = [32, 32], strides = [1, 1]} : vector<32x128xf32> to vector<32x32xf32>
    %cst_62 = arith.constant dense<0.000000e+00> : vector<16x32xf32>
    %166 = tpu.matmul %164, %165, %cst_62 {dimension_numbers = #tpu.dot_dimension_numbers<[1], [0], [0], [1], [0, 0, 1, 1], [], []>} : vector<16x32xf32>, vector<32x32xf32>, vector<16x32xf32> -> vector<16x32xf32>
    %167 = arith.addf %150, %166 : vector<16x32xf32>
    %168 = vector.extract_strided_slice %110 {offsets = [0, 24], sizes = [16, 8], strides = [1, 1]} : vector<16x32xf32> to vector<16x8xf32>
    %169 = vector.extract_strided_slice %114 {offsets = [0, 24], sizes = [32, 8], strides = [1, 1]} : vector<32x32xf32> to vector<32x8xf32>
    %cst_63 = arith.constant dense<0.000000e+00> : vector<16x32xf32>
    %170 = tpu.matmul %168, %169, %cst_63 {dimension_numbers = #tpu.dot_dimension_numbers<[1], [1], [0], [0], [0, 0, 1, 0], [], []>} : vector<16x8xf32>, vector<32x8xf32>, vector<16x32xf32> -> vector<16x32xf32>
    %171 = arith.addf %170, %3 : vector<16x32xf32>
    %cst_64 = arith.constant dense<0xFF800000> : vector<16xf32>
    %172 = vector.multi_reduction <maximumf>, %171, %cst_64 [1] : vector<16x32xf32> to vector<16xf32>
    %173 = vector.shape_cast %172 : vector<16xf32> to vector<16x1xf32>
    %174 = vector.broadcast %173 : vector<16x1xf32> to vector<16x32xf32>
    %175 = arith.subf %171, %174 : vector<16x32xf32>
    %176 = math.exp %175 : vector<16x32xf32>
    %cst_65 = arith.constant dense<0.000000e+00> : vector<16xf32>
    %177 = vector.multi_reduction <add>, %176, %cst_65 [1] : vector<16x32xf32> to vector<16xf32>
    %178 = vector.shape_cast %177 : vector<16xf32> to vector<16x1xf32>
    %179 = tpu.reciprocal %178 {approx = true} : vector<16x1xf32> -> vector<16x1xf32>
    %180 = vector.broadcast %179 : vector<16x1xf32> to vector<16x32xf32>
    %181 = arith.mulf %176, %180 : vector<16x32xf32>
    %182 = vector.extract_strided_slice %115 {offsets = [0, 96], sizes = [32, 32], strides = [1, 1]} : vector<32x128xf32> to vector<32x32xf32>
    %cst_66 = arith.constant dense<0.000000e+00> : vector<16x32xf32>
    %183 = tpu.matmul %181, %182, %cst_66 {dimension_numbers = #tpu.dot_dimension_numbers<[1], [0], [0], [1], [0, 0, 1, 1], [], []>} : vector<16x32xf32>, vector<32x32xf32>, vector<16x32xf32> -> vector<16x32xf32>
    %184 = arith.addf %167, %183 : vector<16x32xf32>
    %185 = vector.broadcast %117 : vector<1x32xf32> to vector<16x32xf32>
    %186 = arith.addf %184, %185 : vector<16x32xf32>
    %187 = arith.addf %186, %107 : vector<16x32xf32>
    %c0_67 = arith.constant 0 : index
    %c0_68 = arith.constant 0 : index
    %c0_69 = arith.constant 0 : index
    %188 = vector.load %arg11[%c0_67, %c0_68, %c0_69] : memref<2x1x32xf32, #tpu.memory_space<vmem>>, vector<1x1x32xf32>
    %189 = vector.shape_cast %188 : vector<1x1x32xf32> to vector<1x32xf32>
    %c0_70 = arith.constant 0 : index
    %c0_71 = arith.constant 0 : index
    %c0_72 = arith.constant 0 : index
    %190 = vector.load %arg12[%c0_70, %c0_71, %c0_72] : memref<2x1x32xf32, #tpu.memory_space<vmem>>, vector<1x1x32xf32>
    %191 = vector.shape_cast %190 : vector<1x1x32xf32> to vector<1x32xf32>
    %cst_73 = arith.constant dense<0.000000e+00> : vector<16xf32>
    %192 = vector.multi_reduction <add>, %187, %cst_73 [1] : vector<16x32xf32> to vector<16xf32>
    %193 = vector.shape_cast %192 : vector<16xf32> to vector<16x1xf32>
    %cst_74 = arith.constant 3.200000e+01 : f32
    %194 = vector.broadcast %cst_74 : f32 to vector<16x1xf32>
    %195 = arith.divf %193, %194 : vector<16x1xf32>
    %196 = vector.broadcast %195 : vector<16x1xf32> to vector<16x32xf32>
    %197 = arith.subf %187, %196 : vector<16x32xf32>
    %198 = arith.mulf %197, %197 : vector<16x32xf32>
    %cst_75 = arith.constant dense<0.000000e+00> : vector<16xf32>
    %199 = vector.multi_reduction <add>, %198, %cst_75 [1] : vector<16x32xf32> to vector<16xf32>
    %200 = vector.shape_cast %199 : vector<16xf32> to vector<16x1xf32>
    %cst_76 = arith.constant 3.200000e+01 : f32
    %201 = vector.broadcast %cst_76 : f32 to vector<16x1xf32>
    %202 = arith.divf %200, %201 : vector<16x1xf32>
    %203 = vector.broadcast %195 : vector<16x1xf32> to vector<16x32xf32>
    %204 = arith.subf %187, %203 : vector<16x32xf32>
    %cst_77 = arith.constant 9.99999974E-6 : f32
    %205 = vector.broadcast %cst_77 : f32 to vector<16x1xf32>
    %206 = arith.addf %202, %205 : vector<16x1xf32>
    %207 = math.rsqrt %206 : vector<16x1xf32>
    %208 = vector.broadcast %207 : vector<16x1xf32> to vector<16x32xf32>
    %209 = arith.mulf %204, %208 : vector<16x32xf32>
    %210 = vector.broadcast %189 : vector<1x32xf32> to vector<16x32xf32>
    %211 = arith.mulf %209, %210 : vector<16x32xf32>
    %212 = vector.broadcast %191 : vector<1x32xf32> to vector<16x32xf32>
    %213 = arith.addf %211, %212 : vector<16x32xf32>
    %c0_78 = arith.constant 0 : index
    %c0_79 = arith.constant 0 : index
    %c0_80 = arith.constant 0 : index
    %214 = vector.load %arg13[%c0_78, %c0_79, %c0_80] : memref<2x32x128xf32, #tpu.memory_space<vmem>>, vector<1x32x128xf32>
    %215 = vector.shape_cast %214 : vector<1x32x128xf32> to vector<32x128xf32>
    %cst_81 = arith.constant dense<0.000000e+00> : vector<16x128xf32>
    %216 = tpu.matmul %213, %215, %cst_81 {dimension_numbers = #tpu.dot_dimension_numbers<[1], [0], [0], [1], [0, 0, 1, 1], [], []>} : vector<16x32xf32>, vector<32x128xf32>, vector<16x128xf32> -> vector<16x128xf32>
    %c0_82 = arith.constant 0 : index
    %c0_83 = arith.constant 0 : index
    %c0_84 = arith.constant 0 : index
    %217 = vector.load %arg14[%c0_82, %c0_83, %c0_84] : memref<2x1x128xf32, #tpu.memory_space<vmem>>, vector<1x1x128xf32>
    %218 = vector.shape_cast %217 : vector<1x1x128xf32> to vector<1x128xf32>
    %219 = vector.broadcast %218 : vector<1x128xf32> to vector<16x128xf32>
    %220 = arith.addf %216, %219 : vector<16x128xf32>
    %cst_85 = arith.constant 0.000000e+00 : f32
    %221 = vector.broadcast %cst_85 : f32 to vector<16x128xf32>
    %222 = arith.maximumf %220, %221 : vector<16x128xf32>
    %c0_86 = arith.constant 0 : index
    %c0_87 = arith.constant 0 : index
    %c0_88 = arith.constant 0 : index
    %223 = vector.load %arg15[%c0_86, %c0_87, %c0_88] : memref<2x128x32xf32, #tpu.memory_space<vmem>>, vector<1x128x32xf32>
    %224 = vector.shape_cast %223 : vector<1x128x32xf32> to vector<128x32xf32>
    %cst_89 = arith.constant dense<0.000000e+00> : vector<16x32xf32>
    %225 = tpu.matmul %222, %224, %cst_89 {dimension_numbers = #tpu.dot_dimension_numbers<[1], [0], [0], [1], [0, 0, 1, 1], [], []>} : vector<16x128xf32>, vector<128x32xf32>, vector<16x32xf32> -> vector<16x32xf32>
    %c0_90 = arith.constant 0 : index
    %c0_91 = arith.constant 0 : index
    %c0_92 = arith.constant 0 : index
    %226 = vector.load %arg16[%c0_90, %c0_91, %c0_92] : memref<2x1x32xf32, #tpu.memory_space<vmem>>, vector<1x1x32xf32>
    %227 = vector.shape_cast %226 : vector<1x1x32xf32> to vector<1x32xf32>
    %228 = vector.broadcast %227 : vector<1x32xf32> to vector<16x32xf32>
    %229 = arith.addf %225, %228 : vector<16x32xf32>
    %230 = arith.addf %229, %213 : vector<16x32xf32>
    %c0_93 = arith.constant 0 : index
    %c0_94 = arith.constant 0 : index
    %c0_95 = arith.constant 0 : index
    %231 = vector.load %arg17[%c0_93, %c0_94, %c0_95] : memref<2x1x32xf32, #tpu.memory_space<vmem>>, vector<1x1x32xf32>
    %232 = vector.shape_cast %231 : vector<1x1x32xf32> to vector<1x32xf32>
    %c0_96 = arith.constant 0 : index
    %c0_97 = arith.constant 0 : index
    %c0_98 = arith.constant 0 : index
    %233 = vector.load %arg18[%c0_96, %c0_97, %c0_98] : memref<2x1x32xf32, #tpu.memory_space<vmem>>, vector<1x1x32xf32>
    %234 = vector.shape_cast %233 : vector<1x1x32xf32> to vector<1x32xf32>
    %cst_99 = arith.constant dense<0.000000e+00> : vector<16xf32>
    %235 = vector.multi_reduction <add>, %230, %cst_99 [1] : vector<16x32xf32> to vector<16xf32>
    %236 = vector.shape_cast %235 : vector<16xf32> to vector<16x1xf32>
    %cst_100 = arith.constant 3.200000e+01 : f32
    %237 = vector.broadcast %cst_100 : f32 to vector<16x1xf32>
    %238 = arith.divf %236, %237 : vector<16x1xf32>
    %239 = vector.broadcast %238 : vector<16x1xf32> to vector<16x32xf32>
    %240 = arith.subf %230, %239 : vector<16x32xf32>
    %241 = arith.mulf %240, %240 : vector<16x32xf32>
    %cst_101 = arith.constant dense<0.000000e+00> : vector<16xf32>
    %242 = vector.multi_reduction <add>, %241, %cst_101 [1] : vector<16x32xf32> to vector<16xf32>
    %243 = vector.shape_cast %242 : vector<16xf32> to vector<16x1xf32>
    %cst_102 = arith.constant 3.200000e+01 : f32
    %244 = vector.broadcast %cst_102 : f32 to vector<16x1xf32>
    %245 = arith.divf %243, %244 : vector<16x1xf32>
    %246 = vector.broadcast %238 : vector<16x1xf32> to vector<16x32xf32>
    %247 = arith.subf %230, %246 : vector<16x32xf32>
    %cst_103 = arith.constant 9.99999974E-6 : f32
    %248 = vector.broadcast %cst_103 : f32 to vector<16x1xf32>
    %249 = arith.addf %245, %248 : vector<16x1xf32>
    %250 = math.rsqrt %249 : vector<16x1xf32>
    %251 = vector.broadcast %250 : vector<16x1xf32> to vector<16x32xf32>
    %252 = arith.mulf %247, %251 : vector<16x32xf32>
    %253 = vector.broadcast %232 : vector<1x32xf32> to vector<16x32xf32>
    %254 = arith.mulf %252, %253 : vector<16x32xf32>
    %255 = vector.broadcast %234 : vector<1x32xf32> to vector<16x32xf32>
    %256 = arith.addf %254, %255 : vector<16x32xf32>
    %c1 = arith.constant 1 : index
    %c0_104 = arith.constant 0 : index
    %c0_105 = arith.constant 0 : index
    %257 = vector.load %arg4[%c1, %c0_104, %c0_105] : memref<2x32x192xf32, #tpu.memory_space<vmem>>, vector<1x32x192xf32>
    %258 = vector.shape_cast %257 : vector<1x32x192xf32> to vector<32x192xf32>
    %cst_106 = arith.constant dense<0.000000e+00> : vector<16x192xf32>
    %259 = tpu.matmul %256, %258, %cst_106 {dimension_numbers = #tpu.dot_dimension_numbers<[1], [0], [0], [1], [0, 0, 1, 1], [], []>} : vector<16x32xf32>, vector<32x192xf32>, vector<16x192xf32> -> vector<16x192xf32>
    %260 = vector.extract_strided_slice %259 {offsets = [0, 0], sizes = [16, 32], strides = [1, 1]} : vector<16x192xf32> to vector<16x32xf32>
    %261 = vector.extract_strided_slice %259 {offsets = [0, 32], sizes = [16, 32], strides = [1, 1]} : vector<16x192xf32> to vector<16x32xf32>
    %262 = vector.extract_strided_slice %259 {offsets = [0, 64], sizes = [16, 128], strides = [1, 1]} : vector<16x192xf32> to vector<16x128xf32>
    %c1_107 = arith.constant 1 : index
    %c0_108 = arith.constant 0 : index
    %c0_109 = arith.constant 0 : index
    %263 = vector.load %arg5[%c1_107, %c0_108, %c0_109] : memref<2x1x32xf32, #tpu.memory_space<vmem>>, vector<1x1x32xf32>
    %264 = vector.shape_cast %263 : vector<1x1x32xf32> to vector<1x32xf32>
    %265 = vector.extract_strided_slice %260 {offsets = [0, 0], sizes = [16, 8], strides = [1, 1]} : vector<16x32xf32> to vector<16x8xf32>
    %266 = vector.extract_strided_slice %261 {offsets = [0, 0], sizes = [16, 8], strides = [1, 1]} : vector<16x32xf32> to vector<16x8xf32>
    %cst_110 = arith.constant dense<0.000000e+00> : vector<16x16xf32>
    %267 = tpu.matmul %265, %266, %cst_110 {dimension_numbers = #tpu.dot_dimension_numbers<[1], [1], [0], [0], [0, 0, 1, 0], [], []>} : vector<16x8xf32>, vector<16x8xf32>, vector<16x16xf32> -> vector<16x16xf32>
    %268 = arith.addf %267, %2 : vector<16x16xf32>
    %cst_111 = arith.constant dense<0xFF800000> : vector<16xf32>
    %269 = vector.multi_reduction <maximumf>, %268, %cst_111 [1] : vector<16x16xf32> to vector<16xf32>
    %270 = vector.shape_cast %269 : vector<16xf32> to vector<16x1xf32>
    %271 = vector.broadcast %270 : vector<16x1xf32> to vector<16x16xf32>
    %272 = arith.subf %268, %271 : vector<16x16xf32>
    %273 = math.exp %272 : vector<16x16xf32>
    %cst_112 = arith.constant dense<0.000000e+00> : vector<16xf32>
    %274 = vector.multi_reduction <add>, %273, %cst_112 [1] : vector<16x16xf32> to vector<16xf32>
    %275 = vector.shape_cast %274 : vector<16xf32> to vector<16x1xf32>
    %276 = tpu.reciprocal %275 {approx = true} : vector<16x1xf32> -> vector<16x1xf32>
    %277 = vector.broadcast %276 : vector<16x1xf32> to vector<16x16xf32>
    %278 = arith.mulf %273, %277 : vector<16x16xf32>
    %279 = vector.extract_strided_slice %262 {offsets = [0, 0], sizes = [16, 32], strides = [1, 1]} : vector<16x128xf32> to vector<16x32xf32>
    %cst_113 = arith.constant dense<0.000000e+00> : vector<16x32xf32>
    %280 = tpu.matmul %278, %279, %cst_113 {dimension_numbers = #tpu.dot_dimension_numbers<[1], [0], [0], [1], [0, 0, 1, 1], [], []>} : vector<16x16xf32>, vector<16x32xf32>, vector<16x32xf32> -> vector<16x32xf32>
    %281 = vector.extract_strided_slice %260 {offsets = [0, 8], sizes = [16, 8], strides = [1, 1]} : vector<16x32xf32> to vector<16x8xf32>
    %282 = vector.extract_strided_slice %261 {offsets = [0, 8], sizes = [16, 8], strides = [1, 1]} : vector<16x32xf32> to vector<16x8xf32>
    %cst_114 = arith.constant dense<0.000000e+00> : vector<16x16xf32>
    %283 = tpu.matmul %281, %282, %cst_114 {dimension_numbers = #tpu.dot_dimension_numbers<[1], [1], [0], [0], [0, 0, 1, 0], [], []>} : vector<16x8xf32>, vector<16x8xf32>, vector<16x16xf32> -> vector<16x16xf32>
    %284 = arith.addf %283, %2 : vector<16x16xf32>
    %cst_115 = arith.constant dense<0xFF800000> : vector<16xf32>
    %285 = vector.multi_reduction <maximumf>, %284, %cst_115 [1] : vector<16x16xf32> to vector<16xf32>
    %286 = vector.shape_cast %285 : vector<16xf32> to vector<16x1xf32>
    %287 = vector.broadcast %286 : vector<16x1xf32> to vector<16x16xf32>
    %288 = arith.subf %284, %287 : vector<16x16xf32>
    %289 = math.exp %288 : vector<16x16xf32>
    %cst_116 = arith.constant dense<0.000000e+00> : vector<16xf32>
    %290 = vector.multi_reduction <add>, %289, %cst_116 [1] : vector<16x16xf32> to vector<16xf32>
    %291 = vector.shape_cast %290 : vector<16xf32> to vector<16x1xf32>
    %292 = tpu.reciprocal %291 {approx = true} : vector<16x1xf32> -> vector<16x1xf32>
    %293 = vector.broadcast %292 : vector<16x1xf32> to vector<16x16xf32>
    %294 = arith.mulf %289, %293 : vector<16x16xf32>
    %295 = vector.extract_strided_slice %262 {offsets = [0, 32], sizes = [16, 32], strides = [1, 1]} : vector<16x128xf32> to vector<16x32xf32>
    %cst_117 = arith.constant dense<0.000000e+00> : vector<16x32xf32>
    %296 = tpu.matmul %294, %295, %cst_117 {dimension_numbers = #tpu.dot_dimension_numbers<[1], [0], [0], [1], [0, 0, 1, 1], [], []>} : vector<16x16xf32>, vector<16x32xf32>, vector<16x32xf32> -> vector<16x32xf32>
    %297 = arith.addf %280, %296 : vector<16x32xf32>
    %298 = vector.extract_strided_slice %260 {offsets = [0, 16], sizes = [16, 8], strides = [1, 1]} : vector<16x32xf32> to vector<16x8xf32>
    %299 = vector.extract_strided_slice %261 {offsets = [0, 16], sizes = [16, 8], strides = [1, 1]} : vector<16x32xf32> to vector<16x8xf32>
    %cst_118 = arith.constant dense<0.000000e+00> : vector<16x16xf32>
    %300 = tpu.matmul %298, %299, %cst_118 {dimension_numbers = #tpu.dot_dimension_numbers<[1], [1], [0], [0], [0, 0, 1, 0], [], []>} : vector<16x8xf32>, vector<16x8xf32>, vector<16x16xf32> -> vector<16x16xf32>
    %301 = arith.addf %300, %2 : vector<16x16xf32>
    %cst_119 = arith.constant dense<0xFF800000> : vector<16xf32>
    %302 = vector.multi_reduction <maximumf>, %301, %cst_119 [1] : vector<16x16xf32> to vector<16xf32>
    %303 = vector.shape_cast %302 : vector<16xf32> to vector<16x1xf32>
    %304 = vector.broadcast %303 : vector<16x1xf32> to vector<16x16xf32>
    %305 = arith.subf %301, %304 : vector<16x16xf32>
    %306 = math.exp %305 : vector<16x16xf32>
    %cst_120 = arith.constant dense<0.000000e+00> : vector<16xf32>
    %307 = vector.multi_reduction <add>, %306, %cst_120 [1] : vector<16x16xf32> to vector<16xf32>
    %308 = vector.shape_cast %307 : vector<16xf32> to vector<16x1xf32>
    %309 = tpu.reciprocal %308 {approx = true} : vector<16x1xf32> -> vector<16x1xf32>
    %310 = vector.broadcast %309 : vector<16x1xf32> to vector<16x16xf32>
    %311 = arith.mulf %306, %310 : vector<16x16xf32>
    %312 = vector.extract_strided_slice %262 {offsets = [0, 64], sizes = [16, 32], strides = [1, 1]} : vector<16x128xf32> to vector<16x32xf32>
    %cst_121 = arith.constant dense<0.000000e+00> : vector<16x32xf32>
    %313 = tpu.matmul %311, %312, %cst_121 {dimension_numbers = #tpu.dot_dimension_numbers<[1], [0], [0], [1], [0, 0, 1, 1], [], []>} : vector<16x16xf32>, vector<16x32xf32>, vector<16x32xf32> -> vector<16x32xf32>
    %314 = arith.addf %297, %313 : vector<16x32xf32>
    %315 = vector.extract_strided_slice %260 {offsets = [0, 24], sizes = [16, 8], strides = [1, 1]} : vector<16x32xf32> to vector<16x8xf32>
    %316 = vector.extract_strided_slice %261 {offsets = [0, 24], sizes = [16, 8], strides = [1, 1]} : vector<16x32xf32> to vector<16x8xf32>
    %cst_122 = arith.constant dense<0.000000e+00> : vector<16x16xf32>
    %317 = tpu.matmul %315, %316, %cst_122 {dimension_numbers = #tpu.dot_dimension_numbers<[1], [1], [0], [0], [0, 0, 1, 0], [], []>} : vector<16x8xf32>, vector<16x8xf32>, vector<16x16xf32> -> vector<16x16xf32>
    %318 = arith.addf %317, %2 : vector<16x16xf32>
    %cst_123 = arith.constant dense<0xFF800000> : vector<16xf32>
    %319 = vector.multi_reduction <maximumf>, %318, %cst_123 [1] : vector<16x16xf32> to vector<16xf32>
    %320 = vector.shape_cast %319 : vector<16xf32> to vector<16x1xf32>
    %321 = vector.broadcast %320 : vector<16x1xf32> to vector<16x16xf32>
    %322 = arith.subf %318, %321 : vector<16x16xf32>
    %323 = math.exp %322 : vector<16x16xf32>
    %cst_124 = arith.constant dense<0.000000e+00> : vector<16xf32>
    %324 = vector.multi_reduction <add>, %323, %cst_124 [1] : vector<16x16xf32> to vector<16xf32>
    %325 = vector.shape_cast %324 : vector<16xf32> to vector<16x1xf32>
    %326 = tpu.reciprocal %325 {approx = true} : vector<16x1xf32> -> vector<16x1xf32>
    %327 = vector.broadcast %326 : vector<16x1xf32> to vector<16x16xf32>
    %328 = arith.mulf %323, %327 : vector<16x16xf32>
    %329 = vector.extract_strided_slice %262 {offsets = [0, 96], sizes = [16, 32], strides = [1, 1]} : vector<16x128xf32> to vector<16x32xf32>
    %cst_125 = arith.constant dense<0.000000e+00> : vector<16x32xf32>
    %330 = tpu.matmul %328, %329, %cst_125 {dimension_numbers = #tpu.dot_dimension_numbers<[1], [0], [0], [1], [0, 0, 1, 1], [], []>} : vector<16x16xf32>, vector<16x32xf32>, vector<16x32xf32> -> vector<16x32xf32>
    %331 = arith.addf %314, %330 : vector<16x32xf32>
    %332 = vector.broadcast %264 : vector<1x32xf32> to vector<16x32xf32>
    %333 = arith.addf %331, %332 : vector<16x32xf32>
    %334 = arith.addf %333, %256 : vector<16x32xf32>
    %c1_126 = arith.constant 1 : index
    %c0_127 = arith.constant 0 : index
    %c0_128 = arith.constant 0 : index
    %335 = vector.load %arg6[%c1_126, %c0_127, %c0_128] : memref<2x1x32xf32, #tpu.memory_space<vmem>>, vector<1x1x32xf32>
    %336 = vector.shape_cast %335 : vector<1x1x32xf32> to vector<1x32xf32>
    %c1_129 = arith.constant 1 : index
    %c0_130 = arith.constant 0 : index
    %c0_131 = arith.constant 0 : index
    %337 = vector.load %arg7[%c1_129, %c0_130, %c0_131] : memref<2x1x32xf32, #tpu.memory_space<vmem>>, vector<1x1x32xf32>
    %338 = vector.shape_cast %337 : vector<1x1x32xf32> to vector<1x32xf32>
    %cst_132 = arith.constant dense<0.000000e+00> : vector<16xf32>
    %339 = vector.multi_reduction <add>, %334, %cst_132 [1] : vector<16x32xf32> to vector<16xf32>
    %340 = vector.shape_cast %339 : vector<16xf32> to vector<16x1xf32>
    %cst_133 = arith.constant 3.200000e+01 : f32
    %341 = vector.broadcast %cst_133 : f32 to vector<16x1xf32>
    %342 = arith.divf %340, %341 : vector<16x1xf32>
    %343 = vector.broadcast %342 : vector<16x1xf32> to vector<16x32xf32>
    %344 = arith.subf %334, %343 : vector<16x32xf32>
    %345 = arith.mulf %344, %344 : vector<16x32xf32>
    %cst_134 = arith.constant dense<0.000000e+00> : vector<16xf32>
    %346 = vector.multi_reduction <add>, %345, %cst_134 [1] : vector<16x32xf32> to vector<16xf32>
    %347 = vector.shape_cast %346 : vector<16xf32> to vector<16x1xf32>
    %cst_135 = arith.constant 3.200000e+01 : f32
    %348 = vector.broadcast %cst_135 : f32 to vector<16x1xf32>
    %349 = arith.divf %347, %348 : vector<16x1xf32>
    %350 = vector.broadcast %342 : vector<16x1xf32> to vector<16x32xf32>
    %351 = arith.subf %334, %350 : vector<16x32xf32>
    %cst_136 = arith.constant 9.99999974E-6 : f32
    %352 = vector.broadcast %cst_136 : f32 to vector<16x1xf32>
    %353 = arith.addf %349, %352 : vector<16x1xf32>
    %354 = math.rsqrt %353 : vector<16x1xf32>
    %355 = vector.broadcast %354 : vector<16x1xf32> to vector<16x32xf32>
    %356 = arith.mulf %351, %355 : vector<16x32xf32>
    %357 = vector.broadcast %336 : vector<1x32xf32> to vector<16x32xf32>
    %358 = arith.mulf %356, %357 : vector<16x32xf32>
    %359 = vector.broadcast %338 : vector<1x32xf32> to vector<16x32xf32>
    %360 = arith.addf %358, %359 : vector<16x32xf32>
    %c1_137 = arith.constant 1 : index
    %c0_138 = arith.constant 0 : index
    %c0_139 = arith.constant 0 : index
    %361 = vector.load %arg8[%c1_137, %c0_138, %c0_139] : memref<2x32x32xf32, #tpu.memory_space<vmem>>, vector<1x32x32xf32>
    %362 = vector.shape_cast %361 : vector<1x32x32xf32> to vector<32x32xf32>
    %cst_140 = arith.constant dense<0.000000e+00> : vector<16x32xf32>
    %363 = tpu.matmul %360, %362, %cst_140 {dimension_numbers = #tpu.dot_dimension_numbers<[1], [0], [0], [1], [0, 0, 1, 1], [], []>} : vector<16x32xf32>, vector<32x32xf32>, vector<16x32xf32> -> vector<16x32xf32>
    %c1_141 = arith.constant 1 : index
    %c0_142 = arith.constant 0 : index
    %c0_143 = arith.constant 0 : index
    %364 = vector.load %arg9[%c1_141, %c0_142, %c0_143] : memref<2x32x160xf32, #tpu.memory_space<vmem>>, vector<1x32x160xf32>
    %365 = vector.shape_cast %364 : vector<1x32x160xf32> to vector<32x160xf32>
    %cst_144 = arith.constant dense<0.000000e+00> : vector<32x160xf32>
    %366 = tpu.matmul %1, %365, %cst_144 {dimension_numbers = #tpu.dot_dimension_numbers<[1], [0], [0], [1], [0, 0, 1, 1], [], []>} : vector<32x32xf32>, vector<32x160xf32>, vector<32x160xf32> -> vector<32x160xf32>
    %367 = vector.extract_strided_slice %366 {offsets = [0, 0], sizes = [32, 32], strides = [1, 1]} : vector<32x160xf32> to vector<32x32xf32>
    %368 = vector.extract_strided_slice %366 {offsets = [0, 32], sizes = [32, 128], strides = [1, 1]} : vector<32x160xf32> to vector<32x128xf32>
    %c1_145 = arith.constant 1 : index
    %c0_146 = arith.constant 0 : index
    %c0_147 = arith.constant 0 : index
    %369 = vector.load %arg10[%c1_145, %c0_146, %c0_147] : memref<2x1x32xf32, #tpu.memory_space<vmem>>, vector<1x1x32xf32>
    %370 = vector.shape_cast %369 : vector<1x1x32xf32> to vector<1x32xf32>
    %371 = vector.extract_strided_slice %363 {offsets = [0, 0], sizes = [16, 8], strides = [1, 1]} : vector<16x32xf32> to vector<16x8xf32>
    %372 = vector.extract_strided_slice %367 {offsets = [0, 0], sizes = [32, 8], strides = [1, 1]} : vector<32x32xf32> to vector<32x8xf32>
    %cst_148 = arith.constant dense<0.000000e+00> : vector<16x32xf32>
    %373 = tpu.matmul %371, %372, %cst_148 {dimension_numbers = #tpu.dot_dimension_numbers<[1], [1], [0], [0], [0, 0, 1, 0], [], []>} : vector<16x8xf32>, vector<32x8xf32>, vector<16x32xf32> -> vector<16x32xf32>
    %374 = arith.addf %373, %3 : vector<16x32xf32>
    %cst_149 = arith.constant dense<0xFF800000> : vector<16xf32>
    %375 = vector.multi_reduction <maximumf>, %374, %cst_149 [1] : vector<16x32xf32> to vector<16xf32>
    %376 = vector.shape_cast %375 : vector<16xf32> to vector<16x1xf32>
    %377 = vector.broadcast %376 : vector<16x1xf32> to vector<16x32xf32>
    %378 = arith.subf %374, %377 : vector<16x32xf32>
    %379 = math.exp %378 : vector<16x32xf32>
    %cst_150 = arith.constant dense<0.000000e+00> : vector<16xf32>
    %380 = vector.multi_reduction <add>, %379, %cst_150 [1] : vector<16x32xf32> to vector<16xf32>
    %381 = vector.shape_cast %380 : vector<16xf32> to vector<16x1xf32>
    %382 = tpu.reciprocal %381 {approx = true} : vector<16x1xf32> -> vector<16x1xf32>
    %383 = vector.broadcast %382 : vector<16x1xf32> to vector<16x32xf32>
    %384 = arith.mulf %379, %383 : vector<16x32xf32>
    %385 = vector.extract_strided_slice %368 {offsets = [0, 0], sizes = [32, 32], strides = [1, 1]} : vector<32x128xf32> to vector<32x32xf32>
    %cst_151 = arith.constant dense<0.000000e+00> : vector<16x32xf32>
    %386 = tpu.matmul %384, %385, %cst_151 {dimension_numbers = #tpu.dot_dimension_numbers<[1], [0], [0], [1], [0, 0, 1, 1], [], []>} : vector<16x32xf32>, vector<32x32xf32>, vector<16x32xf32> -> vector<16x32xf32>
    %387 = vector.extract_strided_slice %363 {offsets = [0, 8], sizes = [16, 8], strides = [1, 1]} : vector<16x32xf32> to vector<16x8xf32>
    %388 = vector.extract_strided_slice %367 {offsets = [0, 8], sizes = [32, 8], strides = [1, 1]} : vector<32x32xf32> to vector<32x8xf32>
    %cst_152 = arith.constant dense<0.000000e+00> : vector<16x32xf32>
    %389 = tpu.matmul %387, %388, %cst_152 {dimension_numbers = #tpu.dot_dimension_numbers<[1], [1], [0], [0], [0, 0, 1, 0], [], []>} : vector<16x8xf32>, vector<32x8xf32>, vector<16x32xf32> -> vector<16x32xf32>
    %390 = arith.addf %389, %3 : vector<16x32xf32>
    %cst_153 = arith.constant dense<0xFF800000> : vector<16xf32>
    %391 = vector.multi_reduction <maximumf>, %390, %cst_153 [1] : vector<16x32xf32> to vector<16xf32>
    %392 = vector.shape_cast %391 : vector<16xf32> to vector<16x1xf32>
    %393 = vector.broadcast %392 : vector<16x1xf32> to vector<16x32xf32>
    %394 = arith.subf %390, %393 : vector<16x32xf32>
    %395 = math.exp %394 : vector<16x32xf32>
    %cst_154 = arith.constant dense<0.000000e+00> : vector<16xf32>
    %396 = vector.multi_reduction <add>, %395, %cst_154 [1] : vector<16x32xf32> to vector<16xf32>
    %397 = vector.shape_cast %396 : vector<16xf32> to vector<16x1xf32>
    %398 = tpu.reciprocal %397 {approx = true} : vector<16x1xf32> -> vector<16x1xf32>
    %399 = vector.broadcast %398 : vector<16x1xf32> to vector<16x32xf32>
    %400 = arith.mulf %395, %399 : vector<16x32xf32>
    %401 = vector.extract_strided_slice %368 {offsets = [0, 32], sizes = [32, 32], strides = [1, 1]} : vector<32x128xf32> to vector<32x32xf32>
    %cst_155 = arith.constant dense<0.000000e+00> : vector<16x32xf32>
    %402 = tpu.matmul %400, %401, %cst_155 {dimension_numbers = #tpu.dot_dimension_numbers<[1], [0], [0], [1], [0, 0, 1, 1], [], []>} : vector<16x32xf32>, vector<32x32xf32>, vector<16x32xf32> -> vector<16x32xf32>
    %403 = arith.addf %386, %402 : vector<16x32xf32>
    %404 = vector.extract_strided_slice %363 {offsets = [0, 16], sizes = [16, 8], strides = [1, 1]} : vector<16x32xf32> to vector<16x8xf32>
    %405 = vector.extract_strided_slice %367 {offsets = [0, 16], sizes = [32, 8], strides = [1, 1]} : vector<32x32xf32> to vector<32x8xf32>
    %cst_156 = arith.constant dense<0.000000e+00> : vector<16x32xf32>
    %406 = tpu.matmul %404, %405, %cst_156 {dimension_numbers = #tpu.dot_dimension_numbers<[1], [1], [0], [0], [0, 0, 1, 0], [], []>} : vector<16x8xf32>, vector<32x8xf32>, vector<16x32xf32> -> vector<16x32xf32>
    %407 = arith.addf %406, %3 : vector<16x32xf32>
    %cst_157 = arith.constant dense<0xFF800000> : vector<16xf32>
    %408 = vector.multi_reduction <maximumf>, %407, %cst_157 [1] : vector<16x32xf32> to vector<16xf32>
    %409 = vector.shape_cast %408 : vector<16xf32> to vector<16x1xf32>
    %410 = vector.broadcast %409 : vector<16x1xf32> to vector<16x32xf32>
    %411 = arith.subf %407, %410 : vector<16x32xf32>
    %412 = math.exp %411 : vector<16x32xf32>
    %cst_158 = arith.constant dense<0.000000e+00> : vector<16xf32>
    %413 = vector.multi_reduction <add>, %412, %cst_158 [1] : vector<16x32xf32> to vector<16xf32>
    %414 = vector.shape_cast %413 : vector<16xf32> to vector<16x1xf32>
    %415 = tpu.reciprocal %414 {approx = true} : vector<16x1xf32> -> vector<16x1xf32>
    %416 = vector.broadcast %415 : vector<16x1xf32> to vector<16x32xf32>
    %417 = arith.mulf %412, %416 : vector<16x32xf32>
    %418 = vector.extract_strided_slice %368 {offsets = [0, 64], sizes = [32, 32], strides = [1, 1]} : vector<32x128xf32> to vector<32x32xf32>
    %cst_159 = arith.constant dense<0.000000e+00> : vector<16x32xf32>
    %419 = tpu.matmul %417, %418, %cst_159 {dimension_numbers = #tpu.dot_dimension_numbers<[1], [0], [0], [1], [0, 0, 1, 1], [], []>} : vector<16x32xf32>, vector<32x32xf32>, vector<16x32xf32> -> vector<16x32xf32>
    %420 = arith.addf %403, %419 : vector<16x32xf32>
    %421 = vector.extract_strided_slice %363 {offsets = [0, 24], sizes = [16, 8], strides = [1, 1]} : vector<16x32xf32> to vector<16x8xf32>
    %422 = vector.extract_strided_slice %367 {offsets = [0, 24], sizes = [32, 8], strides = [1, 1]} : vector<32x32xf32> to vector<32x8xf32>
    %cst_160 = arith.constant dense<0.000000e+00> : vector<16x32xf32>
    %423 = tpu.matmul %421, %422, %cst_160 {dimension_numbers = #tpu.dot_dimension_numbers<[1], [1], [0], [0], [0, 0, 1, 0], [], []>} : vector<16x8xf32>, vector<32x8xf32>, vector<16x32xf32> -> vector<16x32xf32>
    %424 = arith.addf %423, %3 : vector<16x32xf32>
    %cst_161 = arith.constant dense<0xFF800000> : vector<16xf32>
    %425 = vector.multi_reduction <maximumf>, %424, %cst_161 [1] : vector<16x32xf32> to vector<16xf32>
    %426 = vector.shape_cast %425 : vector<16xf32> to vector<16x1xf32>
    %427 = vector.broadcast %426 : vector<16x1xf32> to vector<16x32xf32>
    %428 = arith.subf %424, %427 : vector<16x32xf32>
    %429 = math.exp %428 : vector<16x32xf32>
    %cst_162 = arith.constant dense<0.000000e+00> : vector<16xf32>
    %430 = vector.multi_reduction <add>, %429, %cst_162 [1] : vector<16x32xf32> to vector<16xf32>
    %431 = vector.shape_cast %430 : vector<16xf32> to vector<16x1xf32>
    %432 = tpu.reciprocal %431 {approx = true} : vector<16x1xf32> -> vector<16x1xf32>
    %433 = vector.broadcast %432 : vector<16x1xf32> to vector<16x32xf32>
    %434 = arith.mulf %429, %433 : vector<16x32xf32>
    %435 = vector.extract_strided_slice %368 {offsets = [0, 96], sizes = [32, 32], strides = [1, 1]} : vector<32x128xf32> to vector<32x32xf32>
    %cst_163 = arith.constant dense<0.000000e+00> : vector<16x32xf32>
    %436 = tpu.matmul %434, %435, %cst_163 {dimension_numbers = #tpu.dot_dimension_numbers<[1], [0], [0], [1], [0, 0, 1, 1], [], []>} : vector<16x32xf32>, vector<32x32xf32>, vector<16x32xf32> -> vector<16x32xf32>
    %437 = arith.addf %420, %436 : vector<16x32xf32>
    %438 = vector.broadcast %370 : vector<1x32xf32> to vector<16x32xf32>
    %439 = arith.addf %437, %438 : vector<16x32xf32>
    %440 = arith.addf %439, %360 : vector<16x32xf32>
    %c1_164 = arith.constant 1 : index
    %c0_165 = arith.constant 0 : index
    %c0_166 = arith.constant 0 : index
    %441 = vector.load %arg11[%c1_164, %c0_165, %c0_166] : memref<2x1x32xf32, #tpu.memory_space<vmem>>, vector<1x1x32xf32>
    %442 = vector.shape_cast %441 : vector<1x1x32xf32> to vector<1x32xf32>
    %c1_167 = arith.constant 1 : index
    %c0_168 = arith.constant 0 : index
    %c0_169 = arith.constant 0 : index
    %443 = vector.load %arg12[%c1_167, %c0_168, %c0_169] : memref<2x1x32xf32, #tpu.memory_space<vmem>>, vector<1x1x32xf32>
    %444 = vector.shape_cast %443 : vector<1x1x32xf32> to vector<1x32xf32>
    %cst_170 = arith.constant dense<0.000000e+00> : vector<16xf32>
    %445 = vector.multi_reduction <add>, %440, %cst_170 [1] : vector<16x32xf32> to vector<16xf32>
    %446 = vector.shape_cast %445 : vector<16xf32> to vector<16x1xf32>
    %cst_171 = arith.constant 3.200000e+01 : f32
    %447 = vector.broadcast %cst_171 : f32 to vector<16x1xf32>
    %448 = arith.divf %446, %447 : vector<16x1xf32>
    %449 = vector.broadcast %448 : vector<16x1xf32> to vector<16x32xf32>
    %450 = arith.subf %440, %449 : vector<16x32xf32>
    %451 = arith.mulf %450, %450 : vector<16x32xf32>
    %cst_172 = arith.constant dense<0.000000e+00> : vector<16xf32>
    %452 = vector.multi_reduction <add>, %451, %cst_172 [1] : vector<16x32xf32> to vector<16xf32>
    %453 = vector.shape_cast %452 : vector<16xf32> to vector<16x1xf32>
    %cst_173 = arith.constant 3.200000e+01 : f32
    %454 = vector.broadcast %cst_173 : f32 to vector<16x1xf32>
    %455 = arith.divf %453, %454 : vector<16x1xf32>
    %456 = vector.broadcast %448 : vector<16x1xf32> to vector<16x32xf32>
    %457 = arith.subf %440, %456 : vector<16x32xf32>
    %cst_174 = arith.constant 9.99999974E-6 : f32
    %458 = vector.broadcast %cst_174 : f32 to vector<16x1xf32>
    %459 = arith.addf %455, %458 : vector<16x1xf32>
    %460 = math.rsqrt %459 : vector<16x1xf32>
    %461 = vector.broadcast %460 : vector<16x1xf32> to vector<16x32xf32>
    %462 = arith.mulf %457, %461 : vector<16x32xf32>
    %463 = vector.broadcast %442 : vector<1x32xf32> to vector<16x32xf32>
    %464 = arith.mulf %462, %463 : vector<16x32xf32>
    %465 = vector.broadcast %444 : vector<1x32xf32> to vector<16x32xf32>
    %466 = arith.addf %464, %465 : vector<16x32xf32>
    %c1_175 = arith.constant 1 : index
    %c0_176 = arith.constant 0 : index
    %c0_177 = arith.constant 0 : index
    %467 = vector.load %arg13[%c1_175, %c0_176, %c0_177] : memref<2x32x128xf32, #tpu.memory_space<vmem>>, vector<1x32x128xf32>
    %468 = vector.shape_cast %467 : vector<1x32x128xf32> to vector<32x128xf32>
    %cst_178 = arith.constant dense<0.000000e+00> : vector<16x128xf32>
    %469 = tpu.matmul %466, %468, %cst_178 {dimension_numbers = #tpu.dot_dimension_numbers<[1], [0], [0], [1], [0, 0, 1, 1], [], []>} : vector<16x32xf32>, vector<32x128xf32>, vector<16x128xf32> -> vector<16x128xf32>
    %c1_179 = arith.constant 1 : index
    %c0_180 = arith.constant 0 : index
    %c0_181 = arith.constant 0 : index
    %470 = vector.load %arg14[%c1_179, %c0_180, %c0_181] : memref<2x1x128xf32, #tpu.memory_space<vmem>>, vector<1x1x128xf32>
    %471 = vector.shape_cast %470 : vector<1x1x128xf32> to vector<1x128xf32>
    %472 = vector.broadcast %471 : vector<1x128xf32> to vector<16x128xf32>
    %473 = arith.addf %469, %472 : vector<16x128xf32>
    %cst_182 = arith.constant 0.000000e+00 : f32
    %474 = vector.broadcast %cst_182 : f32 to vector<16x128xf32>
    %475 = arith.maximumf %473, %474 : vector<16x128xf32>
    %c1_183 = arith.constant 1 : index
    %c0_184 = arith.constant 0 : index
    %c0_185 = arith.constant 0 : index
    %476 = vector.load %arg15[%c1_183, %c0_184, %c0_185] : memref<2x128x32xf32, #tpu.memory_space<vmem>>, vector<1x128x32xf32>
    %477 = vector.shape_cast %476 : vector<1x128x32xf32> to vector<128x32xf32>
    %cst_186 = arith.constant dense<0.000000e+00> : vector<16x32xf32>
    %478 = tpu.matmul %475, %477, %cst_186 {dimension_numbers = #tpu.dot_dimension_numbers<[1], [0], [0], [1], [0, 0, 1, 1], [], []>} : vector<16x128xf32>, vector<128x32xf32>, vector<16x32xf32> -> vector<16x32xf32>
    %c1_187 = arith.constant 1 : index
    %c0_188 = arith.constant 0 : index
    %c0_189 = arith.constant 0 : index
    %479 = vector.load %arg16[%c1_187, %c0_188, %c0_189] : memref<2x1x32xf32, #tpu.memory_space<vmem>>, vector<1x1x32xf32>
    %480 = vector.shape_cast %479 : vector<1x1x32xf32> to vector<1x32xf32>
    %481 = vector.broadcast %480 : vector<1x32xf32> to vector<16x32xf32>
    %482 = arith.addf %478, %481 : vector<16x32xf32>
    %483 = arith.addf %482, %466 : vector<16x32xf32>
    %c1_190 = arith.constant 1 : index
    %c0_191 = arith.constant 0 : index
    %c0_192 = arith.constant 0 : index
    %484 = vector.load %arg17[%c1_190, %c0_191, %c0_192] : memref<2x1x32xf32, #tpu.memory_space<vmem>>, vector<1x1x32xf32>
    %485 = vector.shape_cast %484 : vector<1x1x32xf32> to vector<1x32xf32>
    %c1_193 = arith.constant 1 : index
    %c0_194 = arith.constant 0 : index
    %c0_195 = arith.constant 0 : index
    %486 = vector.load %arg18[%c1_193, %c0_194, %c0_195] : memref<2x1x32xf32, #tpu.memory_space<vmem>>, vector<1x1x32xf32>
    %487 = vector.shape_cast %486 : vector<1x1x32xf32> to vector<1x32xf32>
    %cst_196 = arith.constant dense<0.000000e+00> : vector<16xf32>
    %488 = vector.multi_reduction <add>, %483, %cst_196 [1] : vector<16x32xf32> to vector<16xf32>
    %489 = vector.shape_cast %488 : vector<16xf32> to vector<16x1xf32>
    %cst_197 = arith.constant 3.200000e+01 : f32
    %490 = vector.broadcast %cst_197 : f32 to vector<16x1xf32>
    %491 = arith.divf %489, %490 : vector<16x1xf32>
    %492 = vector.broadcast %491 : vector<16x1xf32> to vector<16x32xf32>
    %493 = arith.subf %483, %492 : vector<16x32xf32>
    %494 = arith.mulf %493, %493 : vector<16x32xf32>
    %cst_198 = arith.constant dense<0.000000e+00> : vector<16xf32>
    %495 = vector.multi_reduction <add>, %494, %cst_198 [1] : vector<16x32xf32> to vector<16xf32>
    %496 = vector.shape_cast %495 : vector<16xf32> to vector<16x1xf32>
    %cst_199 = arith.constant 3.200000e+01 : f32
    %497 = vector.broadcast %cst_199 : f32 to vector<16x1xf32>
    %498 = arith.divf %496, %497 : vector<16x1xf32>
    %499 = vector.broadcast %491 : vector<16x1xf32> to vector<16x32xf32>
    %500 = arith.subf %483, %499 : vector<16x32xf32>
    %cst_200 = arith.constant 9.99999974E-6 : f32
    %501 = vector.broadcast %cst_200 : f32 to vector<16x1xf32>
    %502 = arith.addf %498, %501 : vector<16x1xf32>
    %503 = math.rsqrt %502 : vector<16x1xf32>
    %504 = vector.broadcast %503 : vector<16x1xf32> to vector<16x32xf32>
    %505 = arith.mulf %500, %504 : vector<16x32xf32>
    %506 = vector.broadcast %485 : vector<1x32xf32> to vector<16x32xf32>
    %507 = arith.mulf %505, %506 : vector<16x32xf32>
    %508 = vector.broadcast %487 : vector<1x32xf32> to vector<16x32xf32>
    %509 = arith.addf %507, %508 : vector<16x32xf32>
    %c0_201 = arith.constant 0 : index
    %c0_202 = arith.constant 0 : index
    %510 = vector.load %arg19[%c0_201, %c0_202] : memref<32x128xf32, #tpu.memory_space<vmem>>, vector<32x128xf32>
    %cst_203 = arith.constant dense<0.000000e+00> : vector<16x128xf32>
    %511 = tpu.matmul %509, %510, %cst_203 {dimension_numbers = #tpu.dot_dimension_numbers<[1], [0], [0], [1], [0, 0, 1, 1], [], []>} : vector<16x32xf32>, vector<32x128xf32>, vector<16x128xf32> -> vector<16x128xf32>
    %c0_204 = arith.constant 0 : index
    %c0_205 = arith.constant 0 : index
    %512 = vector.load %arg20[%c0_204, %c0_205] : memref<1x128xf32, #tpu.memory_space<vmem>>, vector<1x128xf32>
    %513 = vector.broadcast %512 : vector<1x128xf32> to vector<16x128xf32>
    %514 = arith.addf %511, %513 : vector<16x128xf32>
    %c0_206 = arith.constant 0 : index
    %c0_207 = arith.constant 0 : index
    %515 = vector.load %arg21[%c0_206, %c0_207] : memref<16x128xf32, #tpu.memory_space<vmem>>, vector<16x128xf32>
    tpu.vector_store %arg21[%c0_206, %c0_207], %514 {strides = array<i32>} : memref<16x128xf32, #tpu.memory_space<vmem>>, vector<16x128xf32>,
    return
  }
}

</mosaic_0001>

<llo_original>
// kernel: decoder_forward.1
$region0: #{decoder_forward.1}
  #allocation0 [shape = 'u32[]', space=smem, size = 0x4, offset = 0x4, fixed_abs, tag = 'smem constant byte address 0x4 - core index']
  #allocation1 [shape = 'u32[72,128]{1,0:T(1,128)}', space=vmem, size = 0x9000, scoped, tag = 'internal scratch']
  %s0 = inlined_call_operand.vmem [shape: f32[16,32], index: 0, kind: input, shape index: {}]
  %s1 = inlined_call_operand.vmem [shape: f32[32,32], index: 1, kind: input, shape index: {}]
  %s2 = inlined_call_operand.vmem [shape: f32[16,16], index: 2, kind: input, shape index: {}]
  %s3 = inlined_call_operand.vmem [shape: f32[16,32], index: 3, kind: input, shape index: {}]
  %s4 = inlined_call_operand.vmem [shape: f32[2,32,192], index: 4, kind: input, shape index: {}]
  %s5 = inlined_call_operand.vmem [shape: f32[2,1,32], index: 5, kind: input, shape index: {}]
  %s6 = inlined_call_operand.vmem [shape: f32[2,1,32], index: 6, kind: input, shape index: {}]
  %s7 = inlined_call_operand.vmem [shape: f32[2,1,32], index: 7, kind: input, shape index: {}]
  %s8 = inlined_call_operand.vmem [shape: f32[2,32,32], index: 8, kind: input, shape index: {}]
  %s9 = inlined_call_operand.vmem [shape: f32[2,32,160], index: 9, kind: input, shape index: {}]
  %s10 = inlined_call_operand.vmem [shape: f32[2,1,32], index: 10, kind: input, shape index: {}]
  %s11 = inlined_call_operand.vmem [shape: f32[2,1,32], index: 11, kind: input, shape index: {}]
  %s12 = inlined_call_operand.vmem [shape: f32[2,1,32], index: 12, kind: input, shape index: {}]
  %s13 = inlined_call_operand.vmem [shape: f32[2,32,128], index: 13, kind: input, shape index: {}]
  %s14 = inlined_call_operand.vmem [shape: f32[2,1,128], index: 14, kind: input, shape index: {}]
  %s15 = inlined_call_operand.vmem [shape: f32[2,128,32], index: 15, kind: input, shape index: {}]
  %s16 = inlined_call_operand.vmem [shape: f32[2,1,32], index: 16, kind: input, shape index: {}]
  %s17 = inlined_call_operand.vmem [shape: f32[2,1,32], index: 17, kind: input, shape index: {}]
  %s18 = inlined_call_operand.vmem [shape: f32[2,1,32], index: 18, kind: input, shape index: {}]
  %s19 = inlined_call_operand.vmem [shape: f32[32,128], index: 19, kind: input, shape index: {}]
  %s20 = inlined_call_operand.vmem [shape: f32[1,128], index: 20, kind: input, shape index: {}]
  %s21 = inlined_call_operand.vmem [shape: f32[16,128], index: 21, kind: output, shape index: {}]
  %s22 = sld [smem:[#allocation0]]
  $region94: #{decoder_forward.1} parent=0
    _
  %s24 = ssub.s32 1, %s22
  %s25 = scalar_select 0, %s24, %s22
  // Predicated region
  $region2: #{decoder_forward.1} parent=0 // pred_check
    _
  $region3: #{decoder_forward.1} parent=0 // pred_check_branch
    %27 = sbr.rel (0) target = $region5
  $region4: #{decoder_forward.1} parent=0 // pred_region
    _
  $region5: #{decoder_forward.1} parent=0 // pred_fallthru
    _
  // Predicated region
  $region6: #{decoder_forward.1} parent=0 // pred_check
    _
  $region7: #{decoder_forward.1} parent=0 // pred_check_branch
    %29 = sbr.rel (0) target = $region9
  $region8: #{decoder_forward.1} parent=0 // pred_region
    _
  $region9: #{decoder_forward.1} parent=0 // pred_fallthru
    _
  // Predicated region
  $region10: #{decoder_forward.1} parent=0 // pred_check
    _
  $region11: #{decoder_forward.1} parent=0 // pred_check_branch
    %31 = sbr.rel (0) target = $region13
  $region12: #{decoder_forward.1} parent=0 // pred_region
    _
  $region13: #{decoder_forward.1} parent=0 // pred_fallthru
    _
  // Predicated region
  $region14: #{decoder_forward.1} parent=0 // pred_check
    _
  $region15: #{decoder_forward.1} parent=0 // pred_check_branch
    %33 = sbr.rel (0) target = $region17
  $region16: #{decoder_forward.1} parent=0 // pred_region
    _
  $region17: #{decoder_forward.1} parent=0 // pred_fallthru
    _
  // Predicated region
  $region18: #{decoder_forward.1} parent=0 // pred_check
    _
  $region19: #{decoder_forward.1} parent=0 // pred_check_branch
    %35 = sbr.rel (0) target = $region21
  $region20: #{decoder_forward.1} parent=0 // pred_region
    _
  $region21: #{decoder_forward.1} parent=0 // pred_fallthru
    _
  // Predicated region
  $region22: #{decoder_forward.1} parent=0 // pred_check
    _
  $region23: #{decoder_forward.1} parent=0 // pred_check_branch
    %37 = sbr.rel (0) target = $region25
  $region24: #{decoder_forward.1} parent=0 // pred_region
    _
  $region25: #{decoder_forward.1} parent=0 // pred_fallthru
    _
  // Predicated region
  $region26: #{decoder_forward.1} parent=0 // pred_check
    _
  $region27: #{decoder_forward.1} parent=0 // pred_check_branch
    %39 = sbr.rel (0) target = $region29
  $region28: #{decoder_forward.1} parent=0 // pred_region
    _
  $region29: #{decoder_forward.1} parent=0 // pred_fallthru
    _
  // Predicated region
  $region30: #{decoder_forward.1} parent=0 // pred_check
    _
  $region31: #{decoder_forward.1} parent=0 // pred_check_branch
    %41 = sbr.rel (0) target = $region33
  $region32: #{decoder_forward.1} parent=0 // pred_region
    _
  $region33: #{decoder_forward.1} parent=0 // pred_fallthru
    _
  // Predicated region
  $region34: #{decoder_forward.1} parent=0 // pred_check
    _
  $region35: #{decoder_forward.1} parent=0 // pred_check_branch
    %43 = sbr.rel (0) target = $region37
  $region36: #{decoder_forward.1} parent=0 // pred_region
    _
  $region37: #{decoder_forward.1} parent=0 // pred_fallthru
    _
  // Predicated region
  $region38: #{decoder_forward.1} parent=0 // pred_check
    _
  $region39: #{decoder_forward.1} parent=0 // pred_check_branch
    %45 = sbr.rel (0) target = $region41
  $region40: #{decoder_forward.1} parent=0 // pred_region
    _
  $region41: #{decoder_forward.1} parent=0 // pred_fallthru
    _
  // Predicated region
  $region42: #{decoder_forward.1} parent=0 // pred_check
    _
  $region43: #{decoder_forward.1} parent=0 // pred_check_branch
    %47 = sbr.rel (0) target = $region45
  $region44: #{decoder_forward.1} parent=0 // pred_region
    _
  $region45: #{decoder_forward.1} parent=0 // pred_fallthru
    _
  // Predicated region
  $region46: #{decoder_forward.1} parent=0 // pred_check
    _
  $region47: #{decoder_forward.1} parent=0 // pred_check_branch
    %49 = sbr.rel (0) target = $region49
  $region48: #{decoder_forward.1} parent=0 // pred_region
    _
  $region49: #{decoder_forward.1} parent=0 // pred_fallthru
    _
  // Predicated region
  $region50: #{decoder_forward.1} parent=0 // pred_check
    _
  $region51: #{decoder_forward.1} parent=0 // pred_check_branch
    %51 = sbr.rel (0) target = $region53
  $region52: #{decoder_forward.1} parent=0 // pred_region
    _
  $region53: #{decoder_forward.1} parent=0 // pred_fallthru
    _
  // Predicated region
  $region54: #{decoder_forward.1} parent=0 // pred_check
    _
  $region55: #{decoder_forward.1} parent=0 // pred_check_branch
    %53 = sbr.rel (0) target = $region57
  $region56: #{decoder_forward.1} parent=0 // pred_region
    _
  $region57: #{decoder_forward.1} parent=0 // pred_fallthru
    _
  // Predicated region
  $region58: #{decoder_forward.1} parent=0 // pred_check
    _
  $region59: #{decoder_forward.1} parent=0 // pred_check_branch
    %55 = sbr.rel (0) target = $region61
  $region60: #{decoder_forward.1} parent=0 // pred_region
    _
  $region61: #{decoder_forward.1} parent=0 // pred_fallthru
    _
  // Predicated region
  $region62: #{decoder_forward.1} parent=0 // pred_check
    _
  $region63: #{decoder_forward.1} parent=0 // pred_check_branch
    %57 = sbr.rel (0) target = $region65
  $region64: #{decoder_forward.1} parent=0 // pred_region
    _
  $region65: #{decoder_forward.1} parent=0 // pred_fallthru
    _
  // Predicated region
  $region66: #{decoder_forward.1} parent=0 // pred_check
    _
  $region67: #{decoder_forward.1} parent=0 // pred_check_branch
    %59 = sbr.rel (0) target = $region69
  $region68: #{decoder_forward.1} parent=0 // pred_region
    _
  $region69: #{decoder_forward.1} parent=0 // pred_fallthru
    _
  // Predicated region
  $region70: #{decoder_forward.1} parent=0 // pred_check
    _
  $region71: #{decoder_forward.1} parent=0 // pred_check_branch
    %61 = sbr.rel (0) target = $region73
  $region72: #{decoder_forward.1} parent=0 // pred_region
    _
  $region73: #{decoder_forward.1} parent=0 // pred_fallthru
    _
  // Predicated region
  $region74: #{decoder_forward.1} parent=0 // pred_check
    _
  $region75: #{decoder_forward.1} parent=0 // pred_check_branch
    %63 = sbr.rel (0) target = $region77
  $region76: #{decoder_forward.1} parent=0 // pred_region
    _
  $region77: #{decoder_forward.1} parent=0 // pred_fallthru
    _
  // Predicated region
  $region78: #{decoder_forward.1} parent=0 // pred_check
    _
  $region79: #{decoder_forward.1} parent=0 // pred_check_branch
    %65 = sbr.rel (0) target = $region81
  $region80: #{decoder_forward.1} parent=0 // pred_region
    _
  $region81: #{decoder_forward.1} parent=0 // pred_fallthru
    _
  // Predicated region
  $region82: #{decoder_forward.1} parent=0 // pred_check
    _
  $region83: #{decoder_forward.1} parent=0 // pred_check_branch
    %67 = sbr.rel (0) target = $region85
  $region84: #{decoder_forward.1} parent=0 // pred_region
    _
  $region85: #{decoder_forward.1} parent=0 // pred_fallthru
    _
  %v68 = vld [vmem:[%s0] sm:$0xff]
  %v69 = vld [vmem:[%s0 + $0x8] sm:$0xff]
  %v70 = vld [vmem:[%s1] sm:$0xff]
  %v71 = vld [vmem:[%s1 + $0x8] sm:$0xff]
  %v72 = vld [vmem:[%s1 + $0x10] sm:$0xff]
  %v73 = vld [vmem:[%s1 + $0x18] sm:$0xff]
  %v74 = vld [vmem:[%s2] sm:$0xff]
  %v75 = vld [vmem:[%s2 + $0x8] sm:$0xff]
  %v76 = vld [vmem:[%s3] sm:$0xff]
  %v77 = vld [vmem:[%s3 + $0x8] sm:$0xff]
  %v78 = vld [vmem:[%s4] sm:$0xff]
  %v79 = vld [vmem:[%s4 + $0x8] sm:$0xff]
  %v80 = vld [vmem:[%s4 + $0x10] sm:$0xff]
  %v81 = vld [vmem:[%s4 + $0x18] sm:$0xff]
  %v82 = vld [vmem:[%s4 + $0x20] sm:$0xff]
  %v83 = vld [vmem:[%s4 + $0x28] sm:$0xff]
  %v84 = vld [vmem:[%s4 + $0x30] sm:$0xff]
  %v85 = vld [vmem:[%s4 + $0x38] sm:$0xff]
  %vm86 = vcmask 261120
  %v88 = vsel %vm86, %v68, 0
  %v91 = vsel %vm86, %v69, 0
  %93 = vmatpush.msra.mxu0 0.0
  %94 = vmatpush.msra.mxu0 0.0
  %95 = vmatpush.msra.mxu0 0.0
  %96 = vmatpush.msra.mxu0 0.0
  %97 = vmatpush.msra.mxu0 0.0
  %98 = vmatpush.msra.mxu0 0.0
  %99 = vmatpush.msra.mxu0 0.0
  %100 = vmatpush.msra.mxu0 0.0
  %101 = vmatpush.msra.mxu0 0.0
  %102 = vmatpush.msra.mxu0 0.0
  %103 = vmatpush.msra.mxu0 0.0
  %104 = vmatpush.msra.mxu0 0.0
  %105 = vmatpush.msra.mxu0 %v84
  %106 = vmatpush.msra.mxu0 %v82
  %107 = vmatpush.msra.mxu0 %v80
  %108 = vmatpush.msra.mxu0 %v78
  %109 = vmatmul.f32.gmra.mxu0 %v88
  %v110 = vpop.f32.mrf.mxu0
  %v111 = vadd.f32 0.0, %v110
  %112 = vmatmul.f32.gmra.mxu0 %v91
  %v113 = vpop.f32.mrf.mxu0
  %v114 = vadd.f32 0.0, %v113
  %115 = vdwg.mxu0
  %116 = vmatpush.msra.mxu0 0.0
  %117 = vmatpush.msra.mxu0 0.0
  %118 = vmatpush.msra.mxu0 0.0
  %119 = vmatpush.msra.mxu0 0.0
  %120 = vmatpush.msra.mxu0 0.0
  %121 = vmatpush.msra.mxu0 0.0
  %122 = vmatpush.msra.mxu0 0.0
  %123 = vmatpush.msra.mxu0 0.0
  %124 = vmatpush.msra.mxu0 0.0
  %125 = vmatpush.msra.mxu0 0.0
  %126 = vmatpush.msra.mxu0 0.0
  %127 = vmatpush.msra.mxu0 0.0
  %128 = vmatpush.msra.mxu0 %v85
  %129 = vmatpush.msra.mxu0 %v83
  %130 = vmatpush.msra.mxu0 %v81
  %131 = vmatpush.msra.mxu0 %v79
  %132 = vmatmul.f32.gmra.mxu0 %v88
  %v133 = vpop.f32.mrf.mxu0
  %v134 = vadd.f32 0.0, %v133
  %135 = vmatmul.f32.gmra.mxu0 %v91
  %v136 = vpop.f32.mrf.mxu0
  %v137 = vadd.f32 0.0, %v136
  %138 = vdwg.mxu0
  %v139 = vld [vmem:[%s5] sm:$0x1]
  %142 = vrot.lane.b32.xlu0 %v111, 96
  %v143 = vpop.permute.xlu0 %142
  %144 = vrot.lane.b32.xlu0 %v114, 96
  %v145 = vpop.permute.xlu0 %144
  %vm146 = vcmask 64512
  %v147 = vsel %vm146, %v111, 0
  %v149 = vsel %vm146, %v114, 0
  %v151 = vsel %vm146, %v143, 0
  %v153 = vsel %vm146, %v145, 0
  %155 = vmatpush.xpose.msra.mxu0 0.0
  %156 = vmatpush.xpose.msra.mxu0 0.0
  %157 = vmatpush.xpose.msra.mxu0 0.0
  %158 = vmatpush.xpose.msra.mxu0 0.0
  %159 = vmatpush.xpose.msra.mxu0 0.0
  %160 = vmatpush.xpose.msra.mxu0 0.0
  %161 = vmatpush.xpose.msra.mxu0 0.0
  %162 = vmatpush.xpose.msra.mxu0 0.0
  %163 = vmatpush.xpose.msra.mxu0 0.0
  %164 = vmatpush.xpose.msra.mxu0 0.0
  %165 = vmatpush.xpose.msra.mxu0 0.0
  %166 = vmatpush.xpose.msra.mxu0 0.0
  %167 = vmatpush.xpose.msra.mxu0 0.0
  %168 = vmatpush.xpose.msra.mxu0 0.0
  %169 = vmatpush.xpose.msra.mxu0 %v153
  %170 = vmatpush.xpose.msra.mxu0 %v151
  %171 = vmatmul.f32.gmra.mxu0 %v147
  %v172 = vpop.f32.mrf.mxu0
  %v173 = vadd.f32 %v74, %v172
  %174 = vmatmul.f32.gmra.mxu0 %v149
  %v175 = vpop.f32.mrf.mxu0
  %v176 = vadd.f32 %v75, %v175
  %177 = vdwg.mxu0
  %vm178 = vcmask 130048
  %v179 = vsel %vm178, %v173, -inf
  %180 = vmax.xlane.f32.xlu0 %v179
  %v181 = vpop.xlane.xlu0 %180
  %v182 = vsel %vm178, %v176, -inf
  %183 = vmax.xlane.f32.xlu0 %v182
  %v184 = vpop.xlane.xlu0 %183
  %v185 = vsub.f32 %v173, %v181
  %v186 = vsub.f32 %v176, %v184
  %v187 = vmul.f32 %v185, 1.442695
  %v188 = vpow.pop %v187
  %v189 = vmul.f32 %v186, 1.442695
  %v190 = vpow.pop %v189
  %v191 = vsel %vm178, %v188, 0.0
  %192 = vadd.xlane.f32.xlu0 %v191
  %v193 = vpop.xlane.xlu0 %192
  %v194 = vsel %vm178, %v190, 0.0
  %195 = vadd.xlane.f32.xlu0 %v194
  %v196 = vpop.xlane.xlu0 %195
  %v197 = vrcp.pop %v193
  %v198 = vrcp.pop %v196
  %v199 = vmul.f32 %v188, %v197
  %v200 = vmul.f32 %v190, %v198
  %201 = vrot.lane.b32.xlu0 %v111, 120
  %v202 = vpop.permute.xlu0 %201
  %203 = vrot.lane.b32.xlu0 %v114, 120
  %v204 = vpop.permute.xlu0 %203
  %205 = vrot.lane.b32.xlu0 %v111, 88
  %v206 = vpop.permute.xlu0 %205
  %207 = vrot.lane.b32.xlu0 %v114, 88
  %v208 = vpop.permute.xlu0 %207
  %v209 = vsel %vm146, %v202, 0
  %v211 = vsel %vm146, %v204, 0
  %v213 = vsel %vm146, %v206, 0
  %v215 = vsel %vm146, %v208, 0
  %217 = vmatpush.xpose.msra.mxu0 0.0
  %218 = vmatpush.xpose.msra.mxu0 0.0
  %219 = vmatpush.xpose.msra.mxu0 0.0
  %220 = vmatpush.xpose.msra.mxu0 0.0
  %221 = vmatpush.xpose.msra.mxu0 0.0
  %222 = vmatpush.xpose.msra.mxu0 0.0
  %223 = vmatpush.xpose.msra.mxu0 0.0
  %224 = vmatpush.xpose.msra.mxu0 0.0
  %225 = vmatpush.xpose.msra.mxu0 0.0
  %226 = vmatpush.xpose.msra.mxu0 0.0
  %227 = vmatpush.xpose.msra.mxu0 0.0
  %228 = vmatpush.xpose.msra.mxu0 0.0
  %229 = vmatpush.xpose.msra.mxu0 0.0
  %230 = vmatpush.xpose.msra.mxu0 0.0
  %231 = vmatpush.xpose.msra.mxu0 %v215
  %232 = vmatpush.xpose.msra.mxu0 %v213
  %233 = vmatmul.f32.gmra.mxu0 %v209
  %v234 = vpop.f32.mrf.mxu0
  %v235 = vadd.f32 %v74, %v234
  %236 = vmatmul.f32.gmra.mxu0 %v211
  %v237 = vpop.f32.mrf.mxu0
  %v238 = vadd.f32 %v75, %v237
  %239 = vdwg.mxu0
  %v240 = vsel %vm178, %v235, -inf
  %241 = vmax.xlane.f32.xlu0 %v240
  %v242 = vpop.xlane.xlu0 %241
  %v243 = vsel %vm178, %v238, -inf
  %244 = vmax.xlane.f32.xlu0 %v243
  %v245 = vpop.xlane.xlu0 %244
  %v246 = vsub.f32 %v235, %v242
  %v247 = vsub.f32 %v238, %v245
  %v248 = vmul.f32 %v246, 1.442695
  %v249 = vpow.pop %v248
  %v250 = vmul.f32 %v247, 1.442695
  %v251 = vpow.pop %v250
  %v252 = vsel %vm178, %v249, 0.0
  %253 = vadd.xlane.f32.xlu0 %v252
  %v254 = vpop.xlane.xlu0 %253
  %v255 = vsel %vm178, %v251, 0.0
  %256 = vadd.xlane.f32.xlu0 %v255
  %v257 = vpop.xlane.xlu0 %256
  %v258 = vrcp.pop %v254
  %v259 = vrcp.pop %v257
  %v260 = vmul.f32 %v249, %v258
  %v261 = vmul.f32 %v251, %v259
  %262 = vrot.lane.b32.xlu0 %v111, 32
  %v263 = vpop.permute.xlu0 %262
  %264 = vrot.lane.b32.xlu0 %v114, 32
  %v265 = vpop.permute.xlu0 %264
  %v269 = vsel %vm178, %v260, 0
  %v272 = vsel %vm178, %v261, 0
  %274 = vmatpush.msra.mxu0 0.0
  %275 = vmatpush.msra.mxu0 0.0
  %276 = vmatpush.msra.mxu0 0.0
  %277 = vmatpush.msra.mxu0 0.0
  %278 = vmatpush.msra.mxu0 0.0
  %279 = vmatpush.msra.mxu0 0.0
  %280 = vmatpush.msra.mxu0 0.0
  %281 = vmatpush.msra.mxu0 0.0
  %282 = vmatpush.msra.mxu0 0.0
  %283 = vmatpush.msra.mxu0 0.0
  %284 = vmatpush.msra.mxu0 0.0
  %285 = vmatpush.msra.mxu0 0.0
  %286 = vmatpush.msra.mxu0 0.0
  %287 = vmatpush.msra.mxu0 0.0
  %288 = vmatpush.msra.mxu0 %v265
  %289 = vmatpush.msra.mxu0 %v263
  %290 = vmatmul.f32.gmra.mxu0 %v269
  %v291 = vpop.f32.mrf.mxu0
  %v292 = vadd.f32 0.0, %v291
  %293 = vmatmul.f32.gmra.mxu0 %v272
  %v294 = vpop.f32.mrf.mxu0
  %v295 = vadd.f32 0.0, %v294
  %296 = vdwg.mxu0
  %297 = vrot.lane.b32.xlu0 %v111, 64
  %v298 = vpop.permute.xlu0 %297
  %299 = vrot.lane.b32.xlu0 %v114, 64
  %v300 = vpop.permute.xlu0 %299
  %v304 = vsel %vm178, %v199, 0
  %v307 = vsel %vm178, %v200, 0
  %309 = vmatpush.msra.mxu0 0.0
  %310 = vmatpush.msra.mxu0 0.0
  %311 = vmatpush.msra.mxu0 0.0
  %312 = vmatpush.msra.mxu0 0.0
  %313 = vmatpush.msra.mxu0 0.0
  %314 = vmatpush.msra.mxu0 0.0
  %315 = vmatpush.msra.mxu0 0.0
  %316 = vmatpush.msra.mxu0 0.0
  %317 = vmatpush.msra.mxu0 0.0
  %318 = vmatpush.msra.mxu0 0.0
  %319 = vmatpush.msra.mxu0 0.0
  %320 = vmatpush.msra.mxu0 0.0
  %321 = vmatpush.msra.mxu0 0.0
  %322 = vmatpush.msra.mxu0 0.0
  %323 = vmatpush.msra.mxu0 %v300
  %324 = vmatpush.msra.mxu0 %v298
  %325 = vmatmul.f32.gmra.mxu0 %v304
  %v326 = vpop.f32.mrf.mxu0
  %v327 = vadd.f32 %v292, %v326
  %328 = vmatmul.f32.gmra.mxu0 %v307
  %v329 = vpop.f32.mrf.mxu0
  %v330 = vadd.f32 %v295, %v329
  %331 = vdwg.mxu0
  %332 = vrot.lane.b32.xlu0 %v111, 112
  %v333 = vpop.permute.xlu0 %332
  %334 = vrot.lane.b32.xlu0 %v114, 112
  %v335 = vpop.permute.xlu0 %334
  %336 = vrot.lane.b32.xlu0 %v111, 80
  %v337 = vpop.permute.xlu0 %336
  %338 = vrot.lane.b32.xlu0 %v114, 80
  %v339 = vpop.permute.xlu0 %338
  %v340 = vsel %vm146, %v333, 0
  %v342 = vsel %vm146, %v335, 0
  %v344 = vsel %vm146, %v337, 0
  %v346 = vsel %vm146, %v339, 0
  %348 = vmatpush.xpose.msra.mxu0 0.0
  %349 = vmatpush.xpose.msra.mxu0 0.0
  %350 = vmatpush.xpose.msra.mxu0 0.0
  %351 = vmatpush.xpose.msra.mxu0 0.0
  %352 = vmatpush.xpose.msra.mxu0 0.0
  %353 = vmatpush.xpose.msra.mxu0 0.0
  %354 = vmatpush.xpose.msra.mxu0 0.0
  %355 = vmatpush.xpose.msra.mxu0 0.0
  %356 = vmatpush.xpose.msra.mxu0 0.0
  %357 = vmatpush.xpose.msra.mxu0 0.0
  %358 = vmatpush.xpose.msra.mxu0 0.0
  %359 = vmatpush.xpose.msra.mxu0 0.0
  %360 = vmatpush.xpose.msra.mxu0 0.0
  %361 = vmatpush.xpose.msra.mxu0 0.0
  %362 = vmatpush.xpose.msra.mxu0 %v346
  %363 = vmatpush.xpose.msra.mxu0 %v344
  %364 = vmatmul.f32.gmra.mxu0 %v340
  %v365 = vpop.f32.mrf.mxu0
  %v366 = vadd.f32 %v74, %v365
  %367 = vmatmul.f32.gmra.mxu0 %v342
  %v368 = vpop.f32.mrf.mxu0
  %v369 = vadd.f32 %v75, %v368
  %370 = vdwg.mxu0
  %v371 = vsel %vm178, %v366, -inf
  %372 = vmax.xlane.f32.xlu0 %v371
  %v373 = vpop.xlane.xlu0 %372
  %v374 = vsel %vm178, %v369, -inf
  %375 = vmax.xlane.f32.xlu0 %v374
  %v376 = vpop.xlane.xlu0 %375
  %v377 = vsub.f32 %v366, %v373
  %v378 = vsub.f32 %v369, %v376
  %v379 = vmul.f32 %v377, 1.442695
  %v380 = vpow.pop %v379
  %v381 = vmul.f32 %v378, 1.442695
  %v382 = vpow.pop %v381
  %v383 = vsel %vm178, %v380, 0.0
  %384 = vadd.xlane.f32.xlu0 %v383
  %v385 = vpop.xlane.xlu0 %384
  %v386 = vsel %vm178, %v382, 0.0
  %387 = vadd.xlane.f32.xlu0 %v386
  %v388 = vpop.xlane.xlu0 %387
  %v389 = vrcp.pop %v385
  %v390 = vrcp.pop %v388
  %v391 = vmul.f32 %v380, %v389
  %v392 = vmul.f32 %v382, %v390
  %v394 = vsel %vm178, %v391, 0
  %v397 = vsel %vm178, %v392, 0
  %399 = vmatpush.msra.mxu0 0.0
  %400 = vmatpush.msra.mxu0 0.0
  %401 = vmatpush.msra.mxu0 0.0
  %402 = vmatpush.msra.mxu0 0.0
  %403 = vmatpush.msra.mxu0 0.0
  %404 = vmatpush.msra.mxu0 0.0
  %405 = vmatpush.msra.mxu0 0.0
  %406 = vmatpush.msra.mxu0 0.0
  %407 = vmatpush.msra.mxu0 0.0
  %408 = vmatpush.msra.mxu0 0.0
  %409 = vmatpush.msra.mxu0 0.0
  %410 = vmatpush.msra.mxu0 0.0
  %411 = vmatpush.msra.mxu0 0.0
  %412 = vmatpush.msra.mxu0 0.0
  %413 = vmatpush.msra.mxu0 %v137
  %414 = vmatpush.msra.mxu0 %v134
  %415 = vmatmul.f32.gmra.mxu0 %v394
  %v416 = vpop.f32.mrf.mxu0
  %v417 = vadd.f32 0.0, %v416
  %418 = vmatmul.f32.gmra.mxu0 %v397
  %v419 = vpop.f32.mrf.mxu0
  %v420 = vadd.f32 0.0, %v419
  %421 = vdwg.mxu0
  %v422 = vadd.f32 %v327, %v417
  %v423 = vadd.f32 %v330, %v420
  %424 = vrot.lane.b32.xlu0 %v111, 104
  %v425 = vpop.permute.xlu0 %424
  %426 = vrot.lane.b32.xlu0 %v114, 104
  %v427 = vpop.permute.xlu0 %426
  %428 = vrot.lane.b32.xlu0 %v111, 72
  %v429 = vpop.permute.xlu0 %428
  %430 = vrot.lane.b32.xlu0 %v114, 72
  %v431 = vpop.permute.xlu0 %430
  %v432 = vsel %vm146, %v425, 0
  %v434 = vsel %vm146, %v427, 0
  %v436 = vsel %vm146, %v429, 0
  %v438 = vsel %vm146, %v431, 0
  %440 = vmatpush.xpose.msra.mxu0 0.0
  %441 = vmatpush.xpose.msra.mxu0 0.0
  %442 = vmatpush.xpose.msra.mxu0 0.0
  %443 = vmatpush.xpose.msra.mxu0 0.0
  %444 = vmatpush.xpose.msra.mxu0 0.0
  %445 = vmatpush.xpose.msra.mxu0 0.0
  %446 = vmatpush.xpose.msra.mxu0 0.0
  %447 = vmatpush.xpose.msra.mxu0 0.0
  %448 = vmatpush.xpose.msra.mxu0 0.0
  %449 = vmatpush.xpose.msra.mxu0 0.0
  %450 = vmatpush.xpose.msra.mxu0 0.0
  %451 = vmatpush.xpose.msra.mxu0 0.0
  %452 = vmatpush.xpose.msra.mxu0 0.0
  %453 = vmatpush.xpose.msra.mxu0 0.0
  %454 = vmatpush.xpose.msra.mxu0 %v438
  %455 = vmatpush.xpose.msra.mxu0 %v436
  %456 = vmatmul.f32.gmra.mxu0 %v432
  %v457 = vpop.f32.mrf.mxu0
  %v458 = vadd.f32 %v74, %v457
  %459 = vmatmul.f32.gmra.mxu0 %v434
  %v460 = vpop.f32.mrf.mxu0
  %v461 = vadd.f32 %v75, %v460
  %462 = vdwg.mxu0
  %v463 = vsel %vm178, %v458, -inf
  %464 = vmax.xlane.f32.xlu0 %v463
  %v465 = vpop.xlane.xlu0 %464
  %v466 = vsel %vm178, %v461, -inf
  %467 = vmax.xlane.f32.xlu0 %v466
  %v468 = vpop.xlane.xlu0 %467
  %v469 = vsub.f32 %v458, %v465
  %v470 = vsub.f32 %v461, %v468
  %v471 = vmul.f32 %v469, 1.442695
  %v472 = vpow.pop %v471
  %v473 = vmul.f32 %v470, 1.442695
  %v474 = vpow.pop %v473
  %v475 = vsel %vm178, %v472, 0.0
  %476 = vadd.xlane.f32.xlu0 %v475
  %v477 = vpop.xlane.xlu0 %476
  %v478 = vsel %vm178, %v474, 0.0
  %479 = vadd.xlane.f32.xlu0 %v478
  %v480 = vpop.xlane.xlu0 %479
  %v481 = vrcp.pop %v477
  %v482 = vrcp.pop %v480
  %v483 = vmul.f32 %v472, %v481
  %v484 = vmul.f32 %v474, %v482
  %487 = vrot.lane.b32.xlu0 %v134, 96
  %v488 = vpop.permute.xlu0 %487
  %489 = vrot.lane.b32.xlu0 %v137, 96
  %v490 = vpop.permute.xlu0 %489
  %v494 = vsel %vm178, %v483, 0
  %v497 = vsel %vm178, %v484, 0
  %499 = vmatpush.msra.mxu0 0.0
  %500 = vmatpush.msra.mxu0 0.0
  %501 = vmatpush.msra.mxu0 0.0
  %502 = vmatpush.msra.mxu0 0.0
  %503 = vmatpush.msra.mxu0 0.0
  %504 = vmatpush.msra.mxu0 0.0
  %505 = vmatpush.msra.mxu0 0.0
  %506 = vmatpush.msra.mxu0 0.0
  %507 = vmatpush.msra.mxu0 0.0
  %508 = vmatpush.msra.mxu0 0.0
  %509 = vmatpush.msra.mxu0 0.0
  %510 = vmatpush.msra.mxu0 0.0
  %511 = vmatpush.msra.mxu0 0.0
  %512 = vmatpush.msra.mxu0 0.0
  %513 = vmatpush.msra.mxu0 %v490
  %514 = vmatpush.msra.mxu0 %v488
  %515 = vmatmul.f32.gmra.mxu0 %v494
  %v516 = vpop.f32.mrf.mxu0
  %v517 = vadd.f32 0.0, %v516
  %518 = vmatmul.f32.gmra.mxu0 %v497
  %v519 = vpop.f32.mrf.mxu0
  %v520 = vadd.f32 0.0, %v519
  %521 = vdwg.mxu0
  %v522 = vadd.f32 %v422, %v517
  %v523 = vadd.f32 %v423, %v520
  %v525 = vperm.slane %v139, 0
  %v527 = vadd.f32 %v522, %v525
  %v528 = vadd.f32 %v523, %v525
  %v529 = vadd.f32 %v527, %v68
  %v530 = vadd.f32 %v528, %v69
  %v531 = vld [vmem:[%s6] sm:$0x1]
  %v532 = vld [vmem:[%s7] sm:$0x1]
  %v533 = vsel %vm86, %v529, 0.0
  %534 = vadd.xlane.f32.xlu0 %v533
  %v535 = vpop.xlane.xlu0 %534
  %v536 = vsel %vm86, %v530, 0.0
  %537 = vadd.xlane.f32.xlu0 %v536
  %v538 = vpop.xlane.xlu0 %537
  %v539 = vrcp.pop 32.0
  %v540 = vmul.f32 32.0, %v539
  %v541 = vsub.f32 1.0, %v540
  %v542 = vmul.f32 %v539, %v541
  %v543 = vadd.f32 %v539, %v542
  %vm544 = vweird.f32 %v539
  %v545 = vsel %vm544, %v539, %v543
  %v546 = vmul.f32 %v535, %v545
  %v547 = vmul.f32 %v538, %v545
  %v548 = vsub.f32 %v529, %v546
  %v549 = vsub.f32 %v530, %v547
  %v550 = vmul.f32 %v548, %v548
  %v551 = vmul.f32 %v549, %v549
  %v552 = vsel %vm86, %v550, 0.0
  %553 = vadd.xlane.f32.xlu0 %v552
  %v554 = vpop.xlane.xlu0 %553
  %v555 = vsel %vm86, %v551, 0.0
  %556 = vadd.xlane.f32.xlu0 %v555
  %v557 = vpop.xlane.xlu0 %556
  %v558 = vmul.f32 %v554, %v545
  %v559 = vmul.f32 %v557, %v545
  %v560 = vadd.f32 %v558, 1e-05
  %v561 = vadd.f32 %v559, 1e-05
  %v562 = vrsqrt.pop %v560
  %v563 = vmul.f32 %v562, %v560
  %v564 = vmul.f32 %v563, %v562
  %v565 = vmul.f32 0.5, %v564
  %v566 = vsub.f32 1.5, %v565
  %v567 = vmul.f32 %v562, %v566
  %vm568 = vweird.f32 %v560
  %vm569 = vweird.f32 %v562
  %vm570 = vmor %vm568, %vm569
  %v571 = vsel %vm570, %v562, %v567
  %v572 = vrsqrt.pop %v561
  %v573 = vmul.f32 %v572, %v561
  %v574 = vmul.f32 %v573, %v572
  %v575 = vmul.f32 0.5, %v574
  %v576 = vsub.f32 1.5, %v575
  %v577 = vmul.f32 %v572, %v576
  %vm578 = vweird.f32 %v561
  %vm579 = vweird.f32 %v572
  %vm580 = vmor %vm578, %vm579
  %v581 = vsel %vm580, %v572, %v577
  %v582 = vmul.f32 %v548, %v571
  %v583 = vmul.f32 %v549, %v581
  %v585 = vperm.slane %v531, 0
  %v587 = vmul.f32 %v582, %v585
  %v588 = vmul.f32 %v583, %v585
  %v590 = vperm.slane %v532, 0
  %v592 = vadd.f32 %v587, %v590
  %v593 = vadd.f32 %v588, %v590
  %v594 = vld [vmem:[%s8] sm:$0xff]
  %v595 = vld [vmem:[%s8 + $0x8] sm:$0xff]
  %v596 = vld [vmem:[%s8 + $0x10] sm:$0xff]
  %v597 = vld [vmem:[%s8 + $0x18] sm:$0xff]
  %v599 = vsel %vm86, %v592, 0
  %v602 = vsel %vm86, %v593, 0
  %604 = vmatpush.msra.mxu0 0.0
  %605 = vmatpush.msra.mxu0 0.0
  %606 = vmatpush.msra.mxu0 0.0
  %607 = vmatpush.msra.mxu0 0.0
  %608 = vmatpush.msra.mxu0 0.0
  %609 = vmatpush.msra.mxu0 0.0
  %610 = vmatpush.msra.mxu0 0.0
  %611 = vmatpush.msra.mxu0 0.0
  %612 = vmatpush.msra.mxu0 0.0
  %613 = vmatpush.msra.mxu0 0.0
  %614 = vmatpush.msra.mxu0 0.0
  %615 = vmatpush.msra.mxu0 0.0
  %616 = vmatpush.msra.mxu0 %v597
  %617 = vmatpush.msra.mxu0 %v596
  %618 = vmatpush.msra.mxu0 %v595
  %619 = vmatpush.msra.mxu0 %v594
  %620 = vmatmul.f32.gmra.mxu0 %v599
  %v621 = vpop.f32.mrf.mxu0
  %v622 = vadd.f32 0.0, %v621
  %623 = vmatmul.f32.gmra.mxu0 %v602
  %v624 = vpop.f32.mrf.mxu0
  %v625 = vadd.f32 0.0, %v624
  %626 = vdwg.mxu0
  %v627 = vld [vmem:[%s9] sm:$0xff]
  %v628 = vld [vmem:[%s9 + $0x8] sm:$0xff]
  %v629 = vld [vmem:[%s9 + $0x10] sm:$0xff]
  %v630 = vld [vmem:[%s9 + $0x18] sm:$0xff]
  %v631 = vld [vmem:[%s9 + $0x20] sm:$0xff]
  %v632 = vld [vmem:[%s9 + $0x28] sm:$0xff]
  %v633 = vld [vmem:[%s9 + $0x30] sm:$0xff]
  %v634 = vld [vmem:[%s9 + $0x38] sm:$0xff]
  %v636 = vsel %vm86, %v70, 0
  %v639 = vsel %vm86, %v71, 0
  %v642 = vsel %vm86, %v72, 0
  %v645 = vsel %vm86, %v73, 0
  %647 = vmatpush.msra.mxu0 0.0
  %648 = vmatpush.msra.mxu0 0.0
  %649 = vmatpush.msra.mxu0 0.0
  %650 = vmatpush.msra.mxu0 0.0
  %651 = vmatpush.msra.mxu0 0.0
  %652 = vmatpush.msra.mxu0 0.0
  %653 = vmatpush.msra.mxu0 0.0
  %654 = vmatpush.msra.mxu0 0.0
  %655 = vmatpush.msra.mxu0 0.0
  %656 = vmatpush.msra.mxu0 0.0
  %657 = vmatpush.msra.mxu0 0.0
  %658 = vmatpush.msra.mxu0 0.0
  %659 = vmatpush.msra.mxu0 %v633
  %660 = vmatpush.msra.mxu0 %v631
  %661 = vmatpush.msra.mxu0 %v629
  %662 = vmatpush.msra.mxu0 %v627
  %663 = vmatmul.f32.gmra.mxu0 %v636
  %v664 = vpop.f32.mrf.mxu0
  %v665 = vadd.f32 0.0, %v664
  %666 = vmatmul.f32.gmra.mxu0 %v639
  %v667 = vpop.f32.mrf.mxu0
  %v668 = vadd.f32 0.0, %v667
  %669 = vmatmul.f32.gmra.mxu0 %v642
  %v670 = vpop.f32.mrf.mxu0
  %v671 = vadd.f32 0.0, %v670
  %672 = vmatmul.f32.gmra.mxu0 %v645
  %v673 = vpop.f32.mrf.mxu0
  %v674 = vadd.f32 0.0, %v673
  %675 = vdwg.mxu0
  %676 = vmatpush.msra.mxu0 0.0
  %677 = vmatpush.msra.mxu0 0.0
  %678 = vmatpush.msra.mxu0 0.0
  %679 = vmatpush.msra.mxu0 0.0
  %680 = vmatpush.msra.mxu0 0.0
  %681 = vmatpush.msra.mxu0 0.0
  %682 = vmatpush.msra.mxu0 0.0
  %683 = vmatpush.msra.mxu0 0.0
  %684 = vmatpush.msra.mxu0 0.0
  %685 = vmatpush.msra.mxu0 0.0
  %686 = vmatpush.msra.mxu0 0.0
  %687 = vmatpush.msra.mxu0 0.0
  %688 = vmatpush.msra.mxu0 %v634
  %689 = vmatpush.msra.mxu0 %v632
  %690 = vmatpush.msra.mxu0 %v630
  %691 = vmatpush.msra.mxu0 %v628
  %692 = vmatmul.f32.gmra.mxu0 %v636
  %v693 = vpop.f32.mrf.mxu0
  %v694 = vadd.f32 0.0, %v693
  %695 = vmatmul.f32.gmra.mxu0 %v639
  %v696 = vpop.f32.mrf.mxu0
  %v697 = vadd.f32 0.0, %v696
  %698 = vmatmul.f32.gmra.mxu0 %v642
  %v699 = vpop.f32.mrf.mxu0
  %v700 = vadd.f32 0.0, %v699
  %701 = vmatmul.f32.gmra.mxu0 %v645
  %v702 = vpop.f32.mrf.mxu0
  %v703 = vadd.f32 0.0, %v702
  %704 = vdwg.mxu0
  %v705 = vld [vmem:[%s10] sm:$0x1]
  %v707 = vsel %vm146, %v622, 0
  %v710 = vsel %vm146, %v625, 0
  %v713 = vsel %vm146, %v665, 0
  %v716 = vsel %vm146, %v668, 0
  %v719 = vsel %vm146, %v671, 0
  %v722 = vsel %vm146, %v674, 0
  %724 = vmatpush.xpose.msra.mxu0 0.0
  %725 = vmatpush.xpose.msra.mxu0 0.0
  %726 = vmatpush.xpose.msra.mxu0 0.0
  %727 = vmatpush.xpose.msra.mxu0 0.0
  %728 = vmatpush.xpose.msra.mxu0 0.0
  %729 = vmatpush.xpose.msra.mxu0 0.0
  %730 = vmatpush.xpose.msra.mxu0 0.0
  %731 = vmatpush.xpose.msra.mxu0 0.0
  %732 = vmatpush.xpose.msra.mxu0 0.0
  %733 = vmatpush.xpose.msra.mxu0 0.0
  %734 = vmatpush.xpose.msra.mxu0 0.0
  %735 = vmatpush.xpose.msra.mxu0 0.0
  %736 = vmatpush.xpose.msra.mxu0 %v722
  %737 = vmatpush.xpose.msra.mxu0 %v719
  %738 = vmatpush.xpose.msra.mxu0 %v716
  %739 = vmatpush.xpose.msra.mxu0 %v713
  %740 = vmatmul.f32.gmra.mxu0 %v707
  %v741 = vpop.f32.mrf.mxu0
  %v742 = vadd.f32 %v76, %v741
  %743 = vmatmul.f32.gmra.mxu0 %v710
  %v744 = vpop.f32.mrf.mxu0
  %v745 = vadd.f32 %v77, %v744
  %746 = vdwg.mxu0
  %v747 = vsel %vm86, %v742, -inf
  %748 = vmax.xlane.f32.xlu0 %v747
  %v749 = vpop.xlane.xlu0 %748
  %v750 = vsel %vm86, %v745, -inf
  %751 = vmax.xlane.f32.xlu0 %v750
  %v752 = vpop.xlane.xlu0 %751
  %v753 = vsub.f32 %v742, %v749
  %v754 = vsub.f32 %v745, %v752
  %v755 = vmul.f32 %v753, 1.442695
  %v756 = vpow.pop %v755
  %v757 = vmul.f32 %v754, 1.442695
  %v758 = vpow.pop %v757
  %v759 = vsel %vm86, %v756, 0.0
  %760 = vadd.xlane.f32.xlu0 %v759
  %v761 = vpop.xlane.xlu0 %760
  %v762 = vsel %vm86, %v758, 0.0
  %763 = vadd.xlane.f32.xlu0 %v762
  %v764 = vpop.xlane.xlu0 %763
  %v765 = vrcp.pop %v761
  %v766 = vrcp.pop %v764
  %v767 = vmul.f32 %v756, %v765
  %v768 = vmul.f32 %v758, %v766
  %769 = vrot.lane.b32.xlu0 %v622, 120
  %v770 = vpop.permute.xlu0 %769
  %771 = vrot.lane.b32.xlu0 %v625, 120
  %v772 = vpop.permute.xlu0 %771
  %773 = vrot.lane.b32.xlu0 %v665, 120
  %v774 = vpop.permute.xlu0 %773
  %775 = vrot.lane.b32.xlu0 %v668, 120
  %v776 = vpop.permute.xlu0 %775
  %777 = vrot.lane.b32.xlu0 %v671, 120
  %v778 = vpop.permute.xlu0 %777
  %779 = vrot.lane.b32.xlu0 %v674, 120
  %v780 = vpop.permute.xlu0 %779
  %v781 = vsel %vm146, %v770, 0
  %v783 = vsel %vm146, %v772, 0
  %v785 = vsel %vm146, %v774, 0
  %v787 = vsel %vm146, %v776, 0
  %v789 = vsel %vm146, %v778, 0
  %v791 = vsel %vm146, %v780, 0
  %793 = vmatpush.xpose.msra.mxu0 0.0
  %794 = vmatpush.xpose.msra.mxu0 0.0
  %795 = vmatpush.xpose.msra.mxu0 0.0
  %796 = vmatpush.xpose.msra.mxu0 0.0
  %797 = vmatpush.xpose.msra.mxu0 0.0
  %798 = vmatpush.xpose.msra.mxu0 0.0
  %799 = vmatpush.xpose.msra.mxu0 0.0
  %800 = vmatpush.xpose.msra.mxu0 0.0
  %801 = vmatpush.xpose.msra.mxu0 0.0
  %802 = vmatpush.xpose.msra.mxu0 0.0
  %803 = vmatpush.xpose.msra.mxu0 0.0
  %804 = vmatpush.xpose.msra.mxu0 0.0
  %805 = vmatpush.xpose.msra.mxu0 %v791
  %806 = vmatpush.xpose.msra.mxu0 %v789
  %807 = vmatpush.xpose.msra.mxu0 %v787
  %808 = vmatpush.xpose.msra.mxu0 %v785
  %809 = vmatmul.f32.gmra.mxu0 %v781
  %v810 = vpop.f32.mrf.mxu0
  %v811 = vadd.f32 %v76, %v810
  %812 = vmatmul.f32.gmra.mxu0 %v783
  %v813 = vpop.f32.mrf.mxu0
  %v814 = vadd.f32 %v77, %v813
  %815 = vdwg.mxu0
  %v816 = vsel %vm86, %v811, -inf
  %817 = vmax.xlane.f32.xlu0 %v816
  %v818 = vpop.xlane.xlu0 %817
  %v819 = vsel %vm86, %v814, -inf
  %820 = vmax.xlane.f32.xlu0 %v819
  %v821 = vpop.xlane.xlu0 %820
  %v822 = vsub.f32 %v811, %v818
  %v823 = vsub.f32 %v814, %v821
  %v824 = vmul.f32 %v822, 1.442695
  %v825 = vpow.pop %v824
  %v826 = vmul.f32 %v823, 1.442695
  %v827 = vpow.pop %v826
  %v828 = vsel %vm86, %v825, 0.0
  %829 = vadd.xlane.f32.xlu0 %v828
  %v830 = vpop.xlane.xlu0 %829
  %v831 = vsel %vm86, %v827, 0.0
  %832 = vadd.xlane.f32.xlu0 %v831
  %v833 = vpop.xlane.xlu0 %832
  %v834 = vrcp.pop %v830
  %v835 = vrcp.pop %v833
  %v836 = vmul.f32 %v825, %v834
  %v837 = vmul.f32 %v827, %v835
  %838 = vrot.lane.b32.xlu0 %v665, 64
  %v839 = vpop.permute.xlu0 %838
  %840 = vrot.lane.b32.xlu0 %v668, 64
  %v841 = vpop.permute.xlu0 %840
  %842 = vrot.lane.b32.xlu0 %v671, 64
  %v843 = vpop.permute.xlu0 %842
  %844 = vrot.lane.b32.xlu0 %v674, 64
  %v845 = vpop.permute.xlu0 %844
  %v851 = vsel %vm86, %v836, 0
  %v854 = vsel %vm86, %v837, 0
  %856 = vmatpush.msra.mxu0 0.0
  %857 = vmatpush.msra.mxu0 0.0
  %858 = vmatpush.msra.mxu0 0.0
  %859 = vmatpush.msra.mxu0 0.0
  %860 = vmatpush.msra.mxu0 0.0
  %861 = vmatpush.msra.mxu0 0.0
  %862 = vmatpush.msra.mxu0 0.0
  %863 = vmatpush.msra.mxu0 0.0
  %864 = vmatpush.msra.mxu0 0.0
  %865 = vmatpush.msra.mxu0 0.0
  %866 = vmatpush.msra.mxu0 0.0
  %867 = vmatpush.msra.mxu0 0.0
  %868 = vmatpush.msra.mxu0 %v845
  %869 = vmatpush.msra.mxu0 %v843
  %870 = vmatpush.msra.mxu0 %v841
  %871 = vmatpush.msra.mxu0 %v839
  %872 = vmatmul.f32.gmra.mxu0 %v851
  %v873 = vpop.f32.mrf.mxu0
  %v874 = vadd.f32 0.0, %v873
  %875 = vmatmul.f32.gmra.mxu0 %v854
  %v876 = vpop.f32.mrf.mxu0
  %v877 = vadd.f32 0.0, %v876
  %878 = vdwg.mxu0
  %879 = vrot.lane.b32.xlu0 %v665, 96
  %v880 = vpop.permute.xlu0 %879
  %881 = vrot.lane.b32.xlu0 %v668, 96
  %v882 = vpop.permute.xlu0 %881
  %883 = vrot.lane.b32.xlu0 %v671, 96
  %v884 = vpop.permute.xlu0 %883
  %885 = vrot.lane.b32.xlu0 %v674, 96
  %v886 = vpop.permute.xlu0 %885
  %v892 = vsel %vm86, %v767, 0
  %v895 = vsel %vm86, %v768, 0
  %897 = vmatpush.msra.mxu0 0.0
  %898 = vmatpush.msra.mxu0 0.0
  %899 = vmatpush.msra.mxu0 0.0
  %900 = vmatpush.msra.mxu0 0.0
  %901 = vmatpush.msra.mxu0 0.0
  %902 = vmatpush.msra.mxu0 0.0
  %903 = vmatpush.msra.mxu0 0.0
  %904 = vmatpush.msra.mxu0 0.0
  %905 = vmatpush.msra.mxu0 0.0
  %906 = vmatpush.msra.mxu0 0.0
  %907 = vmatpush.msra.mxu0 0.0
  %908 = vmatpush.msra.mxu0 0.0
  %909 = vmatpush.msra.mxu0 %v886
  %910 = vmatpush.msra.mxu0 %v884
  %911 = vmatpush.msra.mxu0 %v882
  %912 = vmatpush.msra.mxu0 %v880
  %913 = vmatmul.f32.gmra.mxu0 %v892
  %v914 = vpop.f32.mrf.mxu0
  %v915 = vadd.f32 %v874, %v914
  %916 = vmatmul.f32.gmra.mxu0 %v895
  %v917 = vpop.f32.mrf.mxu0
  %v918 = vadd.f32 %v877, %v917
  %919 = vdwg.mxu0
  %920 = vrot.lane.b32.xlu0 %v622, 112
  %v921 = vpop.permute.xlu0 %920
  %922 = vrot.lane.b32.xlu0 %v625, 112
  %v923 = vpop.permute.xlu0 %922
  %924 = vrot.lane.b32.xlu0 %v665, 112
  %v925 = vpop.permute.xlu0 %924
  %926 = vrot.lane.b32.xlu0 %v668, 112
  %v927 = vpop.permute.xlu0 %926
  %928 = vrot.lane.b32.xlu0 %v671, 112
  %v929 = vpop.permute.xlu0 %928
  %930 = vrot.lane.b32.xlu0 %v674, 112
  %v931 = vpop.permute.xlu0 %930
  %v932 = vsel %vm146, %v921, 0
  %v934 = vsel %vm146, %v923, 0
  %v936 = vsel %vm146, %v925, 0
  %v938 = vsel %vm146, %v927, 0
  %v940 = vsel %vm146, %v929, 0
  %v942 = vsel %vm146, %v931, 0
  %944 = vmatpush.xpose.msra.mxu0 0.0
  %945 = vmatpush.xpose.msra.mxu0 0.0
  %946 = vmatpush.xpose.msra.mxu0 0.0
  %947 = vmatpush.xpose.msra.mxu0 0.0
  %948 = vmatpush.xpose.msra.mxu0 0.0
  %949 = vmatpush.xpose.msra.mxu0 0.0
  %950 = vmatpush.xpose.msra.mxu0 0.0
  %951 = vmatpush.xpose.msra.mxu0 0.0
  %952 = vmatpush.xpose.msra.mxu0 0.0
  %953 = vmatpush.xpose.msra.mxu0 0.0
  %954 = vmatpush.xpose.msra.mxu0 0.0
  %955 = vmatpush.xpose.msra.mxu0 0.0
  %956 = vmatpush.xpose.msra.mxu0 %v942
  %957 = vmatpush.xpose.msra.mxu0 %v940
  %958 = vmatpush.xpose.msra.mxu0 %v938
  %959 = vmatpush.xpose.msra.mxu0 %v936
  %960 = vmatmul.f32.gmra.mxu0 %v932
  %v961 = vpop.f32.mrf.mxu0
  %v962 = vadd.f32 %v76, %v961
  %963 = vmatmul.f32.gmra.mxu0 %v934
  %v964 = vpop.f32.mrf.mxu0
  %v965 = vadd.f32 %v77, %v964
  %966 = vdwg.mxu0
  %v967 = vsel %vm86, %v962, -inf
  %968 = vmax.xlane.f32.xlu0 %v967
  %v969 = vpop.xlane.xlu0 %968
  %v970 = vsel %vm86, %v965, -inf
  %971 = vmax.xlane.f32.xlu0 %v970
  %v972 = vpop.xlane.xlu0 %971
  %v973 = vsub.f32 %v962, %v969
  %v974 = vsub.f32 %v965, %v972
  %v975 = vmul.f32 %v973, 1.442695
  %v976 = vpow.pop %v975
  %v977 = vmul.f32 %v974, 1.442695
  %v978 = vpow.pop %v977
  %v979 = vsel %vm86, %v976, 0.0
  %980 = vadd.xlane.f32.xlu0 %v979
  %v981 = vpop.xlane.xlu0 %980
  %v982 = vsel %vm86, %v978, 0.0
  %983 = vadd.xlane.f32.xlu0 %v982
  %v984 = vpop.xlane.xlu0 %983
  %v985 = vrcp.pop %v981
  %v986 = vrcp.pop %v984
  %v987 = vmul.f32 %v976, %v985
  %v988 = vmul.f32 %v978, %v986
  %989 = vrot.lane.b32.xlu0 %v665, 32
  %v990 = vpop.permute.xlu0 %989
  %991 = vrot.lane.b32.xlu0 %v668, 32
  %v992 = vpop.permute.xlu0 %991
  %993 = vrot.lane.b32.xlu0 %v671, 32
  %v994 = vpop.permute.xlu0 %993
  %995 = vrot.lane.b32.xlu0 %v674, 32
  %v996 = vpop.permute.xlu0 %995
  %v1002 = vsel %vm86, %v987, 0
  %v1005 = vsel %vm86, %v988, 0
  %1007 = vmatpush.msra.mxu0 0.0
  %1008 = vmatpush.msra.mxu0 0.0
  %1009 = vmatpush.msra.mxu0 0.0
  %1010 = vmatpush.msra.mxu0 0.0
  %1011 = vmatpush.msra.mxu0 0.0
  %1012 = vmatpush.msra.mxu0 0.0
  %1013 = vmatpush.msra.mxu0 0.0
  %1014 = vmatpush.msra.mxu0 0.0
  %1015 = vmatpush.msra.mxu0 0.0
  %1016 = vmatpush.msra.mxu0 0.0
  %1017 = vmatpush.msra.mxu0 0.0
  %1018 = vmatpush.msra.mxu0 0.0
  %1019 = vmatpush.msra.mxu0 %v996
  %1020 = vmatpush.msra.mxu0 %v994
  %1021 = vmatpush.msra.mxu0 %v992
  %1022 = vmatpush.msra.mxu0 %v990
  %1023 = vmatmul.f32.gmra.mxu0 %v1002
  %v1024 = vpop.f32.mrf.mxu0
  %v1025 = vadd.f32 0.0, %v1024
  %1026 = vmatmul.f32.gmra.mxu0 %v1005
  %v1027 = vpop.f32.mrf.mxu0
  %v1028 = vadd.f32 0.0, %v1027
  %1029 = vdwg.mxu0
  %v1030 = vadd.f32 %v915, %v1025
  %v1031 = vadd.f32 %v918, %v1028
  %1032 = vrot.lane.b32.xlu0 %v622, 104
  %v1033 = vpop.permute.xlu0 %1032
  %1034 = vrot.lane.b32.xlu0 %v625, 104
  %v1035 = vpop.permute.xlu0 %1034
  %1036 = vrot.lane.b32.xlu0 %v665, 104
  %v1037 = vpop.permute.xlu0 %1036
  %1038 = vrot.lane.b32.xlu0 %v668, 104
  %v1039 = vpop.permute.xlu0 %1038
  %1040 = vrot.lane.b32.xlu0 %v671, 104
  %v1041 = vpop.permute.xlu0 %1040
  %1042 = vrot.lane.b32.xlu0 %v674, 104
  %v1043 = vpop.permute.xlu0 %1042
  %v1044 = vsel %vm146, %v1033, 0
  %v1046 = vsel %vm146, %v1035, 0
  %v1048 = vsel %vm146, %v1037, 0
  %v1050 = vsel %vm146, %v1039, 0
  %v1052 = vsel %vm146, %v1041, 0
  %v1054 = vsel %vm146, %v1043, 0
  %1056 = vmatpush.xpose.msra.mxu0 0.0
  %1057 = vmatpush.xpose.msra.mxu0 0.0
  %1058 = vmatpush.xpose.msra.mxu0 0.0
  %1059 = vmatpush.xpose.msra.mxu0 0.0
  %1060 = vmatpush.xpose.msra.mxu0 0.0
  %1061 = vmatpush.xpose.msra.mxu0 0.0
  %1062 = vmatpush.xpose.msra.mxu0 0.0
  %1063 = vmatpush.xpose.msra.mxu0 0.0
  %1064 = vmatpush.xpose.msra.mxu0 0.0
  %1065 = vmatpush.xpose.msra.mxu0 0.0
  %1066 = vmatpush.xpose.msra.mxu0 0.0
  %1067 = vmatpush.xpose.msra.mxu0 0.0
  %1068 = vmatpush.xpose.msra.mxu0 %v1054
  %1069 = vmatpush.xpose.msra.mxu0 %v1052
  %1070 = vmatpush.xpose.msra.mxu0 %v1050
  %1071 = vmatpush.xpose.msra.mxu0 %v1048
  %1072 = vmatmul.f32.gmra.mxu0 %v1044
  %v1073 = vpop.f32.mrf.mxu0
  %v1074 = vadd.f32 %v76, %v1073
  %1075 = vmatmul.f32.gmra.mxu0 %v1046
  %v1076 = vpop.f32.mrf.mxu0
  %v1077 = vadd.f32 %v77, %v1076
  %1078 = vdwg.mxu0
  %v1079 = vsel %vm86, %v1074, -inf
  %1080 = vmax.xlane.f32.xlu0 %v1079
  %v1081 = vpop.xlane.xlu0 %1080
  %v1082 = vsel %vm86, %v1077, -inf
  %1083 = vmax.xlane.f32.xlu0 %v1082
  %v1084 = vpop.xlane.xlu0 %1083
  %v1085 = vsub.f32 %v1074, %v1081
  %v1086 = vsub.f32 %v1077, %v1084
  %v1087 = vmul.f32 %v1085, 1.442695
  %v1088 = vpow.pop %v1087
  %v1089 = vmul.f32 %v1086, 1.442695
  %v1090 = vpow.pop %v1089
  %v1091 = vsel %vm86, %v1088, 0.0
  %1092 = vadd.xlane.f32.xlu0 %v1091
  %v1093 = vpop.xlane.xlu0 %1092
  %v1094 = vsel %vm86, %v1090, 0.0
  %1095 = vadd.xlane.f32.xlu0 %v1094
  %v1096 = vpop.xlane.xlu0 %1095
  %v1097 = vrcp.pop %v1093
  %v1098 = vrcp.pop %v1096
  %v1099 = vmul.f32 %v1088, %v1097
  %v1100 = vmul.f32 %v1090, %v1098
  %v1102 = vsel %vm86, %v1099, 0
  %v1105 = vsel %vm86, %v1100, 0
  %1107 = vmatpush.msra.mxu0 0.0
  %1108 = vmatpush.msra.mxu0 0.0
  %1109 = vmatpush.msra.mxu0 0.0
  %1110 = vmatpush.msra.mxu0 0.0
  %1111 = vmatpush.msra.mxu0 0.0
  %1112 = vmatpush.msra.mxu0 0.0
  %1113 = vmatpush.msra.mxu0 0.0
  %1114 = vmatpush.msra.mxu0 0.0
  %1115 = vmatpush.msra.mxu0 0.0
  %1116 = vmatpush.msra.mxu0 0.0
  %1117 = vmatpush.msra.mxu0 0.0
  %1118 = vmatpush.msra.mxu0 0.0
  %1119 = vmatpush.msra.mxu0 %v703
  %1120 = vmatpush.msra.mxu0 %v700
  %1121 = vmatpush.msra.mxu0 %v697
  %1122 = vmatpush.msra.mxu0 %v694
  %1123 = vmatmul.f32.gmra.mxu0 %v1102
  %v1124 = vpop.f32.mrf.mxu0
  %v1125 = vadd.f32 0.0, %v1124
  %1126 = vmatmul.f32.gmra.mxu0 %v1105
  %v1127 = vpop.f32.mrf.mxu0
  %v1128 = vadd.f32 0.0, %v1127
  %1129 = vdwg.mxu0
  %v1130 = vadd.f32 %v1030, %v1125
  %v1131 = vadd.f32 %v1031, %v1128
  %v1133 = vperm.slane %v705, 0
  %v1135 = vadd.f32 %v1130, %v1133
  %v1136 = vadd.f32 %v1131, %v1133
  %v1137 = vadd.f32 %v1135, %v592
  %v1138 = vadd.f32 %v1136, %v593
  %v1139 = vld [vmem:[%s11] sm:$0x1]
  %v1140 = vld [vmem:[%s12] sm:$0x1]
  %v1141 = vsel %vm86, %v1137, 0.0
  %1142 = vadd.xlane.f32.xlu0 %v1141
  %v1143 = vpop.xlane.xlu0 %1142
  %v1144 = vsel %vm86, %v1138, 0.0
  %1145 = vadd.xlane.f32.xlu0 %v1144
  %v1146 = vpop.xlane.xlu0 %1145
  %v1147 = vmul.f32 %v1143, %v545
  %v1148 = vmul.f32 %v1146, %v545
  %v1149 = vsub.f32 %v1137, %v1147
  %v1150 = vsub.f32 %v1138, %v1148
  %v1151 = vmul.f32 %v1149, %v1149
  %v1152 = vmul.f32 %v1150, %v1150
  %v1153 = vsel %vm86, %v1151, 0.0
  %1154 = vadd.xlane.f32.xlu0 %v1153
  %v1155 = vpop.xlane.xlu0 %1154
  %v1156 = vsel %vm86, %v1152, 0.0
  %1157 = vadd.xlane.f32.xlu0 %v1156
  %v1158 = vpop.xlane.xlu0 %1157
  %v1159 = vmul.f32 %v1155, %v545
  %v1160 = vmul.f32 %v1158, %v545
  %v1161 = vadd.f32 %v1159, 1e-05
  %v1162 = vadd.f32 %v1160, 1e-05
  %v1163 = vrsqrt.pop %v1161
  %v1164 = vmul.f32 %v1163, %v1161
  %v1165 = vmul.f32 %v1164, %v1163
  %v1166 = vmul.f32 0.5, %v1165
  %v1167 = vsub.f32 1.5, %v1166
  %v1168 = vmul.f32 %v1163, %v1167
  %vm1169 = vweird.f32 %v1161
  %vm1170 = vweird.f32 %v1163
  %vm1171 = vmor %vm1169, %vm1170
  %v1172 = vsel %vm1171, %v1163, %v1168
  %v1173 = vrsqrt.pop %v1162
  %v1174 = vmul.f32 %v1173, %v1162
  %v1175 = vmul.f32 %v1174, %v1173
  %v1176 = vmul.f32 0.5, %v1175
  %v1177 = vsub.f32 1.5, %v1176
  %v1178 = vmul.f32 %v1173, %v1177
  %vm1179 = vweird.f32 %v1162
  %vm1180 = vweird.f32 %v1173
  %vm1181 = vmor %vm1179, %vm1180
  %v1182 = vsel %vm1181, %v1173, %v1178
  %v1183 = vmul.f32 %v1149, %v1172
  %v1184 = vmul.f32 %v1150, %v1182
  %v1186 = vperm.slane %v1139, 0
  %v1188 = vmul.f32 %v1183, %v1186
  %v1189 = vmul.f32 %v1184, %v1186
  %v1191 = vperm.slane %v1140, 0
  %v1193 = vadd.f32 %v1188, %v1191
  %v1194 = vadd.f32 %v1189, %v1191
  %v1195 = vld [vmem:[%s13] sm:$0xff]
  %v1196 = vld [vmem:[%s13 + $0x8] sm:$0xff]
  %v1197 = vld [vmem:[%s13 + $0x10] sm:$0xff]
  %v1198 = vld [vmem:[%s13 + $0x18] sm:$0xff]
  %v1199 = vld [vmem:[%s14] sm:$0x1]
  %v1201 = vperm.slane %v1199, 0
  %v1204 = vsel %vm86, %v1193, 0
  %v1207 = vsel %vm86, %v1194, 0
  %1209 = vmatpush.msra.mxu0 0.0
  %1210 = vmatpush.msra.mxu0 0.0
  %1211 = vmatpush.msra.mxu0 0.0
  %1212 = vmatpush.msra.mxu0 0.0
  %1213 = vmatpush.msra.mxu0 0.0
  %1214 = vmatpush.msra.mxu0 0.0
  %1215 = vmatpush.msra.mxu0 0.0
  %1216 = vmatpush.msra.mxu0 0.0
  %1217 = vmatpush.msra.mxu0 0.0
  %1218 = vmatpush.msra.mxu0 0.0
  %1219 = vmatpush.msra.mxu0 0.0
  %1220 = vmatpush.msra.mxu0 0.0
  %1221 = vmatpush.msra.mxu0 %v1198
  %1222 = vmatpush.msra.mxu0 %v1197
  %1223 = vmatpush.msra.mxu0 %v1196
  %1224 = vmatpush.msra.mxu0 %v1195
  %1225 = vmatmul.f32.gmra.mxu0 %v1204
  %v1226 = vpop.f32.mrf.mxu0
  %v1227 = vadd.f32 %v1201, %v1226
  %1228 = vmatmul.f32.gmra.mxu0 %v1207
  %v1229 = vpop.f32.mrf.mxu0
  %v1230 = vadd.f32 %v1201, %v1229
  %1231 = vdwg.mxu0
  %v1232 = vmax.f32 %v1227, 0.0
  %v1233 = vmax.f32 %v1230, 0.0
  %v1234 = vld [vmem:[%s15] sm:$0xff]
  %v1235 = vld [vmem:[%s15 + $0x8] sm:$0xff]
  %v1236 = vld [vmem:[%s15 + $0x10] sm:$0xff]
  %v1237 = vld [vmem:[%s15 + $0x18] sm:$0xff]
  %v1238 = vld [vmem:[%s15 + $0x20] sm:$0xff]
  %v1239 = vld [vmem:[%s15 + $0x28] sm:$0xff]
  %v1240 = vld [vmem:[%s15 + $0x30] sm:$0xff]
  %v1241 = vld [vmem:[%s15 + $0x38] sm:$0xff]
  %v1242 = vld [vmem:[%s15 + $0x40] sm:$0xff]
  %v1243 = vld [vmem:[%s15 + $0x48] sm:$0xff]
  %v1244 = vld [vmem:[%s15 + $0x50] sm:$0xff]
  %v1245 = vld [vmem:[%s15 + $0x58] sm:$0xff]
  %v1246 = vld [vmem:[%s15 + $0x60] sm:$0xff]
  %v1247 = vld [vmem:[%s15 + $0x68] sm:$0xff]
  %v1248 = vld [vmem:[%s15 + $0x70] sm:$0xff]
  %v1249 = vld [vmem:[%s15 + $0x78] sm:$0xff]
  %v1250 = vld [vmem:[%s16] sm:$0x1]
  %v1252 = vperm.slane %v1250, 0
  %1254 = vmatpush.msra.mxu0 %v1249
  %1255 = vmatpush.msra.mxu0 %v1248
  %1256 = vmatpush.msra.mxu0 %v1247
  %1257 = vmatpush.msra.mxu0 %v1246
  %1258 = vmatpush.msra.mxu0 %v1245
  %1259 = vmatpush.msra.mxu0 %v1244
  %1260 = vmatpush.msra.mxu0 %v1243
  %1261 = vmatpush.msra.mxu0 %v1242
  %1262 = vmatpush.msra.mxu0 %v1241
  %1263 = vmatpush.msra.mxu0 %v1240
  %1264 = vmatpush.msra.mxu0 %v1239
  %1265 = vmatpush.msra.mxu0 %v1238
  %1266 = vmatpush.msra.mxu0 %v1237
  %1267 = vmatpush.msra.mxu0 %v1236
  %1268 = vmatpush.msra.mxu0 %v1235
  %1269 = vmatpush.msra.mxu0 %v1234
  %1270 = vmatmul.f32.gmra.mxu0 %v1232
  %v1271 = vpop.f32.mrf.mxu0
  %v1272 = vadd.f32 %v1252, %v1271
  %1273 = vmatmul.f32.gmra.mxu0 %v1233
  %v1274 = vpop.f32.mrf.mxu0
  %v1275 = vadd.f32 %v1252, %v1274
  %1276 = vdwg.mxu0
  %v1277 = vadd.f32 %v1272, %v1193
  %v1278 = vadd.f32 %v1275, %v1194
  %v1279 = vld [vmem:[%s17] sm:$0x1]
  %v1280 = vld [vmem:[%s18] sm:$0x1]
  %v1281 = vsel %vm86, %v1277, 0.0
  %1282 = vadd.xlane.f32.xlu0 %v1281
  %v1283 = vpop.xlane.xlu0 %1282
  %v1284 = vsel %vm86, %v1278, 0.0
  %1285 = vadd.xlane.f32.xlu0 %v1284
  %v1286 = vpop.xlane.xlu0 %1285
  %v1287 = vmul.f32 %v1283, %v545
  %v1288 = vmul.f32 %v1286, %v545
  %v1289 = vsub.f32 %v1277, %v1287
  %v1290 = vsub.f32 %v1278, %v1288
  %v1291 = vmul.f32 %v1289, %v1289
  %v1292 = vmul.f32 %v1290, %v1290
  %v1293 = vsel %vm86, %v1291, 0.0
  %1294 = vadd.xlane.f32.xlu0 %v1293
  %v1295 = vpop.xlane.xlu0 %1294
  %v1296 = vsel %vm86, %v1292, 0.0
  %1297 = vadd.xlane.f32.xlu0 %v1296
  %v1298 = vpop.xlane.xlu0 %1297
  %v1299 = vmul.f32 %v1295, %v545
  %v1300 = vmul.f32 %v1298, %v545
  %v1301 = vadd.f32 %v1299, 1e-05
  %v1302 = vadd.f32 %v1300, 1e-05
  %v1303 = vrsqrt.pop %v1301
  %v1304 = vmul.f32 %v1303, %v1301
  %v1305 = vmul.f32 %v1304, %v1303
  %v1306 = vmul.f32 0.5, %v1305
  %v1307 = vsub.f32 1.5, %v1306
  %v1308 = vmul.f32 %v1303, %v1307
  %vm1309 = vweird.f32 %v1301
  %vm1310 = vweird.f32 %v1303
  %vm1311 = vmor %vm1309, %vm1310
  %v1312 = vsel %vm1311, %v1303, %v1308
  %v1313 = vrsqrt.pop %v1302
  %v1314 = vmul.f32 %v1313, %v1302
  %v1315 = vmul.f32 %v1314, %v1313
  %v1316 = vmul.f32 0.5, %v1315
  %v1317 = vsub.f32 1.5, %v1316
  %v1318 = vmul.f32 %v1313, %v1317
  %vm1319 = vweird.f32 %v1302
  %vm1320 = vweird.f32 %v1313
  %vm1321 = vmor %vm1319, %vm1320
  %v1322 = vsel %vm1321, %v1313, %v1318
  %v1323 = vmul.f32 %v1289, %v1312
  %v1324 = vmul.f32 %v1290, %v1322
  %v1326 = vperm.slane %v1279, 0
  %v1328 = vmul.f32 %v1323, %v1326
  %v1329 = vmul.f32 %v1324, %v1326
  %v1331 = vperm.slane %v1280, 0
  %v1333 = vadd.f32 %v1328, %v1331
  %v1334 = vadd.f32 %v1329, %v1331
  %s1335 = scalar_lea.vmem %s4, 64
  %v1336 = vld [vmem:[%s1335] sm:$0xff]
  %v1337 = vld [vmem:[%s1335 + $0x8] sm:$0xff]
  %v1338 = vld [vmem:[%s1335 + $0x10] sm:$0xff]
  %v1339 = vld [vmem:[%s1335 + $0x18] sm:$0xff]
  %v1340 = vld [vmem:[%s1335 + $0x20] sm:$0xff]
  %v1341 = vld [vmem:[%s1335 + $0x28] sm:$0xff]
  %v1342 = vld [vmem:[%s1335 + $0x30] sm:$0xff]
  %v1343 = vld [vmem:[%s1335 + $0x38] sm:$0xff]
  %v1345 = vsel %vm86, %v1333, 0
  %v1348 = vsel %vm86, %v1334, 0
  %1350 = vmatpush.msra.mxu0 0.0
  %1351 = vmatpush.msra.mxu0 0.0
  %1352 = vmatpush.msra.mxu0 0.0
  %1353 = vmatpush.msra.mxu0 0.0
  %1354 = vmatpush.msra.mxu0 0.0
  %1355 = vmatpush.msra.mxu0 0.0
  %1356 = vmatpush.msra.mxu0 0.0
  %1357 = vmatpush.msra.mxu0 0.0
  %1358 = vmatpush.msra.mxu0 0.0
  %1359 = vmatpush.msra.mxu0 0.0
  %1360 = vmatpush.msra.mxu0 0.0
  %1361 = vmatpush.msra.mxu0 0.0
  %1362 = vmatpush.msra.mxu0 %v1342
  %1363 = vmatpush.msra.mxu0 %v1340
  %1364 = vmatpush.msra.mxu0 %v1338
  %1365 = vmatpush.msra.mxu0 %v1336
  %1366 = vmatmul.f32.gmra.mxu0 %v1345
  %v1367 = vpop.f32.mrf.mxu0
  %v1368 = vadd.f32 0.0, %v1367
  %1369 = vmatmul.f32.gmra.mxu0 %v1348
  %v1370 = vpop.f32.mrf.mxu0
  %v1371 = vadd.f32 0.0, %v1370
  %1372 = vdwg.mxu0
  %1373 = vmatpush.msra.mxu0 0.0
  %1374 = vmatpush.msra.mxu0 0.0
  %1375 = vmatpush.msra.mxu0 0.0
  %1376 = vmatpush.msra.mxu0 0.0
  %1377 = vmatpush.msra.mxu0 0.0
  %1378 = vmatpush.msra.mxu0 0.0
  %1379 = vmatpush.msra.mxu0 0.0
  %1380 = vmatpush.msra.mxu0 0.0
  %1381 = vmatpush.msra.mxu0 0.0
  %1382 = vmatpush.msra.mxu0 0.0
  %1383 = vmatpush.msra.mxu0 0.0
  %1384 = vmatpush.msra.mxu0 0.0
  %1385 = vmatpush.msra.mxu0 %v1343
  %1386 = vmatpush.msra.mxu0 %v1341
  %1387 = vmatpush.msra.mxu0 %v1339
  %1388 = vmatpush.msra.mxu0 %v1337
  %1389 = vmatmul.f32.gmra.mxu0 %v1345
  %v1390 = vpop.f32.mrf.mxu0
  %v1391 = vadd.f32 0.0, %v1390
  %1392 = vmatmul.f32.gmra.mxu0 %v1348
  %v1393 = vpop.f32.mrf.mxu0
  %v1394 = vadd.f32 0.0, %v1393
  %1395 = vdwg.mxu0
  %s1396 = scalar_lea.vmem %s5, 1
  %v1397 = vld [vmem:[%s1396] sm:$0x1]
  %1400 = vrot.lane.b32.xlu0 %v1368, 96
  %v1401 = vpop.permute.xlu0 %1400
  %1402 = vrot.lane.b32.xlu0 %v1371, 96
  %v1403 = vpop.permute.xlu0 %1402
  %v1404 = vsel %vm146, %v1368, 0
  %v1406 = vsel %vm146, %v1371, 0
  %v1408 = vsel %vm146, %v1401, 0
  %v1410 = vsel %vm146, %v1403, 0
  %1412 = vmatpush.xpose.msra.mxu0 0.0
  %1413 = vmatpush.xpose.msra.mxu0 0.0
  %1414 = vmatpush.xpose.msra.mxu0 0.0
  %1415 = vmatpush.xpose.msra.mxu0 0.0
  %1416 = vmatpush.xpose.msra.mxu0 0.0
  %1417 = vmatpush.xpose.msra.mxu0 0.0
  %1418 = vmatpush.xpose.msra.mxu0 0.0
  %1419 = vmatpush.xpose.msra.mxu0 0.0
  %1420 = vmatpush.xpose.msra.mxu0 0.0
  %1421 = vmatpush.xpose.msra.mxu0 0.0
  %1422 = vmatpush.xpose.msra.mxu0 0.0
  %1423 = vmatpush.xpose.msra.mxu0 0.0
  %1424 = vmatpush.xpose.msra.mxu0 0.0
  %1425 = vmatpush.xpose.msra.mxu0 0.0
  %1426 = vmatpush.xpose.msra.mxu0 %v1410
  %1427 = vmatpush.xpose.msra.mxu0 %v1408
  %1428 = vmatmul.f32.gmra.mxu0 %v1404
  %v1429 = vpop.f32.mrf.mxu0
  %v1430 = vadd.f32 %v74, %v1429
  %1431 = vmatmul.f32.gmra.mxu0 %v1406
  %v1432 = vpop.f32.mrf.mxu0
  %v1433 = vadd.f32 %v75, %v1432
  %1434 = vdwg.mxu0
  %v1435 = vsel %vm178, %v1430, -inf
  %1436 = vmax.xlane.f32.xlu0 %v1435
  %v1437 = vpop.xlane.xlu0 %1436
  %v1438 = vsel %vm178, %v1433, -inf
  %1439 = vmax.xlane.f32.xlu0 %v1438
  %v1440 = vpop.xlane.xlu0 %1439
  %v1441 = vsub.f32 %v1430, %v1437
  %v1442 = vsub.f32 %v1433, %v1440
  %v1443 = vmul.f32 %v1441, 1.442695
  %v1444 = vpow.pop %v1443
  %v1445 = vmul.f32 %v1442, 1.442695
  %v1446 = vpow.pop %v1445
  %v1447 = vsel %vm178, %v1444, 0.0
  %1448 = vadd.xlane.f32.xlu0 %v1447
  %v1449 = vpop.xlane.xlu0 %1448
  %v1450 = vsel %vm178, %v1446, 0.0
  %1451 = vadd.xlane.f32.xlu0 %v1450
  %v1452 = vpop.xlane.xlu0 %1451
  %v1453 = vrcp.pop %v1449
  %v1454 = vrcp.pop %v1452
  %v1455 = vmul.f32 %v1444, %v1453
  %v1456 = vmul.f32 %v1446, %v1454
  %1457 = vrot.lane.b32.xlu0 %v1368, 120
  %v1458 = vpop.permute.xlu0 %1457
  %1459 = vrot.lane.b32.xlu0 %v1371, 120
  %v1460 = vpop.permute.xlu0 %1459
  %1461 = vrot.lane.b32.xlu0 %v1368, 88
  %v1462 = vpop.permute.xlu0 %1461
  %1463 = vrot.lane.b32.xlu0 %v1371, 88
  %v1464 = vpop.permute.xlu0 %1463
  %v1465 = vsel %vm146, %v1458, 0
  %v1467 = vsel %vm146, %v1460, 0
  %v1469 = vsel %vm146, %v1462, 0
  %v1471 = vsel %vm146, %v1464, 0
  %1473 = vmatpush.xpose.msra.mxu0 0.0
  %1474 = vmatpush.xpose.msra.mxu0 0.0
  %1475 = vmatpush.xpose.msra.mxu0 0.0
  %1476 = vmatpush.xpose.msra.mxu0 0.0
  %1477 = vmatpush.xpose.msra.mxu0 0.0
  %1478 = vmatpush.xpose.msra.mxu0 0.0
  %1479 = vmatpush.xpose.msra.mxu0 0.0
  %1480 = vmatpush.xpose.msra.mxu0 0.0
  %1481 = vmatpush.xpose.msra.mxu0 0.0
  %1482 = vmatpush.xpose.msra.mxu0 0.0
  %1483 = vmatpush.xpose.msra.mxu0 0.0
  %1484 = vmatpush.xpose.msra.mxu0 0.0
  %1485 = vmatpush.xpose.msra.mxu0 0.0
  %1486 = vmatpush.xpose.msra.mxu0 0.0
  %1487 = vmatpush.xpose.msra.mxu0 %v1471
  %1488 = vmatpush.xpose.msra.mxu0 %v1469
  %1489 = vmatmul.f32.gmra.mxu0 %v1465
  %v1490 = vpop.f32.mrf.mxu0
  %v1491 = vadd.f32 %v74, %v1490
  %1492 = vmatmul.f32.gmra.mxu0 %v1467
  %v1493 = vpop.f32.mrf.mxu0
  %v1494 = vadd.f32 %v75, %v1493
  %1495 = vdwg.mxu0
  %v1496 = vsel %vm178, %v1491, -inf
  %1497 = vmax.xlane.f32.xlu0 %v1496
  %v1498 = vpop.xlane.xlu0 %1497
  %v1499 = vsel %vm178, %v1494, -inf
  %1500 = vmax.xlane.f32.xlu0 %v1499
  %v1501 = vpop.xlane.xlu0 %1500
  %v1502 = vsub.f32 %v1491, %v1498
  %v1503 = vsub.f32 %v1494, %v1501
  %v1504 = vmul.f32 %v1502, 1.442695
  %v1505 = vpow.pop %v1504
  %v1506 = vmul.f32 %v1503, 1.442695
  %v1507 = vpow.pop %v1506
  %v1508 = vsel %vm178, %v1505, 0.0
  %1509 = vadd.xlane.f32.xlu0 %v1508
  %v1510 = vpop.xlane.xlu0 %1509
  %v1511 = vsel %vm178, %v1507, 0.0
  %1512 = vadd.xlane.f32.xlu0 %v1511
  %v1513 = vpop.xlane.xlu0 %1512
  %v1514 = vrcp.pop %v1510
  %v1515 = vrcp.pop %v1513
  %v1516 = vmul.f32 %v1505, %v1514
  %v1517 = vmul.f32 %v1507, %v1515
  %1518 = vrot.lane.b32.xlu0 %v1368, 32
  %v1519 = vpop.permute.xlu0 %1518
  %1520 = vrot.lane.b32.xlu0 %v1371, 32
  %v1521 = vpop.permute.xlu0 %1520
  %v1525 = vsel %vm178, %v1516, 0
  %v1528 = vsel %vm178, %v1517, 0
  %1530 = vmatpush.msra.mxu0 0.0
  %1531 = vmatpush.msra.mxu0 0.0
  %1532 = vmatpush.msra.mxu0 0.0
  %1533 = vmatpush.msra.mxu0 0.0
  %1534 = vmatpush.msra.mxu0 0.0
  %1535 = vmatpush.msra.mxu0 0.0
  %1536 = vmatpush.msra.mxu0 0.0
  %1537 = vmatpush.msra.mxu0 0.0
  %1538 = vmatpush.msra.mxu0 0.0
  %1539 = vmatpush.msra.mxu0 0.0
  %1540 = vmatpush.msra.mxu0 0.0
  %1541 = vmatpush.msra.mxu0 0.0
  %1542 = vmatpush.msra.mxu0 0.0
  %1543 = vmatpush.msra.mxu0 0.0
  %1544 = vmatpush.msra.mxu0 %v1521
  %1545 = vmatpush.msra.mxu0 %v1519
  %1546 = vmatmul.f32.gmra.mxu0 %v1525
  %v1547 = vpop.f32.mrf.mxu0
  %v1548 = vadd.f32 0.0, %v1547
  %1549 = vmatmul.f32.gmra.mxu0 %v1528
  %v1550 = vpop.f32.mrf.mxu0
  %v1551 = vadd.f32 0.0, %v1550
  %1552 = vdwg.mxu0
  %1553 = vrot.lane.b32.xlu0 %v1368, 64
  %v1554 = vpop.permute.xlu0 %1553
  %1555 = vrot.lane.b32.xlu0 %v1371, 64
  %v1556 = vpop.permute.xlu0 %1555
  %v1560 = vsel %vm178, %v1455, 0
  %v1563 = vsel %vm178, %v1456, 0
  %1565 = vmatpush.msra.mxu0 0.0
  %1566 = vmatpush.msra.mxu0 0.0
  %1567 = vmatpush.msra.mxu0 0.0
  %1568 = vmatpush.msra.mxu0 0.0
  %1569 = vmatpush.msra.mxu0 0.0
  %1570 = vmatpush.msra.mxu0 0.0
  %1571 = vmatpush.msra.mxu0 0.0
  %1572 = vmatpush.msra.mxu0 0.0
  %1573 = vmatpush.msra.mxu0 0.0
  %1574 = vmatpush.msra.mxu0 0.0
  %1575 = vmatpush.msra.mxu0 0.0
  %1576 = vmatpush.msra.mxu0 0.0
  %1577 = vmatpush.msra.mxu0 0.0
  %1578 = vmatpush.msra.mxu0 0.0
  %1579 = vmatpush.msra.mxu0 %v1556
  %1580 = vmatpush.msra.mxu0 %v1554
  %1581 = vmatmul.f32.gmra.mxu0 %v1560
  %v1582 = vpop.f32.mrf.mxu0
  %v1583 = vadd.f32 %v1548, %v1582
  %1584 = vmatmul.f32.gmra.mxu0 %v1563
  %v1585 = vpop.f32.mrf.mxu0
  %v1586 = vadd.f32 %v1551, %v1585
  %1587 = vdwg.mxu0
  %1588 = vrot.lane.b32.xlu0 %v1368, 112
  %v1589 = vpop.permute.xlu0 %1588
  %1590 = vrot.lane.b32.xlu0 %v1371, 112
  %v1591 = vpop.permute.xlu0 %1590
  %1592 = vrot.lane.b32.xlu0 %v1368, 80
  %v1593 = vpop.permute.xlu0 %1592
  %1594 = vrot.lane.b32.xlu0 %v1371, 80
  %v1595 = vpop.permute.xlu0 %1594
  %v1596 = vsel %vm146, %v1589, 0
  %v1598 = vsel %vm146, %v1591, 0
  %v1600 = vsel %vm146, %v1593, 0
  %v1602 = vsel %vm146, %v1595, 0
  %1604 = vmatpush.xpose.msra.mxu0 0.0
  %1605 = vmatpush.xpose.msra.mxu0 0.0
  %1606 = vmatpush.xpose.msra.mxu0 0.0
  %1607 = vmatpush.xpose.msra.mxu0 0.0
  %1608 = vmatpush.xpose.msra.mxu0 0.0
  %1609 = vmatpush.xpose.msra.mxu0 0.0
  %1610 = vmatpush.xpose.msra.mxu0 0.0
  %1611 = vmatpush.xpose.msra.mxu0 0.0
  %1612 = vmatpush.xpose.msra.mxu0 0.0
  %1613 = vmatpush.xpose.msra.mxu0 0.0
  %1614 = vmatpush.xpose.msra.mxu0 0.0
  %1615 = vmatpush.xpose.msra.mxu0 0.0
  %1616 = vmatpush.xpose.msra.mxu0 0.0
  %1617 = vmatpush.xpose.msra.mxu0 0.0
  %1618 = vmatpush.xpose.msra.mxu0 %v1602
  %1619 = vmatpush.xpose.msra.mxu0 %v1600
  %1620 = vmatmul.f32.gmra.mxu0 %v1596
  %v1621 = vpop.f32.mrf.mxu0
  %v1622 = vadd.f32 %v74, %v1621
  %1623 = vmatmul.f32.gmra.mxu0 %v1598
  %v1624 = vpop.f32.mrf.mxu0
  %v1625 = vadd.f32 %v75, %v1624
  %1626 = vdwg.mxu0
  %v1627 = vsel %vm178, %v1622, -inf
  %1628 = vmax.xlane.f32.xlu0 %v1627
  %v1629 = vpop.xlane.xlu0 %1628
  %v1630 = vsel %vm178, %v1625, -inf
  %1631 = vmax.xlane.f32.xlu0 %v1630
  %v1632 = vpop.xlane.xlu0 %1631
  %v1633 = vsub.f32 %v1622, %v1629
  %v1634 = vsub.f32 %v1625, %v1632
  %v1635 = vmul.f32 %v1633, 1.442695
  %v1636 = vpow.pop %v1635
  %v1637 = vmul.f32 %v1634, 1.442695
  %v1638 = vpow.pop %v1637
  %v1639 = vsel %vm178, %v1636, 0.0
  %1640 = vadd.xlane.f32.xlu0 %v1639
  %v1641 = vpop.xlane.xlu0 %1640
  %v1642 = vsel %vm178, %v1638, 0.0
  %1643 = vadd.xlane.f32.xlu0 %v1642
  %v1644 = vpop.xlane.xlu0 %1643
  %v1645 = vrcp.pop %v1641
  %v1646 = vrcp.pop %v1644
  %v1647 = vmul.f32 %v1636, %v1645
  %v1648 = vmul.f32 %v1638, %v1646
  %v1650 = vsel %vm178, %v1647, 0
  %v1653 = vsel %vm178, %v1648, 0
  %1655 = vmatpush.msra.mxu0 0.0
  %1656 = vmatpush.msra.mxu0 0.0
  %1657 = vmatpush.msra.mxu0 0.0
  %1658 = vmatpush.msra.mxu0 0.0
  %1659 = vmatpush.msra.mxu0 0.0
  %1660 = vmatpush.msra.mxu0 0.0
  %1661 = vmatpush.msra.mxu0 0.0
  %1662 = vmatpush.msra.mxu0 0.0
  %1663 = vmatpush.msra.mxu0 0.0
  %1664 = vmatpush.msra.mxu0 0.0
  %1665 = vmatpush.msra.mxu0 0.0
  %1666 = vmatpush.msra.mxu0 0.0
  %1667 = vmatpush.msra.mxu0 0.0
  %1668 = vmatpush.msra.mxu0 0.0
  %1669 = vmatpush.msra.mxu0 %v1394
  %1670 = vmatpush.msra.mxu0 %v1391
  %1671 = vmatmul.f32.gmra.mxu0 %v1650
  %v1672 = vpop.f32.mrf.mxu0
  %v1673 = vadd.f32 0.0, %v1672
  %1674 = vmatmul.f32.gmra.mxu0 %v1653
  %v1675 = vpop.f32.mrf.mxu0
  %v1676 = vadd.f32 0.0, %v1675
  %1677 = vdwg.mxu0
  %v1678 = vadd.f32 %v1583, %v1673
  %v1679 = vadd.f32 %v1586, %v1676
  %1680 = vrot.lane.b32.xlu0 %v1368, 104
  %v1681 = vpop.permute.xlu0 %1680
  %1682 = vrot.lane.b32.xlu0 %v1371, 104
  %v1683 = vpop.permute.xlu0 %1682
  %1684 = vrot.lane.b32.xlu0 %v1368, 72
  %v1685 = vpop.permute.xlu0 %1684
  %1686 = vrot.lane.b32.xlu0 %v1371, 72
  %v1687 = vpop.permute.xlu0 %1686
  %v1688 = vsel %vm146, %v1681, 0
  %v1690 = vsel %vm146, %v1683, 0
  %v1692 = vsel %vm146, %v1685, 0
  %v1694 = vsel %vm146, %v1687, 0
  %1696 = vmatpush.xpose.msra.mxu0 0.0
  %1697 = vmatpush.xpose.msra.mxu0 0.0
  %1698 = vmatpush.xpose.msra.mxu0 0.0
  %1699 = vmatpush.xpose.msra.mxu0 0.0
  %1700 = vmatpush.xpose.msra.mxu0 0.0
  %1701 = vmatpush.xpose.msra.mxu0 0.0
  %1702 = vmatpush.xpose.msra.mxu0 0.0
  %1703 = vmatpush.xpose.msra.mxu0 0.0
  %1704 = vmatpush.xpose.msra.mxu0 0.0
  %1705 = vmatpush.xpose.msra.mxu0 0.0
  %1706 = vmatpush.xpose.msra.mxu0 0.0
  %1707 = vmatpush.xpose.msra.mxu0 0.0
  %1708 = vmatpush.xpose.msra.mxu0 0.0
  %1709 = vmatpush.xpose.msra.mxu0 0.0
  %1710 = vmatpush.xpose.msra.mxu0 %v1694
  %1711 = vmatpush.xpose.msra.mxu0 %v1692
  %1712 = vmatmul.f32.gmra.mxu0 %v1688
  %v1713 = vpop.f32.mrf.mxu0
  %v1714 = vadd.f32 %v74, %v1713
  %1715 = vmatmul.f32.gmra.mxu0 %v1690
  %v1716 = vpop.f32.mrf.mxu0
  %v1717 = vadd.f32 %v75, %v1716
  %1718 = vdwg.mxu0
  %v1719 = vsel %vm178, %v1714, -inf
  %1720 = vmax.xlane.f32.xlu0 %v1719
  %v1721 = vpop.xlane.xlu0 %1720
  %v1722 = vsel %vm178, %v1717, -inf
  %1723 = vmax.xlane.f32.xlu0 %v1722
  %v1724 = vpop.xlane.xlu0 %1723
  %v1725 = vsub.f32 %v1714, %v1721
  %v1726 = vsub.f32 %v1717, %v1724
  %v1727 = vmul.f32 %v1725, 1.442695
  %v1728 = vpow.pop %v1727
  %v1729 = vmul.f32 %v1726, 1.442695
  %v1730 = vpow.pop %v1729
  %v1731 = vsel %vm178, %v1728, 0.0
  %1732 = vadd.xlane.f32.xlu0 %v1731
  %v1733 = vpop.xlane.xlu0 %1732
  %v1734 = vsel %vm178, %v1730, 0.0
  %1735 = vadd.xlane.f32.xlu0 %v1734
  %v1736 = vpop.xlane.xlu0 %1735
  %v1737 = vrcp.pop %v1733
  %v1738 = vrcp.pop %v1736
  %v1739 = vmul.f32 %v1728, %v1737
  %v1740 = vmul.f32 %v1730, %v1738
  %1743 = vrot.lane.b32.xlu0 %v1391, 96
  %v1744 = vpop.permute.xlu0 %1743
  %1745 = vrot.lane.b32.xlu0 %v1394, 96
  %v1746 = vpop.permute.xlu0 %1745
  %v1750 = vsel %vm178, %v1739, 0
  %v1753 = vsel %vm178, %v1740, 0
  %1755 = vmatpush.msra.mxu0 0.0
  %1756 = vmatpush.msra.mxu0 0.0
  %1757 = vmatpush.msra.mxu0 0.0
  %1758 = vmatpush.msra.mxu0 0.0
  %1759 = vmatpush.msra.mxu0 0.0
  %1760 = vmatpush.msra.mxu0 0.0
  %1761 = vmatpush.msra.mxu0 0.0
  %1762 = vmatpush.msra.mxu0 0.0
  %1763 = vmatpush.msra.mxu0 0.0
  %1764 = vmatpush.msra.mxu0 0.0
  %1765 = vmatpush.msra.mxu0 0.0
  %1766 = vmatpush.msra.mxu0 0.0
  %1767 = vmatpush.msra.mxu0 0.0
  %1768 = vmatpush.msra.mxu0 0.0
  %1769 = vmatpush.msra.mxu0 %v1746
  %1770 = vmatpush.msra.mxu0 %v1744
  %1771 = vmatmul.f32.gmra.mxu0 %v1750
  %v1772 = vpop.f32.mrf.mxu0
  %v1773 = vadd.f32 0.0, %v1772
  %1774 = vmatmul.f32.gmra.mxu0 %v1753
  %v1775 = vpop.f32.mrf.mxu0
  %v1776 = vadd.f32 0.0, %v1775
  %1777 = vdwg.mxu0
  %v1778 = vadd.f32 %v1678, %v1773
  %v1779 = vadd.f32 %v1679, %v1776
  %v1781 = vperm.slane %v1397, 0
  %v1783 = vadd.f32 %v1778, %v1781
  %v1784 = vadd.f32 %v1779, %v1781
  %v1785 = vadd.f32 %v1783, %v1333
  %v1786 = vadd.f32 %v1784, %v1334
  %s1787 = scalar_lea.vmem %s6, 1
  %v1788 = vld [vmem:[%s1787] sm:$0x1]
  %s1789 = scalar_lea.vmem %s7, 1
  %v1790 = vld [vmem:[%s1789] sm:$0x1]
  %v1791 = vsel %vm86, %v1785, 0.0
  %1792 = vadd.xlane.f32.xlu0 %v1791
  %v1793 = vpop.xlane.xlu0 %1792
  %v1794 = vsel %vm86, %v1786, 0.0
  %1795 = vadd.xlane.f32.xlu0 %v1794
  %v1796 = vpop.xlane.xlu0 %1795
  %v1797 = vmul.f32 %v1793, %v545
  %v1798 = vmul.f32 %v1796, %v545
  %v1799 = vsub.f32 %v1785, %v1797
  %v1800 = vsub.f32 %v1786, %v1798
  %v1801 = vmul.f32 %v1799, %v1799
  %v1802 = vmul.f32 %v1800, %v1800
  %v1803 = vsel %vm86, %v1801, 0.0
  %1804 = vadd.xlane.f32.xlu0 %v1803
  %v1805 = vpop.xlane.xlu0 %1804
  %v1806 = vsel %vm86, %v1802, 0.0
  %1807 = vadd.xlane.f32.xlu0 %v1806
  %v1808 = vpop.xlane.xlu0 %1807
  %v1809 = vmul.f32 %v1805, %v545
  %v1810 = vmul.f32 %v1808, %v545
  %v1811 = vadd.f32 %v1809, 1e-05
  %v1812 = vadd.f32 %v1810, 1e-05
  %v1813 = vrsqrt.pop %v1811
  %v1814 = vmul.f32 %v1813, %v1811
  %v1815 = vmul.f32 %v1814, %v1813
  %v1816 = vmul.f32 0.5, %v1815
  %v1817 = vsub.f32 1.5, %v1816
  %v1818 = vmul.f32 %v1813, %v1817
  %vm1819 = vweird.f32 %v1811
  %vm1820 = vweird.f32 %v1813
  %vm1821 = vmor %vm1819, %vm1820
  %v1822 = vsel %vm1821, %v1813, %v1818
  %v1823 = vrsqrt.pop %v1812
  %v1824 = vmul.f32 %v1823, %v1812
  %v1825 = vmul.f32 %v1824, %v1823
  %v1826 = vmul.f32 0.5, %v1825
  %v1827 = vsub.f32 1.5, %v1826
  %v1828 = vmul.f32 %v1823, %v1827
  %vm1829 = vweird.f32 %v1812
  %vm1830 = vweird.f32 %v1823
  %vm1831 = vmor %vm1829, %vm1830
  %v1832 = vsel %vm1831, %v1823, %v1828
  %v1833 = vmul.f32 %v1799, %v1822
  %v1834 = vmul.f32 %v1800, %v1832
  %v1836 = vperm.slane %v1788, 0
  %v1838 = vmul.f32 %v1833, %v1836
  %v1839 = vmul.f32 %v1834, %v1836
  %v1841 = vperm.slane %v1790, 0
  %v1843 = vadd.f32 %v1838, %v1841
  %v1844 = vadd.f32 %v1839, %v1841
  %s1845 = scalar_lea.vmem %s8, 32
  %v1846 = vld [vmem:[%s1845] sm:$0xff]
  %v1847 = vld [vmem:[%s1845 + $0x8] sm:$0xff]
  %v1848 = vld [vmem:[%s1845 + $0x10] sm:$0xff]
  %v1849 = vld [vmem:[%s1845 + $0x18] sm:$0xff]
  %v1851 = vsel %vm86, %v1843, 0
  %v1854 = vsel %vm86, %v1844, 0
  %1856 = vmatpush.msra.mxu0 0.0
  %1857 = vmatpush.msra.mxu0 0.0
  %1858 = vmatpush.msra.mxu0 0.0
  %1859 = vmatpush.msra.mxu0 0.0
  %1860 = vmatpush.msra.mxu0 0.0
  %1861 = vmatpush.msra.mxu0 0.0
  %1862 = vmatpush.msra.mxu0 0.0
  %1863 = vmatpush.msra.mxu0 0.0
  %1864 = vmatpush.msra.mxu0 0.0
  %1865 = vmatpush.msra.mxu0 0.0
  %1866 = vmatpush.msra.mxu0 0.0
  %1867 = vmatpush.msra.mxu0 0.0
  %1868 = vmatpush.msra.mxu0 %v1849
  %1869 = vmatpush.msra.mxu0 %v1848
  %1870 = vmatpush.msra.mxu0 %v1847
  %1871 = vmatpush.msra.mxu0 %v1846
  %1872 = vmatmul.f32.gmra.mxu0 %v1851
  %v1873 = vpop.f32.mrf.mxu0
  %v1874 = vadd.f32 0.0, %v1873
  %1875 = vmatmul.f32.gmra.mxu0 %v1854
  %v1876 = vpop.f32.mrf.mxu0
  %v1877 = vadd.f32 0.0, %v1876
  %1878 = vdwg.mxu0
  %s1879 = scalar_lea.vmem %s9, 64
  %v1880 = vld [vmem:[%s1879] sm:$0xff]
  %v1881 = vld [vmem:[%s1879 + $0x8] sm:$0xff]
  %v1882 = vld [vmem:[%s1879 + $0x10] sm:$0xff]
  %v1883 = vld [vmem:[%s1879 + $0x18] sm:$0xff]
  %v1884 = vld [vmem:[%s1879 + $0x20] sm:$0xff]
  %v1885 = vld [vmem:[%s1879 + $0x28] sm:$0xff]
  %v1886 = vld [vmem:[%s1879 + $0x30] sm:$0xff]
  %v1887 = vld [vmem:[%s1879 + $0x38] sm:$0xff]
  %1888 = vmatpush.msra.mxu0 0.0
  %1889 = vmatpush.msra.mxu0 0.0
  %1890 = vmatpush.msra.mxu0 0.0
  %1891 = vmatpush.msra.mxu0 0.0
  %1892 = vmatpush.msra.mxu0 0.0
  %1893 = vmatpush.msra.mxu0 0.0
  %1894 = vmatpush.msra.mxu0 0.0
  %1895 = vmatpush.msra.mxu0 0.0
  %1896 = vmatpush.msra.mxu0 0.0
  %1897 = vmatpush.msra.mxu0 0.0
  %1898 = vmatpush.msra.mxu0 0.0
  %1899 = vmatpush.msra.mxu0 0.0
  %1900 = vmatpush.msra.mxu0 %v1886
  %1901 = vmatpush.msra.mxu0 %v1884
  %1902 = vmatpush.msra.mxu0 %v1882
  %1903 = vmatpush.msra.mxu0 %v1880
  %1904 = vmatmul.f32.gmra.mxu0 %v636
  %v1905 = vpop.f32.mrf.mxu0
  %v1906 = vadd.f32 0.0, %v1905
  %1907 = vmatmul.f32.gmra.mxu0 %v639
  %v1908 = vpop.f32.mrf.mxu0
  %v1909 = vadd.f32 0.0, %v1908
  %1910 = vmatmul.f32.gmra.mxu0 %v642
  %v1911 = vpop.f32.mrf.mxu0
  %v1912 = vadd.f32 0.0, %v1911
  %1913 = vmatmul.f32.gmra.mxu0 %v645
  %v1914 = vpop.f32.mrf.mxu0
  %v1915 = vadd.f32 0.0, %v1914
  %1916 = vdwg.mxu0
  %1917 = vmatpush.msra.mxu0 0.0
  %1918 = vmatpush.msra.mxu0 0.0
  %1919 = vmatpush.msra.mxu0 0.0
  %1920 = vmatpush.msra.mxu0 0.0
  %1921 = vmatpush.msra.mxu0 0.0
  %1922 = vmatpush.msra.mxu0 0.0
  %1923 = vmatpush.msra.mxu0 0.0
  %1924 = vmatpush.msra.mxu0 0.0
  %1925 = vmatpush.msra.mxu0 0.0
  %1926 = vmatpush.msra.mxu0 0.0
  %1927 = vmatpush.msra.mxu0 0.0
  %1928 = vmatpush.msra.mxu0 0.0
  %1929 = vmatpush.msra.mxu0 %v1887
  %1930 = vmatpush.msra.mxu0 %v1885
  %1931 = vmatpush.msra.mxu0 %v1883
  %1932 = vmatpush.msra.mxu0 %v1881
  %1933 = vmatmul.f32.gmra.mxu0 %v636
  %v1934 = vpop.f32.mrf.mxu0
  %v1935 = vadd.f32 0.0, %v1934
  %1936 = vmatmul.f32.gmra.mxu0 %v639
  %v1937 = vpop.f32.mrf.mxu0
  %v1938 = vadd.f32 0.0, %v1937
  %1939 = vmatmul.f32.gmra.mxu0 %v642
  %v1940 = vpop.f32.mrf.mxu0
  %v1941 = vadd.f32 0.0, %v1940
  %1942 = vmatmul.f32.gmra.mxu0 %v645
  %v1943 = vpop.f32.mrf.mxu0
  %v1944 = vadd.f32 0.0, %v1943
  %1945 = vdwg.mxu0
  %s1946 = scalar_lea.vmem %s10, 1
  %v1947 = vld [vmem:[%s1946] sm:$0x1]
  %v1949 = vsel %vm146, %v1874, 0
  %v1952 = vsel %vm146, %v1877, 0
  %v1955 = vsel %vm146, %v1906, 0
  %v1958 = vsel %vm146, %v1909, 0
  %v1961 = vsel %vm146, %v1912, 0
  %v1964 = vsel %vm146, %v1915, 0
  %1966 = vmatpush.xpose.msra.mxu0 0.0
  %1967 = vmatpush.xpose.msra.mxu0 0.0
  %1968 = vmatpush.xpose.msra.mxu0 0.0
  %1969 = vmatpush.xpose.msra.mxu0 0.0
  %1970 = vmatpush.xpose.msra.mxu0 0.0
  %1971 = vmatpush.xpose.msra.mxu0 0.0
  %1972 = vmatpush.xpose.msra.mxu0 0.0
  %1973 = vmatpush.xpose.msra.mxu0 0.0
  %1974 = vmatpush.xpose.msra.mxu0 0.0
  %1975 = vmatpush.xpose.msra.mxu0 0.0
  %1976 = vmatpush.xpose.msra.mxu0 0.0
  %1977 = vmatpush.xpose.msra.mxu0 0.0
  %1978 = vmatpush.xpose.msra.mxu0 %v1964
  %1979 = vmatpush.xpose.msra.mxu0 %v1961
  %1980 = vmatpush.xpose.msra.mxu0 %v1958
  %1981 = vmatpush.xpose.msra.mxu0 %v1955
  %1982 = vmatmul.f32.gmra.mxu0 %v1949
  %v1983 = vpop.f32.mrf.mxu0
  %v1984 = vadd.f32 %v76, %v1983
  %1985 = vmatmul.f32.gmra.mxu0 %v1952
  %v1986 = vpop.f32.mrf.mxu0
  %v1987 = vadd.f32 %v77, %v1986
  %1988 = vdwg.mxu0
  %v1989 = vsel %vm86, %v1984, -inf
  %1990 = vmax.xlane.f32.xlu0 %v1989
  %v1991 = vpop.xlane.xlu0 %1990
  %v1992 = vsel %vm86, %v1987, -inf
  %1993 = vmax.xlane.f32.xlu0 %v1992
  %v1994 = vpop.xlane.xlu0 %1993
  %v1995 = vsub.f32 %v1984, %v1991
  %v1996 = vsub.f32 %v1987, %v1994
  %v1997 = vmul.f32 %v1995, 1.442695
  %v1998 = vpow.pop %v1997
  %v1999 = vmul.f32 %v1996, 1.442695
  %v2000 = vpow.pop %v1999
  %v2001 = vsel %vm86, %v1998, 0.0
  %2002 = vadd.xlane.f32.xlu0 %v2001
  %v2003 = vpop.xlane.xlu0 %2002
  %v2004 = vsel %vm86, %v2000, 0.0
  %2005 = vadd.xlane.f32.xlu0 %v2004
  %v2006 = vpop.xlane.xlu0 %2005
  %v2007 = vrcp.pop %v2003
  %v2008 = vrcp.pop %v2006
  %v2009 = vmul.f32 %v1998, %v2007
  %v2010 = vmul.f32 %v2000, %v2008
  %2011 = vrot.lane.b32.xlu0 %v1874, 120
  %v2012 = vpop.permute.xlu0 %2011
  %2013 = vrot.lane.b32.xlu0 %v1877, 120
  %v2014 = vpop.permute.xlu0 %2013
  %2015 = vrot.lane.b32.xlu0 %v1906, 120
  %v2016 = vpop.permute.xlu0 %2015
  %2017 = vrot.lane.b32.xlu0 %v1909, 120
  %v2018 = vpop.permute.xlu0 %2017
  %2019 = vrot.lane.b32.xlu0 %v1912, 120
  %v2020 = vpop.permute.xlu0 %2019
  %2021 = vrot.lane.b32.xlu0 %v1915, 120
  %v2022 = vpop.permute.xlu0 %2021
  %v2023 = vsel %vm146, %v2012, 0
  %v2025 = vsel %vm146, %v2014, 0
  %v2027 = vsel %vm146, %v2016, 0
  %v2029 = vsel %vm146, %v2018, 0
  %v2031 = vsel %vm146, %v2020, 0
  %v2033 = vsel %vm146, %v2022, 0
  %2035 = vmatpush.xpose.msra.mxu0 0.0
  %2036 = vmatpush.xpose.msra.mxu0 0.0
  %2037 = vmatpush.xpose.msra.mxu0 0.0
  %2038 = vmatpush.xpose.msra.mxu0 0.0
  %2039 = vmatpush.xpose.msra.mxu0 0.0
  %2040 = vmatpush.xpose.msra.mxu0 0.0
  %2041 = vmatpush.xpose.msra.mxu0 0.0
  %2042 = vmatpush.xpose.msra.mxu0 0.0
  %2043 = vmatpush.xpose.msra.mxu0 0.0
  %2044 = vmatpush.xpose.msra.mxu0 0.0
  %2045 = vmatpush.xpose.msra.mxu0 0.0
  %2046 = vmatpush.xpose.msra.mxu0 0.0
  %2047 = vmatpush.xpose.msra.mxu0 %v2033
  %2048 = vmatpush.xpose.msra.mxu0 %v2031
  %2049 = vmatpush.xpose.msra.mxu0 %v2029
  %2050 = vmatpush.xpose.msra.mxu0 %v2027
  %2051 = vmatmul.f32.gmra.mxu0 %v2023
  %v2052 = vpop.f32.mrf.mxu0
  %v2053 = vadd.f32 %v76, %v2052
  %2054 = vmatmul.f32.gmra.mxu0 %v2025
  %v2055 = vpop.f32.mrf.mxu0
  %v2056 = vadd.f32 %v77, %v2055
  %2057 = vdwg.mxu0
  %v2058 = vsel %vm86, %v2053, -inf
  %2059 = vmax.xlane.f32.xlu0 %v2058
  %v2060 = vpop.xlane.xlu0 %2059
  %v2061 = vsel %vm86, %v2056, -inf
  %2062 = vmax.xlane.f32.xlu0 %v2061
  %v2063 = vpop.xlane.xlu0 %2062
  %v2064 = vsub.f32 %v2053, %v2060
  %v2065 = vsub.f32 %v2056, %v2063
  %v2066 = vmul.f32 %v2064, 1.442695
  %v2067 = vpow.pop %v2066
  %v2068 = vmul.f32 %v2065, 1.442695
  %v2069 = vpow.pop %v2068
  %v2070 = vsel %vm86, %v2067, 0.0
  %2071 = vadd.xlane.f32.xlu0 %v2070
  %v2072 = vpop.xlane.xlu0 %2071
  %v2073 = vsel %vm86, %v2069, 0.0
  %2074 = vadd.xlane.f32.xlu0 %v2073
  %v2075 = vpop.xlane.xlu0 %2074
  %v2076 = vrcp.pop %v2072
  %v2077 = vrcp.pop %v2075
  %v2078 = vmul.f32 %v2067, %v2076
  %v2079 = vmul.f32 %v2069, %v2077
  %2080 = vrot.lane.b32.xlu0 %v1906, 64
  %v2081 = vpop.permute.xlu0 %2080
  %2082 = vrot.lane.b32.xlu0 %v1909, 64
  %v2083 = vpop.permute.xlu0 %2082
  %2084 = vrot.lane.b32.xlu0 %v1912, 64
  %v2085 = vpop.permute.xlu0 %2084
  %2086 = vrot.lane.b32.xlu0 %v1915, 64
  %v2087 = vpop.permute.xlu0 %2086
  %v2093 = vsel %vm86, %v2078, 0
  %v2096 = vsel %vm86, %v2079, 0
  %2098 = vmatpush.msra.mxu0 0.0
  %2099 = vmatpush.msra.mxu0 0.0
  %2100 = vmatpush.msra.mxu0 0.0
  %2101 = vmatpush.msra.mxu0 0.0
  %2102 = vmatpush.msra.mxu0 0.0
  %2103 = vmatpush.msra.mxu0 0.0
  %2104 = vmatpush.msra.mxu0 0.0
  %2105 = vmatpush.msra.mxu0 0.0
  %2106 = vmatpush.msra.mxu0 0.0
  %2107 = vmatpush.msra.mxu0 0.0
  %2108 = vmatpush.msra.mxu0 0.0
  %2109 = vmatpush.msra.mxu0 0.0
  %2110 = vmatpush.msra.mxu0 %v2087
  %2111 = vmatpush.msra.mxu0 %v2085
  %2112 = vmatpush.msra.mxu0 %v2083
  %2113 = vmatpush.msra.mxu0 %v2081
  %2114 = vmatmul.f32.gmra.mxu0 %v2093
  %v2115 = vpop.f32.mrf.mxu0
  %v2116 = vadd.f32 0.0, %v2115
  %2117 = vmatmul.f32.gmra.mxu0 %v2096
  %v2118 = vpop.f32.mrf.mxu0
  %v2119 = vadd.f32 0.0, %v2118
  %2120 = vdwg.mxu0
  %2121 = vrot.lane.b32.xlu0 %v1906, 96
  %v2122 = vpop.permute.xlu0 %2121
  %2123 = vrot.lane.b32.xlu0 %v1909, 96
  %v2124 = vpop.permute.xlu0 %2123
  %2125 = vrot.lane.b32.xlu0 %v1912, 96
  %v2126 = vpop.permute.xlu0 %2125
  %2127 = vrot.lane.b32.xlu0 %v1915, 96
  %v2128 = vpop.permute.xlu0 %2127
  %v2134 = vsel %vm86, %v2009, 0
  %v2137 = vsel %vm86, %v2010, 0
  %2139 = vmatpush.msra.mxu0 0.0
  %2140 = vmatpush.msra.mxu0 0.0
  %2141 = vmatpush.msra.mxu0 0.0
  %2142 = vmatpush.msra.mxu0 0.0
  %2143 = vmatpush.msra.mxu0 0.0
  %2144 = vmatpush.msra.mxu0 0.0
  %2145 = vmatpush.msra.mxu0 0.0
  %2146 = vmatpush.msra.mxu0 0.0
  %2147 = vmatpush.msra.mxu0 0.0
  %2148 = vmatpush.msra.mxu0 0.0
  %2149 = vmatpush.msra.mxu0 0.0
  %2150 = vmatpush.msra.mxu0 0.0
  %2151 = vmatpush.msra.mxu0 %v2128
  %2152 = vmatpush.msra.mxu0 %v2126
  %2153 = vmatpush.msra.mxu0 %v2124
  %2154 = vmatpush.msra.mxu0 %v2122
  %2155 = vmatmul.f32.gmra.mxu0 %v2134
  %v2156 = vpop.f32.mrf.mxu0
  %v2157 = vadd.f32 %v2116, %v2156
  %2158 = vmatmul.f32.gmra.mxu0 %v2137
  %v2159 = vpop.f32.mrf.mxu0
  %v2160 = vadd.f32 %v2119, %v2159
  %2161 = vdwg.mxu0
  %2162 = vrot.lane.b32.xlu0 %v1874, 112
  %v2163 = vpop.permute.xlu0 %2162
  %2164 = vrot.lane.b32.xlu0 %v1877, 112
  %v2165 = vpop.permute.xlu0 %2164
  %2166 = vrot.lane.b32.xlu0 %v1906, 112
  %v2167 = vpop.permute.xlu0 %2166
  %2168 = vrot.lane.b32.xlu0 %v1909, 112
  %v2169 = vpop.permute.xlu0 %2168
  %2170 = vrot.lane.b32.xlu0 %v1912, 112
  %v2171 = vpop.permute.xlu0 %2170
  %2172 = vrot.lane.b32.xlu0 %v1915, 112
  %v2173 = vpop.permute.xlu0 %2172
  %v2174 = vsel %vm146, %v2163, 0
  %v2176 = vsel %vm146, %v2165, 0
  %v2178 = vsel %vm146, %v2167, 0
  %v2180 = vsel %vm146, %v2169, 0
  %v2182 = vsel %vm146, %v2171, 0
  %v2184 = vsel %vm146, %v2173, 0
  %2186 = vmatpush.xpose.msra.mxu0 0.0
  %2187 = vmatpush.xpose.msra.mxu0 0.0
  %2188 = vmatpush.xpose.msra.mxu0 0.0
  %2189 = vmatpush.xpose.msra.mxu0 0.0
  %2190 = vmatpush.xpose.msra.mxu0 0.0
  %2191 = vmatpush.xpose.msra.mxu0 0.0
  %2192 = vmatpush.xpose.msra.mxu0 0.0
  %2193 = vmatpush.xpose.msra.mxu0 0.0
  %2194 = vmatpush.xpose.msra.mxu0 0.0
  %2195 = vmatpush.xpose.msra.mxu0 0.0
  %2196 = vmatpush.xpose.msra.mxu0 0.0
  %2197 = vmatpush.xpose.msra.mxu0 0.0
  %2198 = vmatpush.xpose.msra.mxu0 %v2184
  %2199 = vmatpush.xpose.msra.mxu0 %v2182
  %2200 = vmatpush.xpose.msra.mxu0 %v2180
  %2201 = vmatpush.xpose.msra.mxu0 %v2178
  %2202 = vmatmul.f32.gmra.mxu0 %v2174
  %v2203 = vpop.f32.mrf.mxu0
  %v2204 = vadd.f32 %v76, %v2203
  %2205 = vmatmul.f32.gmra.mxu0 %v2176
  %v2206 = vpop.f32.mrf.mxu0
  %v2207 = vadd.f32 %v77, %v2206
  %2208 = vdwg.mxu0
  %v2209 = vsel %vm86, %v2204, -inf
  %2210 = vmax.xlane.f32.xlu0 %v2209
  %v2211 = vpop.xlane.xlu0 %2210
  %v2212 = vsel %vm86, %v2207, -inf
  %2213 = vmax.xlane.f32.xlu0 %v2212
  %v2214 = vpop.xlane.xlu0 %2213
  %v2215 = vsub.f32 %v2204, %v2211
  %v2216 = vsub.f32 %v2207, %v2214
  %v2217 = vmul.f32 %v2215, 1.442695
  %v2218 = vpow.pop %v2217
  %v2219 = vmul.f32 %v2216, 1.442695
  %v2220 = vpow.pop %v2219
  %v2221 = vsel %vm86, %v2218, 0.0
  %2222 = vadd.xlane.f32.xlu0 %v2221
  %v2223 = vpop.xlane.xlu0 %2222
  %v2224 = vsel %vm86, %v2220, 0.0
  %2225 = vadd.xlane.f32.xlu0 %v2224
  %v2226 = vpop.xlane.xlu0 %2225
  %v2227 = vrcp.pop %v2223
  %v2228 = vrcp.pop %v2226
  %v2229 = vmul.f32 %v2218, %v2227
  %v2230 = vmul.f32 %v2220, %v2228
  %2231 = vrot.lane.b32.xlu0 %v1906, 32
  %v2232 = vpop.permute.xlu0 %2231
  %2233 = vrot.lane.b32.xlu0 %v1909, 32
  %v2234 = vpop.permute.xlu0 %2233
  %2235 = vrot.lane.b32.xlu0 %v1912, 32
  %v2236 = vpop.permute.xlu0 %2235
  %2237 = vrot.lane.b32.xlu0 %v1915, 32
  %v2238 = vpop.permute.xlu0 %2237
  %v2244 = vsel %vm86, %v2229, 0
  %v2247 = vsel %vm86, %v2230, 0
  %2249 = vmatpush.msra.mxu0 0.0
  %2250 = vmatpush.msra.mxu0 0.0
  %2251 = vmatpush.msra.mxu0 0.0
  %2252 = vmatpush.msra.mxu0 0.0
  %2253 = vmatpush.msra.mxu0 0.0
  %2254 = vmatpush.msra.mxu0 0.0
  %2255 = vmatpush.msra.mxu0 0.0
  %2256 = vmatpush.msra.mxu0 0.0
  %2257 = vmatpush.msra.mxu0 0.0
  %2258 = vmatpush.msra.mxu0 0.0
  %2259 = vmatpush.msra.mxu0 0.0
  %2260 = vmatpush.msra.mxu0 0.0
  %2261 = vmatpush.msra.mxu0 %v2238
  %2262 = vmatpush.msra.mxu0 %v2236
  %2263 = vmatpush.msra.mxu0 %v2234
  %2264 = vmatpush.msra.mxu0 %v2232
  %2265 = vmatmul.f32.gmra.mxu0 %v2244
  %v2266 = vpop.f32.mrf.mxu0
  %v2267 = vadd.f32 0.0, %v2266
  %2268 = vmatmul.f32.gmra.mxu0 %v2247
  %v2269 = vpop.f32.mrf.mxu0
  %v2270 = vadd.f32 0.0, %v2269
  %2271 = vdwg.mxu0
  %v2272 = vadd.f32 %v2157, %v2267
  %v2273 = vadd.f32 %v2160, %v2270
  %2274 = vrot.lane.b32.xlu0 %v1874, 104
  %v2275 = vpop.permute.xlu0 %2274
  %2276 = vrot.lane.b32.xlu0 %v1877, 104
  %v2277 = vpop.permute.xlu0 %2276
  %2278 = vrot.lane.b32.xlu0 %v1906, 104
  %v2279 = vpop.permute.xlu0 %2278
  %2280 = vrot.lane.b32.xlu0 %v1909, 104
  %v2281 = vpop.permute.xlu0 %2280
  %2282 = vrot.lane.b32.xlu0 %v1912, 104
  %v2283 = vpop.permute.xlu0 %2282
  %2284 = vrot.lane.b32.xlu0 %v1915, 104
  %v2285 = vpop.permute.xlu0 %2284
  %v2286 = vsel %vm146, %v2275, 0
  %v2288 = vsel %vm146, %v2277, 0
  %v2290 = vsel %vm146, %v2279, 0
  %v2292 = vsel %vm146, %v2281, 0
  %v2294 = vsel %vm146, %v2283, 0
  %v2296 = vsel %vm146, %v2285, 0
  %2298 = vmatpush.xpose.msra.mxu0 0.0
  %2299 = vmatpush.xpose.msra.mxu0 0.0
  %2300 = vmatpush.xpose.msra.mxu0 0.0
  %2301 = vmatpush.xpose.msra.mxu0 0.0
  %2302 = vmatpush.xpose.msra.mxu0 0.0
  %2303 = vmatpush.xpose.msra.mxu0 0.0
  %2304 = vmatpush.xpose.msra.mxu0 0.0
  %2305 = vmatpush.xpose.msra.mxu0 0.0
  %2306 = vmatpush.xpose.msra.mxu0 0.0
  %2307 = vmatpush.xpose.msra.mxu0 0.0
  %2308 = vmatpush.xpose.msra.mxu0 0.0
  %2309 = vmatpush.xpose.msra.mxu0 0.0
  %2310 = vmatpush.xpose.msra.mxu0 %v2296
  %2311 = vmatpush.xpose.msra.mxu0 %v2294
  %2312 = vmatpush.xpose.msra.mxu0 %v2292
  %2313 = vmatpush.xpose.msra.mxu0 %v2290
  %2314 = vmatmul.f32.gmra.mxu0 %v2286
  %v2315 = vpop.f32.mrf.mxu0
  %v2316 = vadd.f32 %v76, %v2315
  %2317 = vmatmul.f32.gmra.mxu0 %v2288
  %v2318 = vpop.f32.mrf.mxu0
  %v2319 = vadd.f32 %v77, %v2318
  %2320 = vdwg.mxu0
  %v2321 = vsel %vm86, %v2316, -inf
  %2322 = vmax.xlane.f32.xlu0 %v2321
  %v2323 = vpop.xlane.xlu0 %2322
  %v2324 = vsel %vm86, %v2319, -inf
  %2325 = vmax.xlane.f32.xlu0 %v2324
  %v2326 = vpop.xlane.xlu0 %2325
  %v2327 = vsub.f32 %v2316, %v2323
  %v2328 = vsub.f32 %v2319, %v2326
  %v2329 = vmul.f32 %v2327, 1.442695
  %v2330 = vpow.pop %v2329
  %v2331 = vmul.f32 %v2328, 1.442695
  %v2332 = vpow.pop %v2331
  %v2333 = vsel %vm86, %v2330, 0.0
  %2334 = vadd.xlane.f32.xlu0 %v2333
  %v2335 = vpop.xlane.xlu0 %2334
  %v2336 = vsel %vm86, %v2332, 0.0
  %2337 = vadd.xlane.f32.xlu0 %v2336
  %v2338 = vpop.xlane.xlu0 %2337
  %v2339 = vrcp.pop %v2335
  %v2340 = vrcp.pop %v2338
  %v2341 = vmul.f32 %v2330, %v2339
  %v2342 = vmul.f32 %v2332, %v2340
  %v2344 = vsel %vm86, %v2341, 0
  %v2347 = vsel %vm86, %v2342, 0
  %2349 = vmatpush.msra.mxu0 0.0
  %2350 = vmatpush.msra.mxu0 0.0
  %2351 = vmatpush.msra.mxu0 0.0
  %2352 = vmatpush.msra.mxu0 0.0
  %2353 = vmatpush.msra.mxu0 0.0
  %2354 = vmatpush.msra.mxu0 0.0
  %2355 = vmatpush.msra.mxu0 0.0
  %2356 = vmatpush.msra.mxu0 0.0
  %2357 = vmatpush.msra.mxu0 0.0
  %2358 = vmatpush.msra.mxu0 0.0
  %2359 = vmatpush.msra.mxu0 0.0
  %2360 = vmatpush.msra.mxu0 0.0
  %2361 = vmatpush.msra.mxu0 %v1944
  %2362 = vmatpush.msra.mxu0 %v1941
  %2363 = vmatpush.msra.mxu0 %v1938
  %2364 = vmatpush.msra.mxu0 %v1935
  %2365 = vmatmul.f32.gmra.mxu0 %v2344
  %v2366 = vpop.f32.mrf.mxu0
  %v2367 = vadd.f32 0.0, %v2366
  %2368 = vmatmul.f32.gmra.mxu0 %v2347
  %v2369 = vpop.f32.mrf.mxu0
  %v2370 = vadd.f32 0.0, %v2369
  %2371 = vdwg.mxu0
  %v2372 = vadd.f32 %v2272, %v2367
  %v2373 = vadd.f32 %v2273, %v2370
  %v2375 = vperm.slane %v1947, 0
  %v2377 = vadd.f32 %v2372, %v2375
  %v2378 = vadd.f32 %v2373, %v2375
  %v2379 = vadd.f32 %v2377, %v1843
  %v2380 = vadd.f32 %v2378, %v1844
  %s2381 = scalar_lea.vmem %s11, 1
  %v2382 = vld [vmem:[%s2381] sm:$0x1]
  %s2383 = scalar_lea.vmem %s12, 1
  %v2384 = vld [vmem:[%s2383] sm:$0x1]
  %v2385 = vsel %vm86, %v2379, 0.0
  %2386 = vadd.xlane.f32.xlu0 %v2385
  %v2387 = vpop.xlane.xlu0 %2386
  %v2388 = vsel %vm86, %v2380, 0.0
  %2389 = vadd.xlane.f32.xlu0 %v2388
  %v2390 = vpop.xlane.xlu0 %2389
  %v2391 = vmul.f32 %v2387, %v545
  %v2392 = vmul.f32 %v2390, %v545
  %v2393 = vsub.f32 %v2379, %v2391
  %v2394 = vsub.f32 %v2380, %v2392
  %v2395 = vmul.f32 %v2393, %v2393
  %v2396 = vmul.f32 %v2394, %v2394
  %v2397 = vsel %vm86, %v2395, 0.0
  %2398 = vadd.xlane.f32.xlu0 %v2397
  %v2399 = vpop.xlane.xlu0 %2398
  %v2400 = vsel %vm86, %v2396, 0.0
  %2401 = vadd.xlane.f32.xlu0 %v2400
  %v2402 = vpop.xlane.xlu0 %2401
  %v2403 = vmul.f32 %v2399, %v545
  %v2404 = vmul.f32 %v2402, %v545
  %v2405 = vadd.f32 %v2403, 1e-05
  %v2406 = vadd.f32 %v2404, 1e-05
  %v2407 = vrsqrt.pop %v2405
  %v2408 = vmul.f32 %v2407, %v2405
  %v2409 = vmul.f32 %v2408, %v2407
  %v2410 = vmul.f32 0.5, %v2409
  %v2411 = vsub.f32 1.5, %v2410
  %v2412 = vmul.f32 %v2407, %v2411
  %vm2413 = vweird.f32 %v2405
  %vm2414 = vweird.f32 %v2407
  %vm2415 = vmor %vm2413, %vm2414
  %v2416 = vsel %vm2415, %v2407, %v2412
  %v2417 = vrsqrt.pop %v2406
  %v2418 = vmul.f32 %v2417, %v2406
  %v2419 = vmul.f32 %v2418, %v2417
  %v2420 = vmul.f32 0.5, %v2419
  %v2421 = vsub.f32 1.5, %v2420
  %v2422 = vmul.f32 %v2417, %v2421
  %vm2423 = vweird.f32 %v2406
  %vm2424 = vweird.f32 %v2417
  %vm2425 = vmor %vm2423, %vm2424
  %v2426 = vsel %vm2425, %v2417, %v2422
  %v2427 = vmul.f32 %v2393, %v2416
  %v2428 = vmul.f32 %v2394, %v2426
  %v2430 = vperm.slane %v2382, 0
  %v2432 = vmul.f32 %v2427, %v2430
  %v2433 = vmul.f32 %v2428, %v2430
  %v2435 = vperm.slane %v2384, 0
  %v2437 = vadd.f32 %v2432, %v2435
  %v2438 = vadd.f32 %v2433, %v2435
  %s2439 = scalar_lea.vmem %s13, 32
  %v2440 = vld [vmem:[%s2439] sm:$0xff]
  %v2441 = vld [vmem:[%s2439 + $0x8] sm:$0xff]
  %v2442 = vld [vmem:[%s2439 + $0x10] sm:$0xff]
  %v2443 = vld [vmem:[%s2439 + $0x18] sm:$0xff]
  %s2444 = scalar_lea.vmem %s14, 1
  %v2445 = vld [vmem:[%s2444] sm:$0x1]
  %v2447 = vperm.slane %v2445, 0
  %v2450 = vsel %vm86, %v2437, 0
  %v2453 = vsel %vm86, %v2438, 0
  %2455 = vmatpush.msra.mxu0 0.0
  %2456 = vmatpush.msra.mxu0 0.0
  %2457 = vmatpush.msra.mxu0 0.0
  %2458 = vmatpush.msra.mxu0 0.0
  %2459 = vmatpush.msra.mxu0 0.0
  %2460 = vmatpush.msra.mxu0 0.0
  %2461 = vmatpush.msra.mxu0 0.0
  %2462 = vmatpush.msra.mxu0 0.0
  %2463 = vmatpush.msra.mxu0 0.0
  %2464 = vmatpush.msra.mxu0 0.0
  %2465 = vmatpush.msra.mxu0 0.0
  %2466 = vmatpush.msra.mxu0 0.0
  %2467 = vmatpush.msra.mxu0 %v2443
  %2468 = vmatpush.msra.mxu0 %v2442
  %2469 = vmatpush.msra.mxu0 %v2441
  %2470 = vmatpush.msra.mxu0 %v2440
  %2471 = vmatmul.f32.gmra.mxu0 %v2450
  %v2472 = vpop.f32.mrf.mxu0
  %v2473 = vadd.f32 %v2447, %v2472
  %2474 = vmatmul.f32.gmra.mxu0 %v2453
  %v2475 = vpop.f32.mrf.mxu0
  %v2476 = vadd.f32 %v2447, %v2475
  %2477 = vdwg.mxu0
  %v2478 = vmax.f32 %v2473, 0.0
  %v2479 = vmax.f32 %v2476, 0.0
  %s2480 = scalar_lea.vmem %s15, 128
  %v2481 = vld [vmem:[%s2480] sm:$0xff]
  %v2482 = vld [vmem:[%s2480 + $0x8] sm:$0xff]
  %v2483 = vld [vmem:[%s2480 + $0x10] sm:$0xff]
  %v2484 = vld [vmem:[%s2480 + $0x18] sm:$0xff]
  %v2485 = vld [vmem:[%s2480 + $0x20] sm:$0xff]
  %v2486 = vld [vmem:[%s2480 + $0x28] sm:$0xff]
  %v2487 = vld [vmem:[%s2480 + $0x30] sm:$0xff]
  %v2488 = vld [vmem:[%s2480 + $0x38] sm:$0xff]
  %v2489 = vld [vmem:[%s2480 + $0x40] sm:$0xff]
  %v2490 = vld [vmem:[%s2480 + $0x48] sm:$0xff]
  %v2491 = vld [vmem:[%s2480 + $0x50] sm:$0xff]
  %v2492 = vld [vmem:[%s2480 + $0x58] sm:$0xff]
  %v2493 = vld [vmem:[%s2480 + $0x60] sm:$0xff]
  %v2494 = vld [vmem:[%s2480 + $0x68] sm:$0xff]
  %v2495 = vld [vmem:[%s2480 + $0x70] sm:$0xff]
  %v2496 = vld [vmem:[%s2480 + $0x78] sm:$0xff]
  %s2497 = scalar_lea.vmem %s16, 1
  %v2498 = vld [vmem:[%s2497] sm:$0x1]
  %v2500 = vperm.slane %v2498, 0
  %2502 = vmatpush.msra.mxu0 %v2496
  %2503 = vmatpush.msra.mxu0 %v2495
  %2504 = vmatpush.msra.mxu0 %v2494
  %2505 = vmatpush.msra.mxu0 %v2493
  %2506 = vmatpush.msra.mxu0 %v2492
  %2507 = vmatpush.msra.mxu0 %v2491
  %2508 = vmatpush.msra.mxu0 %v2490
  %2509 = vmatpush.msra.mxu0 %v2489
  %2510 = vmatpush.msra.mxu0 %v2488
  %2511 = vmatpush.msra.mxu0 %v2487
  %2512 = vmatpush.msra.mxu0 %v2486
  %2513 = vmatpush.msra.mxu0 %v2485
  %2514 = vmatpush.msra.mxu0 %v2484
  %2515 = vmatpush.msra.mxu0 %v2483
  %2516 = vmatpush.msra.mxu0 %v2482
  %2517 = vmatpush.msra.mxu0 %v2481
  %2518 = vmatmul.f32.gmra.mxu0 %v2478
  %v2519 = vpop.f32.mrf.mxu0
  %v2520 = vadd.f32 %v2500, %v2519
  %2521 = vmatmul.f32.gmra.mxu0 %v2479
  %v2522 = vpop.f32.mrf.mxu0
  %v2523 = vadd.f32 %v2500, %v2522
  %2524 = vdwg.mxu0
  %v2525 = vadd.f32 %v2520, %v2437
  %v2526 = vadd.f32 %v2523, %v2438
  %s2527 = scalar_lea.vmem %s17, 1
  %v2528 = vld [vmem:[%s2527] sm:$0x1]
  %s2529 = scalar_lea.vmem %s18, 1
  %v2530 = vld [vmem:[%s2529] sm:$0x1]
  %v2531 = vsel %vm86, %v2525, 0.0
  %2532 = vadd.xlane.f32.xlu0 %v2531
  %v2533 = vpop.xlane.xlu0 %2532
  %v2534 = vsel %vm86, %v2526, 0.0
  %2535 = vadd.xlane.f32.xlu0 %v2534
  %v2536 = vpop.xlane.xlu0 %2535
  %v2537 = vmul.f32 %v2533, %v545
  %v2538 = vmul.f32 %v2536, %v545
  %v2539 = vsub.f32 %v2525, %v2537
  %v2540 = vsub.f32 %v2526, %v2538
  %v2541 = vmul.f32 %v2539, %v2539
  %v2542 = vmul.f32 %v2540, %v2540
  %v2543 = vsel %vm86, %v2541, 0.0
  %2544 = vadd.xlane.f32.xlu0 %v2543
  %v2545 = vpop.xlane.xlu0 %2544
  %v2546 = vsel %vm86, %v2542, 0.0
  %2547 = vadd.xlane.f32.xlu0 %v2546
  %v2548 = vpop.xlane.xlu0 %2547
  %v2549 = vmul.f32 %v2545, %v545
  %v2550 = vmul.f32 %v2548, %v545
  %v2551 = vadd.f32 %v2549, 1e-05
  %v2552 = vadd.f32 %v2550, 1e-05
  %v2553 = vrsqrt.pop %v2551
  %v2554 = vmul.f32 %v2553, %v2551
  %v2555 = vmul.f32 %v2554, %v2553
  %v2556 = vmul.f32 0.5, %v2555
  %v2557 = vsub.f32 1.5, %v2556
  %v2558 = vmul.f32 %v2553, %v2557
  %vm2559 = vweird.f32 %v2551
  %vm2560 = vweird.f32 %v2553
  %vm2561 = vmor %vm2559, %vm2560
  %v2562 = vsel %vm2561, %v2553, %v2558
  %v2563 = vrsqrt.pop %v2552
  %v2564 = vmul.f32 %v2563, %v2552
  %v2565 = vmul.f32 %v2564, %v2563
  %v2566 = vmul.f32 0.5, %v2565
  %v2567 = vsub.f32 1.5, %v2566
  %v2568 = vmul.f32 %v2563, %v2567
  %vm2569 = vweird.f32 %v2552
  %vm2570 = vweird.f32 %v2563
  %vm2571 = vmor %vm2569, %vm2570
  %v2572 = vsel %vm2571, %v2563, %v2568
  %v2573 = vmul.f32 %v2539, %v2562
  %v2574 = vmul.f32 %v2540, %v2572
  %v2576 = vperm.slane %v2528, 0
  %v2578 = vmul.f32 %v2573, %v2576
  %v2579 = vmul.f32 %v2574, %v2576
  %v2581 = vperm.slane %v2530, 0
  %v2583 = vadd.f32 %v2578, %v2581
  %v2584 = vadd.f32 %v2579, %v2581
  %v2585 = vld [vmem:[%s19] sm:$0xff]
  %v2586 = vld [vmem:[%s19 + $0x8] sm:$0xff]
  %v2587 = vld [vmem:[%s19 + $0x10] sm:$0xff]
  %v2588 = vld [vmem:[%s19 + $0x18] sm:$0xff]
  %v2589 = vld [vmem:[%s20] sm:$0x1]
  %v2591 = vperm.slane %v2589, 0
  %v2594 = vsel %vm86, %v2583, 0
  %v2597 = vsel %vm86, %v2584, 0
  %2599 = vmatpush.msra.mxu0 0.0
  %2600 = vmatpush.msra.mxu0 0.0
  %2601 = vmatpush.msra.mxu0 0.0
  %2602 = vmatpush.msra.mxu0 0.0
  %2603 = vmatpush.msra.mxu0 0.0
  %2604 = vmatpush.msra.mxu0 0.0
  %2605 = vmatpush.msra.mxu0 0.0
  %2606 = vmatpush.msra.mxu0 0.0
  %2607 = vmatpush.msra.mxu0 0.0
  %2608 = vmatpush.msra.mxu0 0.0
  %2609 = vmatpush.msra.mxu0 0.0
  %2610 = vmatpush.msra.mxu0 0.0
  %2611 = vmatpush.msra.mxu0 %v2588
  %2612 = vmatpush.msra.mxu0 %v2587
  %2613 = vmatpush.msra.mxu0 %v2586
  %2614 = vmatpush.msra.mxu0 %v2585
  %2615 = vmatmul.f32.gmra.mxu0 %v2594
  %v2616 = vpop.f32.mrf.mxu0
  %v2617 = vadd.f32 %v2591, %v2616
  %2618 = vmatmul.f32.gmra.mxu0 %v2597
  %v2619 = vpop.f32.mrf.mxu0
  %v2620 = vadd.f32 %v2591, %v2619
  %2621 = vdwg.mxu0
  %2622 = vst [vmem:[%s21] sm:$0xff] %v2617
  %2623 = vst [vmem:[%s21 + $0x8] sm:$0xff] %v2620
  // Predicated region
  $region86: #{decoder_forward.1} parent=0 // pred_check
    _
  $region87: #{decoder_forward.1} parent=0 // pred_check_branch
    %2625 = sbr.rel (0) target = $region89
  $region88: #{decoder_forward.1} parent=0 // pred_region
    _
  $region89: #{decoder_forward.1} parent=0 // pred_fallthru
    _
  // Predicated region
  $region90: #{decoder_forward.1} parent=0 // pred_check
    _
  $region91: #{decoder_forward.1} parent=0 // pred_check_branch
    %2627 = sbr.rel (0) target = $region93
  $region92: #{decoder_forward.1} parent=0 // pred_region
    _
  $region93: #{decoder_forward.1} parent=0 // pred_fallthru
    _

</llo_original>
